<compile_context>
chip_gen: v7x
topology: tpu7x:2x2x1
jax: 0.10.0
libtpu: 0.0.40
codegen_flags: <defaults>
</compile_context>

<pallas_src>
import jax
import jax.numpy as jnp
from jax.experimental import pallas as pl
from jax.experimental.pallas import tpu as pltpu

LANE = 128           # gate slices padded to a multiple of the lane width
SUBLANE_BF16 = 16    # bf16 sublane packing: batch rows padded to this
LINEAR_TN = 512      # lane-dense output tile (vocab axis) of the final Linear
LINEAR_TM = 512      # row tile of the final Linear


def _round_up(x, m):
    return ((x + m - 1) // m) * m


# ----------------------------------------------------------------------------
# Fused multi-layer LSTM kernel.
# Layout: x is time-major (T, Bs, E) bf16; weights pre-transposed to
# (in_dim, 4*Hp) in PyTorch gate order [i, f, g, o] with b_ih + b_hh
# pre-summed; hidden padded H -> Hp (multiple of 128), batch padded to Bp
# (multiple of 16) and optionally sharded over a parallel grid axis.
# ----------------------------------------------------------------------------
def _make_lstm_kernel(num_layers, T, Bs, Hp, Tc):
    nchunks = T // Tc
    unroll = min(Tc, 8)          # partial unroll: LLO visibility without bloat

    def sigmoid(x):
        # One EUP op (tanh) instead of exp + divide.
        return 0.5 * (jnp.tanh(0.5 * x) + 1.0)

    def kernel(*refs):
        x_ref, h0_ref, c0_ref = refs[0], refs[1], refs[2]
        w_ih = refs[3:3 + num_layers]                        # (D_l, 4Hp) bf16
        w_hh = refs[3 + num_layers:3 + 2 * num_layers]       # (Hp, 4Hp)  bf16
        bias = refs[3 + 2 * num_layers:3 + 3 * num_layers]   # (1, 4Hp)   f32
        out_ref, hN_ref, cN_ref, gx_ref = refs[3 + 3 * num_layers:]

        for l in range(num_layers):
            wih = w_ih[l][...]
            whh = w_hh[l][...]
            b = bias[l][...]

            def project(ck, buf, l=l, wih=wih, b=b):
                # Hoisted input projection for one time-chunk: one big
                # (Tc*Bs, D) @ (D, 4Hp) bf16 matmul, f32 accumulation + bias.
                if l == 0:
                    xs = x_ref[pl.ds(ck * Tc, Tc), :, :]      # (Tc, Bs, E)
                else:
                    # previous layer's rows for this chunk (not yet overwritten)
                    xs = out_ref[pl.ds(ck * Tc, Tc), :, :]    # (Tc, Bs, Hp)
                xs2 = xs.reshape(Tc * Bs, xs.shape[-1])
                gx_ref[pl.ds(buf * Tc * Bs, Tc * Bs), :] = (
                    jnp.dot(xs2, wih, preferred_element_type=jnp.float32) + b)

            project(0, 0)                                     # prologue
            h = h0_ref[l]                                     # (Bs, Hp) f32
            c = c0_ref[l]

            for ck in range(nchunks):
                buf = ck % 2
                # Prefetch the next chunk's gate pre-activations; only
                # h @ W_hh remains on the serial critical path below.
                if ck + 1 < nchunks:
                    project(ck + 1, 1 - buf)

                base = buf * Tc * Bs
                tbase = ck * Tc

                def step(tt, carry, base=base, tbase=tbase, whh=whh):
                    h, c = carry
                    row = pl.multiple_of(base + tt * Bs, Bs)
                    g = gx_ref[pl.ds(row, Bs), :] + jnp.dot(
                        h.astype(jnp.bfloat16), whh,
                        preferred_element_type=jnp.float32)   # (Bs, 4Hp) f32
                    # Hp is a multiple of 128, so every gate slice is a whole
                    # lane-aligned tile (no masked sub-vreg extracts on the
                    # serial path).
                    i_g = sigmoid(g[:, 0 * Hp:1 * Hp])
                    f_g = sigmoid(g[:, 1 * Hp:2 * Hp])
                    g_g = jnp.tanh(g[:, 2 * Hp:3 * Hp])
                    o_g = sigmoid(g[:, 3 * Hp:4 * Hp])
                    c_new = f_g * c + i_g * g_g
                    h_new = o_g * jnp.tanh(c_new)
                    # Inter-layer slab stored in bf16 (it is consumed by bf16
                    # matmuls anyway).
                    out_ref[tbase + tt] = h_new.astype(jnp.bfloat16)
                    return h_new, c_new

                h, c = jax.lax.fori_loop(0, Tc, step, (h, c), unroll=unroll)

            hN_ref[l] = h
            cN_ref[l] = c

    return kernel


def fused_lstm(x_tm, h0p, c0p, w_ih_bf, w_hh_bf, biases, *, T, Bp, Hp):
    """x_tm: (T, Bp, E) bf16 time-major.  Returns (out (T,Bp,Hp) bf16,
    hN (L,Bp,Hp) f32, cN (L,Bp,Hp) f32)."""
    L = len(w_ih_bf)
    E = x_tm.shape[-1]

    # v7x has 2 TensorCores per chip: shard the independent batch rows across
    # them with a parallel grid axis when the padded batch splits into >=16-row
    # shards.  (On v5e/v6e the grid just iterates; negligible overhead.)
    S = 2 if Bp % (2 * SUBLANE_BF16) == 0 else 1
    Bs = Bp // S

    # ---- generation-aware VMEM budget & time-chunk size ---------------------
    try:
        vmem_cap = int(getattr(pltpu.get_tpu_info(), "vmem_capacity_bytes",
                               64 << 20))
    except Exception:
        vmem_cap = 64 << 20                      # v7x floor
    budget = int(vmem_cap * 0.7)

    fixed = (2 * T * Bs * E * 2                  # x block (bf16, 2 pipeline bufs)
             + 2 * T * Bs * Hp * 2               # inter-layer slab (bf16)
             + 8 * L * Bs * Hp * 4               # h0/c0/hN/cN blocks (f32)
             + 2 * sum(int(w.size) * 2 for w in list(w_ih_bf) + list(w_hh_bf))
             + 2 * sum(int(b.size) * 4 for b in biases))
    per_step = 2 * Bs * 4 * Hp * 4               # double-buffered f32 gate rows
    Tc = int(max(1, min(T, max(budget - fixed, 0) // per_step)))
    while T % Tc:                                # keep chunks rectangular
        Tc -= 1
    nbuf = 2 if Tc < T else 1
    gx_bytes = nbuf * Tc * Bs * 4 * Hp * 4
    vmem_limit = int(max(32 << 20,
                         min(vmem_cap - (2 << 20), 2 * (fixed + gx_bytes))))

    def full(a):
        return pl.BlockSpec(tuple(a.shape), lambda s: (0, 0))

    return pl.pallas_call(
        _make_lstm_kernel(L, T, Bs, Hp, Tc),
        grid=(S,),
        in_specs=[
            pl.BlockSpec((T, Bs, E), lambda s: (0, s, 0)),
            pl.BlockSpec((L, Bs, Hp), lambda s: (0, s, 0)),
            pl.BlockSpec((L, Bs, Hp), lambda s: (0, s, 0)),
        ] + [full(w) for w in w_ih_bf]
          + [full(w) for w in w_hh_bf]
          + [full(b) for b in biases],
        out_specs=(
            pl.BlockSpec((T, Bs, Hp), lambda s: (0, s, 0)),
            pl.BlockSpec((L, Bs, Hp), lambda s: (0, s, 0)),
            pl.BlockSpec((L, Bs, Hp), lambda s: (0, s, 0)),
        ),
        out_shape=(
            jax.ShapeDtypeStruct((T, Bp, Hp), jnp.bfloat16),   # hidden sequence
            jax.ShapeDtypeStruct((L, Bp, Hp), jnp.float32),    # h_n
            jax.ShapeDtypeStruct((L, Bp, Hp), jnp.float32),    # c_n
        ),
        scratch_shapes=[pltpu.VMEM((nbuf * Tc * Bs, 4 * Hp), jnp.float32)],
        compiler_params=pltpu.CompilerParams(
            dimension_semantics=("parallel",),
            vmem_limit_bytes=vmem_limit),
    )(x_tm, h0p, c0p, *w_ih_bf, *w_hh_bf, *biases)


# ----------------------------------------------------------------------------
# Final Linear: tiled (V outermost so the big weight blocks stream ~once),
# lane-dense output tiles, bias folded in, bf16 operands, f32 logits.
# ----------------------------------------------------------------------------
def _linear_kernel(x_ref, w_ref, b_ref, o_ref):
    o_ref[...] = (jnp.dot(x_ref[...], w_ref[...],
                          preferred_element_type=jnp.float32) + b_ref[...])


def linear(x_bf16, w_bf16, b_f32):
    """x: (M, K) bf16; w: (K, Vp) bf16 pre-padded so Vp divides into lane-dense
    tiles; b: (1, Vp) f32.  Returns (M, Vp) f32."""
    M, K = x_bf16.shape
    Vp = w_bf16.shape[1]
    tn = Vp if Vp <= LINEAR_TN else LINEAR_TN
    assert Vp % tn == 0, "pad the vocab dim in prepare_params"
    Mp = _round_up(M, 8)
    tm = Mp if Mp <= LINEAR_TM else LINEAR_TM
    Mp = _round_up(Mp, tm)
    if Mp != M:
        x_bf16 = jnp.pad(x_bf16, ((0, Mp - M), (0, 0)))
    out = pl.pallas_call(
        _linear_kernel,
        out_shape=jax.ShapeDtypeStruct((Mp, Vp), jnp.float32),
        # Vocab axis OUTERMOST: each (K, tn) weight block is read from HBM
        # ~once; only the small (tm, K) activation tiles are re-fetched.
        grid=(Vp // tn, Mp // tm),
        in_specs=[
            pl.BlockSpec((tm, K), lambda j, i: (i, 0)),
            pl.BlockSpec((K, tn), lambda j, i: (0, j)),
            pl.BlockSpec((1, tn), lambda j, i: (0, j)),
        ],
        out_specs=pl.BlockSpec((tm, tn), lambda j, i: (i, j)),
        compiler_params=pltpu.CompilerParams(
            dimension_semantics=("parallel", "parallel")),
    )(x_bf16, w_bf16, b_f32)
    return out[:M]


# ----------------------------------------------------------------------------
# One-time parameter preparation: bf16 casts + lane/gate padding (H -> Hp,
# V -> Vp).  Zero-padding is exact: padded gate columns produce h = c = 0 and
# padded weight rows contribute nothing.
# ----------------------------------------------------------------------------
def prepare_params(params):
    H = params["w_hh"][0].shape[0]
    V = params["w_out"].shape[1]
    Hp = _round_up(H, LANE)
    Vp = _round_up(V, LANE)
    if Vp > LINEAR_TN:
        Vp = _round_up(Vp, LINEAR_TN)

    def pad_gate_cols(w):                         # (..., 4H) -> (..., 4Hp)
        r = w.reshape(w.shape[:-1] + (4, H))
        r = jnp.pad(r, [(0, 0)] * (r.ndim - 1) + [(0, Hp - H)])
        return r.reshape(w.shape[:-1] + (4 * Hp,))

    w_ih_bf, w_hh_bf, bias_f32 = [], [], []
    for l, (wi, wh, bb) in enumerate(zip(params["w_ih"], params["w_hh"],
                                         params["bias"])):
        if l > 0:                                 # input dim is H for layers > 0
            wi = jnp.pad(wi, ((0, Hp - H), (0, 0)))
        wh = jnp.pad(wh, ((0, Hp - H), (0, 0)))
        w_ih_bf.append(pad_gate_cols(wi).astype(jnp.bfloat16))
        w_hh_bf.append(pad_gate_cols(wh).astype(jnp.bfloat16))
        bias_f32.append(pad_gate_cols(bb))        # stays f32

    w_out = jnp.pad(params["w_out"], ((0, Hp - H), (0, Vp - V)))
    b_out = jnp.pad(params["b_out"], ((0, 0), (0, Vp - V)))

    return {
        "embed_bf": params["embed"].astype(jnp.bfloat16),
        "w_ih_bf": w_ih_bf, "w_hh_bf": w_hh_bf, "bias_f32": bias_f32,
        "w_out_bf": w_out.astype(jnp.bfloat16), "b_out_f32": b_out,
        "H": H, "Hp": Hp, "V": V, "Vp": Vp,
    }


# ----------------------------------------------------------------------------
# Full model forward (prepared params).
# ----------------------------------------------------------------------------
def lstm_model_forward(p, x_tokens, h0, c0):
    B, T = x_tokens.shape
    H, Hp, V = p["H"], p["Hp"], p["V"]

    # Batch padded to a full bf16 sublane tile; for real workloads pack several
    # sequences so Bp approaches 128/256 rows and h @ W_hh fills the MXU.
    Bp = _round_up(max(B, SUBLANE_BF16), SUBLANE_BF16)

    # Embedding gather directly TIME-MAJOR from the pre-cast bf16 table.
    # TODO(synk): fuse the gather into the LSTM kernel (PrefetchScalarGridSpec
    # + per-row index_map) to avoid materializing this (T, Bp, E) slab in HBM.
    emb_tm = jnp.take(p["embed_bf"], x_tokens.T, axis=0)         # (T, B, E) bf16
    emb_tm = jnp.pad(emb_tm, ((0, 0), (0, Bp - B), (0, 0)))

    pad_hc = ((0, 0), (0, Bp - B), (0, Hp - H))
    h0p = jnp.pad(h0, pad_hc)
    c0p = jnp.pad(c0, pad_hc)

    out, hN, cN = fused_lstm(emb_tm, h0p, c0p, p["w_ih_bf"], p["w_hh_bf"],
                             p["bias_f32"], T=T, Bp=Bp, Hp=Hp)

    # Reorder to PyTorch's batch-major flatten on the small hidden tensor.
    # Padded Hp columns are exactly zero and the matching w_out rows are zero,
    # so no lane-dim slicing is needed before the Linear.
    hid = out[:, :B, :]                                          # (T, B, Hp) bf16
    hid_bm = jnp.transpose(hid, (1, 0, 2)).reshape(B * T, Hp)

    logits = linear(hid_bm, p["w_out_bf"], p["b_out_f32"])[:, :V]

    return logits, (hN[:, :B, :H], cN[:, :B, :H])


# ----------------------------------------------------------------------------
# Pure-JAX f32 reference (same math, raw params) for a correctness check.
# ----------------------------------------------------------------------------
def reference_forward(params, x_tokens, h0, c0):
    emb = jnp.take(params["embed"], x_tokens, axis=0)            # (B, T, E)
    x = jnp.transpose(emb, (1, 0, 2))                            # (T, B, E)
    L = len(params["w_ih"])
    H = h0.shape[-1]
    h_fin, c_fin = [], []
    for l in range(L):
        h, c = h0[l], c0[l]
        outs = []
        for t in range(x.shape[0]):
            gates = (x[t] @ params["w_ih"][l] + h @ params["w_hh"][l]
                     + params["bias"][l])
            i_g = jax.nn.sigmoid(gates[:, 0 * H:1 * H])
            f_g = jax.nn.sigmoid(gates[:, 1 * H:2 * H])
            g_g = jnp.tanh(gates[:, 2 * H:3 * H])
            o_g = jax.nn.sigmoid(gates[:, 3 * H:4 * H])
            c = f_g * c + i_g * g_g
            h = o_g * jnp.tanh(c)
            outs.append(h)
        x = jnp.stack(outs)
        h_fin.append(h)
        c_fin.append(c)
    B, T = x.shape[1], x.shape[0]
    out = jnp.transpose(x, (1, 0, 2)).reshape(B * T, H)
    logits = out @ params["w_out"] + params["b_out"]
    return logits, (jnp.stack(h_fin), jnp.stack(c_fin))


# ----------------------------------------------------------------------------
# Deterministic parameter init (nn.Embedding / nn.LSTM / nn.Linear shapes,
# stored pre-transposed (in_dim, 4H); biases pre-summed).
# ----------------------------------------------------------------------------
def init_params(key, vocab_size, embed_size, hidden_size, num_layers):
    keys = jax.random.split(key, 3 + 4 * num_layers)
    scale = 0.1
    params = {
        "embed": scale * jax.random.normal(keys[0], (vocab_size, embed_size),
                                           jnp.float32),
        "w_ih": [], "w_hh": [], "bias": [],
    }
    kidx = 1
    for l in range(num_layers):
        in_dim = embed_size if l == 0 else hidden_size
        w_ih = scale * jax.random.normal(keys[kidx], (in_dim, 4 * hidden_size),
                                         jnp.float32); kidx += 1
        w_hh = scale * jax.random.normal(keys[kidx], (hidden_size, 4 * hidden_size),
                                         jnp.float32); kidx += 1
        b_ih = scale * jax.random.normal(keys[kidx], (1, 4 * hidden_size),
                                         jnp.float32); kidx += 1
        b_hh = scale * jax.random.normal(keys[kidx], (1, 4 * hidden_size),
                                         jnp.float32); kidx += 1
        params["w_ih"].append(w_ih)
        params["w_hh"].append(w_hh)
        params["bias"].append(b_ih + b_hh)
    params["w_out"] = scale * jax.random.normal(keys[kidx],
                                                (hidden_size, vocab_size),
                                                jnp.float32); kidx += 1
    params["b_out"] = scale * jax.random.normal(keys[kidx], (1, vocab_size),
                                                jnp.float32)
    return params


if __name__ == "__main__":
    vocab_size, embed_size, hidden_size, num_layers = 64, 16, 32, 2
    batch, seq = 2, 8

    key = jax.random.PRNGKey(0)
    k_par, k_tok, k_h, k_c = jax.random.split(key, 4)

    params = init_params(k_par, vocab_size, embed_size, hidden_size, num_layers)
    prepped = prepare_params(params)          # one-time bf16 cast + padding

    x_tokens = jax.random.randint(k_tok, (batch, seq), 0, vocab_size, jnp.int32)
    h0 = 0.1 * jax.random.normal(k_h, (num_layers, batch, hidden_size), jnp.float32)
    c0 = 0.1 * jax.random.normal(k_c, (num_layers, batch, hidden_size), jnp.float32)

    logits, (h_n, c_n) = lstm_model_forward(prepped, x_tokens, h0, c0)
    jax.block_until_ready((logits, h_n, c_n))

    ref_logits, (ref_h, ref_c) = reference_forward(params, x_tokens, h0, c0)
    assert logits.shape == (batch * seq, vocab_size)
    assert h_n.shape == (num_layers, batch, hidden_size)
    assert c_n.shape == (num_layers, batch, hidden_size)
    # Kernel uses bf16 MXU operands -> compare to the f32 reference loosely.
    assert jnp.allclose(logits, ref_logits, atol=2e-2), \
        float(jnp.max(jnp.abs(logits - ref_logits)))
    assert jnp.allclose(h_n, ref_h, atol=2e-2)
    assert jnp.allclose(c_n, ref_c, atol=2e-2)

    print("KERNEL_OK")
</pallas_src>

<mosaic_0001>
module attributes {stable_mosaic.version = 11 : i64} {
  func.func @kernel(%arg0: i32, %arg1: memref<8x16x16xbf16, #tpu.memory_space<vmem>>, %arg2: memref<2x16x128xf32, #tpu.memory_space<vmem>>, %arg3: memref<2x16x128xf32, #tpu.memory_space<vmem>>, %arg4: memref<16x512xbf16, #tpu.memory_space<vmem>>, %arg5: memref<128x512xbf16, #tpu.memory_space<vmem>>, %arg6: memref<128x512xbf16, #tpu.memory_space<vmem>>, %arg7: memref<128x512xbf16, #tpu.memory_space<vmem>>, %arg8: memref<1x512xf32, #tpu.memory_space<vmem>>, %arg9: memref<1x512xf32, #tpu.memory_space<vmem>>, %arg10: memref<8x16x128xbf16, #tpu.memory_space<vmem>>, %arg11: memref<2x16x128xf32, #tpu.memory_space<vmem>>, %arg12: memref<2x16x128xf32, #tpu.memory_space<vmem>>, %arg13: memref<128x512xf32, #tpu.memory_space<vmem>>) attributes {dimension_semantics = [#tpu.dimension_semantics<parallel>], iteration_bounds = array<i64: 1>, scalar_prefetch = 0 : i64, scratch_operands = 1 : i64, tpu.core_type = #tpu.core_type<tc>, window_params = [{transform_indices = @transform_0, window_bounds = array<i64: 8, 16, 16>}, {transform_indices = @transform_1, window_bounds = array<i64: 2, 16, 128>}, {transform_indices = @transform_2, window_bounds = array<i64: 2, 16, 128>}, {pipeline_mode = #tpu.pipeline_mode<synchronous>, transform_indices = @transform_3, window_bounds = array<i64: 16, 512>}, {pipeline_mode = #tpu.pipeline_mode<synchronous>, transform_indices = @transform_4, window_bounds = array<i64: 128, 512>}, {pipeline_mode = #tpu.pipeline_mode<synchronous>, transform_indices = @transform_5, window_bounds = array<i64: 128, 512>}, {pipeline_mode = #tpu.pipeline_mode<synchronous>, transform_indices = @transform_6, window_bounds = array<i64: 128, 512>}, {pipeline_mode = #tpu.pipeline_mode<synchronous>, transform_indices = @transform_7, window_bounds = array<i64: 1, 512>}, {pipeline_mode = #tpu.pipeline_mode<synchronous>, transform_indices = @transform_8, window_bounds = array<i64: 1, 512>}, {transform_indices = @transform_9, window_bounds = array<i64: 8, 16, 128>}, {transform_indices = @transform_10, window_bounds = array<i64: 2, 16, 128>}, {transform_indices = @transform_11, window_bounds = array<i64: 2, 16, 128>}]} {
    %c0 = arith.constant 0 : index
    %c0_0 = arith.constant 0 : index
    %0 = vector.load %arg4[%c0, %c0_0] : memref<16x512xbf16, #tpu.memory_space<vmem>>, vector<16x512xbf16>
    %c0_1 = arith.constant 0 : index
    %c0_2 = arith.constant 0 : index
    %1 = vector.load %arg6[%c0_1, %c0_2] : memref<128x512xbf16, #tpu.memory_space<vmem>>, vector<128x512xbf16>
    %c0_3 = arith.constant 0 : index
    %c0_4 = arith.constant 0 : index
    %2 = vector.load %arg8[%c0_3, %c0_4] : memref<1x512xf32, #tpu.memory_space<vmem>>, vector<1x512xf32>
    %c0_5 = arith.constant 0 : index
    %c0_6 = arith.constant 0 : index
    %c0_7 = arith.constant 0 : index
    %3 = vector.load %arg1[%c0_5, %c0_6, %c0_7] : memref<8x16x16xbf16, #tpu.memory_space<vmem>>, vector<8x16x16xbf16>
    %4 = vector.shape_cast %3 : vector<8x16x16xbf16> to vector<128x16xbf16>
    %cst = arith.constant dense<0.000000e+00> : vector<128x512xf32>
    %5 = tpu.matmul %4, %0, %cst {dimension_numbers = #tpu.dot_dimension_numbers<[1], [0], [0], [1], [0, 0, 1, 1], [], []>} : vector<128x16xbf16>, vector<16x512xbf16>, vector<128x512xf32> -> vector<128x512xf32>
    %6 = vector.broadcast %2 : vector<1x512xf32> to vector<128x512xf32>
    %7 = arith.addf %5, %6 : vector<128x512xf32>
    %c0_8 = arith.constant 0 : index
    %c0_9 = arith.constant 0 : index
    %8 = vector.load %arg13[%c0_8, %c0_9] : memref<128x512xf32, #tpu.memory_space<vmem>>, vector<128x512xf32>
    tpu.vector_store %arg13[%c0_8, %c0_9], %7 {strides = array<i32>} : memref<128x512xf32, #tpu.memory_space<vmem>>, vector<128x512xf32>,
    %c0_10 = arith.constant 0 : index
    %c0_11 = arith.constant 0 : index
    %c0_12 = arith.constant 0 : index
    %9 = vector.load %arg2[%c0_10, %c0_11, %c0_12] : memref<2x16x128xf32, #tpu.memory_space<vmem>>, vector<1x16x128xf32>
    %10 = vector.shape_cast %9 : vector<1x16x128xf32> to vector<16x128xf32>
    %c0_13 = arith.constant 0 : index
    %c0_14 = arith.constant 0 : index
    %c0_15 = arith.constant 0 : index
    %11 = vector.load %arg3[%c0_13, %c0_14, %c0_15] : memref<2x16x128xf32, #tpu.memory_space<vmem>>, vector<1x16x128xf32>
    %12 = vector.shape_cast %11 : vector<1x16x128xf32> to vector<16x128xf32>
    %c0_i32 = arith.constant 0 : i32
    %c16_i32 = arith.constant 16 : i32
    %13 = arith.muli %c0_i32, %c16_i32 : i32
    %c0_i32_16 = arith.constant 0 : i32
    %14 = arith.addi %c0_i32_16, %13 : i32
    %15 = tpu.assume_multiple %14, 16 : i32
    %16 = arith.index_cast %15 : i32 to index
    %c0_17 = arith.constant 0 : index
    %17 = vector.load %arg13[%16, %c0_17] : memref<128x512xf32, #tpu.memory_space<vmem>>, vector<16x512xf32>
    %18 = arith.truncf %10 : vector<16x128xf32> to vector<16x128xbf16>
    %cst_18 = arith.constant dense<0.000000e+00> : vector<16x512xf32>
    %19 = tpu.matmul %18, %1, %cst_18 {dimension_numbers = #tpu.dot_dimension_numbers<[1], [0], [0], [1], [0, 0, 1, 1], [], []>} : vector<16x128xbf16>, vector<128x512xbf16>, vector<16x512xf32> -> vector<16x512xf32>
    %20 = arith.addf %17, %19 : vector<16x512xf32>
    %21 = vector.extract_strided_slice %20 {offsets = [0, 0], sizes = [16, 128], strides = [1, 1]} : vector<16x512xf32> to vector<16x128xf32>
    %cst_19 = arith.constant 5.000000e-01 : f32
    %22 = vector.broadcast %cst_19 : f32 to vector<16x128xf32>
    %23 = arith.mulf %22, %21 : vector<16x128xf32>
    %24 = math.tanh %23 : vector<16x128xf32>
    %cst_20 = arith.constant 1.000000e+00 : f32
    %25 = vector.broadcast %cst_20 : f32 to vector<16x128xf32>
    %26 = arith.addf %24, %25 : vector<16x128xf32>
    %cst_21 = arith.constant 5.000000e-01 : f32
    %27 = vector.broadcast %cst_21 : f32 to vector<16x128xf32>
    %28 = arith.mulf %27, %26 : vector<16x128xf32>
    %29 = vector.extract_strided_slice %20 {offsets = [0, 128], sizes = [16, 128], strides = [1, 1]} : vector<16x512xf32> to vector<16x128xf32>
    %cst_22 = arith.constant 5.000000e-01 : f32
    %30 = vector.broadcast %cst_22 : f32 to vector<16x128xf32>
    %31 = arith.mulf %30, %29 : vector<16x128xf32>
    %32 = math.tanh %31 : vector<16x128xf32>
    %cst_23 = arith.constant 1.000000e+00 : f32
    %33 = vector.broadcast %cst_23 : f32 to vector<16x128xf32>
    %34 = arith.addf %32, %33 : vector<16x128xf32>
    %cst_24 = arith.constant 5.000000e-01 : f32
    %35 = vector.broadcast %cst_24 : f32 to vector<16x128xf32>
    %36 = arith.mulf %35, %34 : vector<16x128xf32>
    %37 = vector.extract_strided_slice %20 {offsets = [0, 256], sizes = [16, 128], strides = [1, 1]} : vector<16x512xf32> to vector<16x128xf32>
    %38 = math.tanh %37 : vector<16x128xf32>
    %39 = vector.extract_strided_slice %20 {offsets = [0, 384], sizes = [16, 128], strides = [1, 1]} : vector<16x512xf32> to vector<16x128xf32>
    %cst_25 = arith.constant 5.000000e-01 : f32
    %40 = vector.broadcast %cst_25 : f32 to vector<16x128xf32>
    %41 = arith.mulf %40, %39 : vector<16x128xf32>
    %42 = math.tanh %41 : vector<16x128xf32>
    %cst_26 = arith.constant 1.000000e+00 : f32
    %43 = vector.broadcast %cst_26 : f32 to vector<16x128xf32>
    %44 = arith.addf %42, %43 : vector<16x128xf32>
    %cst_27 = arith.constant 5.000000e-01 : f32
    %45 = vector.broadcast %cst_27 : f32 to vector<16x128xf32>
    %46 = arith.mulf %45, %44 : vector<16x128xf32>
    %47 = arith.mulf %36, %12 : vector<16x128xf32>
    %48 = arith.mulf %28, %38 : vector<16x128xf32>
    %49 = arith.addf %47, %48 : vector<16x128xf32>
    %50 = math.tanh %49 : vector<16x128xf32>
    %51 = arith.mulf %46, %50 : vector<16x128xf32>
    %52 = arith.truncf %51 : vector<16x128xf32> to vector<16x128xbf16>
    %c0_i32_28 = arith.constant 0 : i32
    %53 = arith.addi %c0_i32_28, %c0_i32 : i32
    %54 = arith.index_cast %53 : i32 to index
    %c0_29 = arith.constant 0 : index
    %c0_30 = arith.constant 0 : index
    %55 = vector.load %arg10[%54, %c0_29, %c0_30] : memref<8x16x128xbf16, #tpu.memory_space<vmem>>, vector<1x16x128xbf16>
    %56 = vector.shape_cast %55 : vector<1x16x128xbf16> to vector<16x128xbf16>
    %57 = vector.shape_cast %52 : vector<16x128xbf16> to vector<1x16x128xbf16>
    tpu.vector_store %arg10[%54, %c0_29, %c0_30], %57 {strides = array<i32>} : memref<8x16x128xbf16, #tpu.memory_space<vmem>>, vector<1x16x128xbf16>,
    %c1_i32 = arith.constant 1 : i32
    %c16_i32_31 = arith.constant 16 : i32
    %58 = arith.muli %c1_i32, %c16_i32_31 : i32
    %c0_i32_32 = arith.constant 0 : i32
    %59 = arith.addi %c0_i32_32, %58 : i32
    %60 = tpu.assume_multiple %59, 16 : i32
    %61 = arith.index_cast %60 : i32 to index
    %c0_33 = arith.constant 0 : index
    %62 = vector.load %arg13[%61, %c0_33] : memref<128x512xf32, #tpu.memory_space<vmem>>, vector<16x512xf32>
    %63 = arith.truncf %51 : vector<16x128xf32> to vector<16x128xbf16>
    %cst_34 = arith.constant dense<0.000000e+00> : vector<16x512xf32>
    %64 = tpu.matmul %63, %1, %cst_34 {dimension_numbers = #tpu.dot_dimension_numbers<[1], [0], [0], [1], [0, 0, 1, 1], [], []>} : vector<16x128xbf16>, vector<128x512xbf16>, vector<16x512xf32> -> vector<16x512xf32>
    %65 = arith.addf %62, %64 : vector<16x512xf32>
    %66 = vector.extract_strided_slice %65 {offsets = [0, 0], sizes = [16, 128], strides = [1, 1]} : vector<16x512xf32> to vector<16x128xf32>
    %cst_35 = arith.constant 5.000000e-01 : f32
    %67 = vector.broadcast %cst_35 : f32 to vector<16x128xf32>
    %68 = arith.mulf %67, %66 : vector<16x128xf32>
    %69 = math.tanh %68 : vector<16x128xf32>
    %cst_36 = arith.constant 1.000000e+00 : f32
    %70 = vector.broadcast %cst_36 : f32 to vector<16x128xf32>
    %71 = arith.addf %69, %70 : vector<16x128xf32>
    %cst_37 = arith.constant 5.000000e-01 : f32
    %72 = vector.broadcast %cst_37 : f32 to vector<16x128xf32>
    %73 = arith.mulf %72, %71 : vector<16x128xf32>
    %74 = vector.extract_strided_slice %65 {offsets = [0, 128], sizes = [16, 128], strides = [1, 1]} : vector<16x512xf32> to vector<16x128xf32>
    %cst_38 = arith.constant 5.000000e-01 : f32
    %75 = vector.broadcast %cst_38 : f32 to vector<16x128xf32>
    %76 = arith.mulf %75, %74 : vector<16x128xf32>
    %77 = math.tanh %76 : vector<16x128xf32>
    %cst_39 = arith.constant 1.000000e+00 : f32
    %78 = vector.broadcast %cst_39 : f32 to vector<16x128xf32>
    %79 = arith.addf %77, %78 : vector<16x128xf32>
    %cst_40 = arith.constant 5.000000e-01 : f32
    %80 = vector.broadcast %cst_40 : f32 to vector<16x128xf32>
    %81 = arith.mulf %80, %79 : vector<16x128xf32>
    %82 = vector.extract_strided_slice %65 {offsets = [0, 256], sizes = [16, 128], strides = [1, 1]} : vector<16x512xf32> to vector<16x128xf32>
    %83 = math.tanh %82 : vector<16x128xf32>
    %84 = vector.extract_strided_slice %65 {offsets = [0, 384], sizes = [16, 128], strides = [1, 1]} : vector<16x512xf32> to vector<16x128xf32>
    %cst_41 = arith.constant 5.000000e-01 : f32
    %85 = vector.broadcast %cst_41 : f32 to vector<16x128xf32>
    %86 = arith.mulf %85, %84 : vector<16x128xf32>
    %87 = math.tanh %86 : vector<16x128xf32>
    %cst_42 = arith.constant 1.000000e+00 : f32
    %88 = vector.broadcast %cst_42 : f32 to vector<16x128xf32>
    %89 = arith.addf %87, %88 : vector<16x128xf32>
    %cst_43 = arith.constant 5.000000e-01 : f32
    %90 = vector.broadcast %cst_43 : f32 to vector<16x128xf32>
    %91 = arith.mulf %90, %89 : vector<16x128xf32>
    %92 = arith.mulf %81, %49 : vector<16x128xf32>
    %93 = arith.mulf %73, %83 : vector<16x128xf32>
    %94 = arith.addf %92, %93 : vector<16x128xf32>
    %95 = math.tanh %94 : vector<16x128xf32>
    %96 = arith.mulf %91, %95 : vector<16x128xf32>
    %97 = arith.truncf %96 : vector<16x128xf32> to vector<16x128xbf16>
    %c0_i32_44 = arith.constant 0 : i32
    %98 = arith.addi %c0_i32_44, %c1_i32 : i32
    %99 = arith.index_cast %98 : i32 to index
    %c0_45 = arith.constant 0 : index
    %c0_46 = arith.constant 0 : index
    %100 = vector.load %arg10[%99, %c0_45, %c0_46] : memref<8x16x128xbf16, #tpu.memory_space<vmem>>, vector<1x16x128xbf16>
    %101 = vector.shape_cast %100 : vector<1x16x128xbf16> to vector<16x128xbf16>
    %102 = vector.shape_cast %97 : vector<16x128xbf16> to vector<1x16x128xbf16>
    tpu.vector_store %arg10[%99, %c0_45, %c0_46], %102 {strides = array<i32>} : memref<8x16x128xbf16, #tpu.memory_space<vmem>>, vector<1x16x128xbf16>,
    %c2_i32 = arith.constant 2 : i32
    %c16_i32_47 = arith.constant 16 : i32
    %103 = arith.muli %c2_i32, %c16_i32_47 : i32
    %c0_i32_48 = arith.constant 0 : i32
    %104 = arith.addi %c0_i32_48, %103 : i32
    %105 = tpu.assume_multiple %104, 16 : i32
    %106 = arith.index_cast %105 : i32 to index
    %c0_49 = arith.constant 0 : index
    %107 = vector.load %arg13[%106, %c0_49] : memref<128x512xf32, #tpu.memory_space<vmem>>, vector<16x512xf32>
    %108 = arith.truncf %96 : vector<16x128xf32> to vector<16x128xbf16>
    %cst_50 = arith.constant dense<0.000000e+00> : vector<16x512xf32>
    %109 = tpu.matmul %108, %1, %cst_50 {dimension_numbers = #tpu.dot_dimension_numbers<[1], [0], [0], [1], [0, 0, 1, 1], [], []>} : vector<16x128xbf16>, vector<128x512xbf16>, vector<16x512xf32> -> vector<16x512xf32>
    %110 = arith.addf %107, %109 : vector<16x512xf32>
    %111 = vector.extract_strided_slice %110 {offsets = [0, 0], sizes = [16, 128], strides = [1, 1]} : vector<16x512xf32> to vector<16x128xf32>
    %cst_51 = arith.constant 5.000000e-01 : f32
    %112 = vector.broadcast %cst_51 : f32 to vector<16x128xf32>
    %113 = arith.mulf %112, %111 : vector<16x128xf32>
    %114 = math.tanh %113 : vector<16x128xf32>
    %cst_52 = arith.constant 1.000000e+00 : f32
    %115 = vector.broadcast %cst_52 : f32 to vector<16x128xf32>
    %116 = arith.addf %114, %115 : vector<16x128xf32>
    %cst_53 = arith.constant 5.000000e-01 : f32
    %117 = vector.broadcast %cst_53 : f32 to vector<16x128xf32>
    %118 = arith.mulf %117, %116 : vector<16x128xf32>
    %119 = vector.extract_strided_slice %110 {offsets = [0, 128], sizes = [16, 128], strides = [1, 1]} : vector<16x512xf32> to vector<16x128xf32>
    %cst_54 = arith.constant 5.000000e-01 : f32
    %120 = vector.broadcast %cst_54 : f32 to vector<16x128xf32>
    %121 = arith.mulf %120, %119 : vector<16x128xf32>
    %122 = math.tanh %121 : vector<16x128xf32>
    %cst_55 = arith.constant 1.000000e+00 : f32
    %123 = vector.broadcast %cst_55 : f32 to vector<16x128xf32>
    %124 = arith.addf %122, %123 : vector<16x128xf32>
    %cst_56 = arith.constant 5.000000e-01 : f32
    %125 = vector.broadcast %cst_56 : f32 to vector<16x128xf32>
    %126 = arith.mulf %125, %124 : vector<16x128xf32>
    %127 = vector.extract_strided_slice %110 {offsets = [0, 256], sizes = [16, 128], strides = [1, 1]} : vector<16x512xf32> to vector<16x128xf32>
    %128 = math.tanh %127 : vector<16x128xf32>
    %129 = vector.extract_strided_slice %110 {offsets = [0, 384], sizes = [16, 128], strides = [1, 1]} : vector<16x512xf32> to vector<16x128xf32>
    %cst_57 = arith.constant 5.000000e-01 : f32
    %130 = vector.broadcast %cst_57 : f32 to vector<16x128xf32>
    %131 = arith.mulf %130, %129 : vector<16x128xf32>
    %132 = math.tanh %131 : vector<16x128xf32>
    %cst_58 = arith.constant 1.000000e+00 : f32
    %133 = vector.broadcast %cst_58 : f32 to vector<16x128xf32>
    %134 = arith.addf %132, %133 : vector<16x128xf32>
    %cst_59 = arith.constant 5.000000e-01 : f32
    %135 = vector.broadcast %cst_59 : f32 to vector<16x128xf32>
    %136 = arith.mulf %135, %134 : vector<16x128xf32>
    %137 = arith.mulf %126, %94 : vector<16x128xf32>
    %138 = arith.mulf %118, %128 : vector<16x128xf32>
    %139 = arith.addf %137, %138 : vector<16x128xf32>
    %140 = math.tanh %139 : vector<16x128xf32>
    %141 = arith.mulf %136, %140 : vector<16x128xf32>
    %142 = arith.truncf %141 : vector<16x128xf32> to vector<16x128xbf16>
    %c0_i32_60 = arith.constant 0 : i32
    %143 = arith.addi %c0_i32_60, %c2_i32 : i32
    %144 = arith.index_cast %143 : i32 to index
    %c0_61 = arith.constant 0 : index
    %c0_62 = arith.constant 0 : index
    %145 = vector.load %arg10[%144, %c0_61, %c0_62] : memref<8x16x128xbf16, #tpu.memory_space<vmem>>, vector<1x16x128xbf16>
    %146 = vector.shape_cast %145 : vector<1x16x128xbf16> to vector<16x128xbf16>
    %147 = vector.shape_cast %142 : vector<16x128xbf16> to vector<1x16x128xbf16>
    tpu.vector_store %arg10[%144, %c0_61, %c0_62], %147 {strides = array<i32>} : memref<8x16x128xbf16, #tpu.memory_space<vmem>>, vector<1x16x128xbf16>,
    %c3_i32 = arith.constant 3 : i32
    %c16_i32_63 = arith.constant 16 : i32
    %148 = arith.muli %c3_i32, %c16_i32_63 : i32
    %c0_i32_64 = arith.constant 0 : i32
    %149 = arith.addi %c0_i32_64, %148 : i32
    %150 = tpu.assume_multiple %149, 16 : i32
    %151 = arith.index_cast %150 : i32 to index
    %c0_65 = arith.constant 0 : index
    %152 = vector.load %arg13[%151, %c0_65] : memref<128x512xf32, #tpu.memory_space<vmem>>, vector<16x512xf32>
    %153 = arith.truncf %141 : vector<16x128xf32> to vector<16x128xbf16>
    %cst_66 = arith.constant dense<0.000000e+00> : vector<16x512xf32>
    %154 = tpu.matmul %153, %1, %cst_66 {dimension_numbers = #tpu.dot_dimension_numbers<[1], [0], [0], [1], [0, 0, 1, 1], [], []>} : vector<16x128xbf16>, vector<128x512xbf16>, vector<16x512xf32> -> vector<16x512xf32>
    %155 = arith.addf %152, %154 : vector<16x512xf32>
    %156 = vector.extract_strided_slice %155 {offsets = [0, 0], sizes = [16, 128], strides = [1, 1]} : vector<16x512xf32> to vector<16x128xf32>
    %cst_67 = arith.constant 5.000000e-01 : f32
    %157 = vector.broadcast %cst_67 : f32 to vector<16x128xf32>
    %158 = arith.mulf %157, %156 : vector<16x128xf32>
    %159 = math.tanh %158 : vector<16x128xf32>
    %cst_68 = arith.constant 1.000000e+00 : f32
    %160 = vector.broadcast %cst_68 : f32 to vector<16x128xf32>
    %161 = arith.addf %159, %160 : vector<16x128xf32>
    %cst_69 = arith.constant 5.000000e-01 : f32
    %162 = vector.broadcast %cst_69 : f32 to vector<16x128xf32>
    %163 = arith.mulf %162, %161 : vector<16x128xf32>
    %164 = vector.extract_strided_slice %155 {offsets = [0, 128], sizes = [16, 128], strides = [1, 1]} : vector<16x512xf32> to vector<16x128xf32>
    %cst_70 = arith.constant 5.000000e-01 : f32
    %165 = vector.broadcast %cst_70 : f32 to vector<16x128xf32>
    %166 = arith.mulf %165, %164 : vector<16x128xf32>
    %167 = math.tanh %166 : vector<16x128xf32>
    %cst_71 = arith.constant 1.000000e+00 : f32
    %168 = vector.broadcast %cst_71 : f32 to vector<16x128xf32>
    %169 = arith.addf %167, %168 : vector<16x128xf32>
    %cst_72 = arith.constant 5.000000e-01 : f32
    %170 = vector.broadcast %cst_72 : f32 to vector<16x128xf32>
    %171 = arith.mulf %170, %169 : vector<16x128xf32>
    %172 = vector.extract_strided_slice %155 {offsets = [0, 256], sizes = [16, 128], strides = [1, 1]} : vector<16x512xf32> to vector<16x128xf32>
    %173 = math.tanh %172 : vector<16x128xf32>
    %174 = vector.extract_strided_slice %155 {offsets = [0, 384], sizes = [16, 128], strides = [1, 1]} : vector<16x512xf32> to vector<16x128xf32>
    %cst_73 = arith.constant 5.000000e-01 : f32
    %175 = vector.broadcast %cst_73 : f32 to vector<16x128xf32>
    %176 = arith.mulf %175, %174 : vector<16x128xf32>
    %177 = math.tanh %176 : vector<16x128xf32>
    %cst_74 = arith.constant 1.000000e+00 : f32
    %178 = vector.broadcast %cst_74 : f32 to vector<16x128xf32>
    %179 = arith.addf %177, %178 : vector<16x128xf32>
    %cst_75 = arith.constant 5.000000e-01 : f32
    %180 = vector.broadcast %cst_75 : f32 to vector<16x128xf32>
    %181 = arith.mulf %180, %179 : vector<16x128xf32>
    %182 = arith.mulf %171, %139 : vector<16x128xf32>
    %183 = arith.mulf %163, %173 : vector<16x128xf32>
    %184 = arith.addf %182, %183 : vector<16x128xf32>
    %185 = math.tanh %184 : vector<16x128xf32>
    %186 = arith.mulf %181, %185 : vector<16x128xf32>
    %187 = arith.truncf %186 : vector<16x128xf32> to vector<16x128xbf16>
    %c0_i32_76 = arith.constant 0 : i32
    %188 = arith.addi %c0_i32_76, %c3_i32 : i32
    %189 = arith.index_cast %188 : i32 to index
    %c0_77 = arith.constant 0 : index
    %c0_78 = arith.constant 0 : index
    %190 = vector.load %arg10[%189, %c0_77, %c0_78] : memref<8x16x128xbf16, #tpu.memory_space<vmem>>, vector<1x16x128xbf16>
    %191 = vector.shape_cast %190 : vector<1x16x128xbf16> to vector<16x128xbf16>
    %192 = vector.shape_cast %187 : vector<16x128xbf16> to vector<1x16x128xbf16>
    tpu.vector_store %arg10[%189, %c0_77, %c0_78], %192 {strides = array<i32>} : memref<8x16x128xbf16, #tpu.memory_space<vmem>>, vector<1x16x128xbf16>,
    %c4_i32 = arith.constant 4 : i32
    %c16_i32_79 = arith.constant 16 : i32
    %193 = arith.muli %c4_i32, %c16_i32_79 : i32
    %c0_i32_80 = arith.constant 0 : i32
    %194 = arith.addi %c0_i32_80, %193 : i32
    %195 = tpu.assume_multiple %194, 16 : i32
    %196 = arith.index_cast %195 : i32 to index
    %c0_81 = arith.constant 0 : index
    %197 = vector.load %arg13[%196, %c0_81] : memref<128x512xf32, #tpu.memory_space<vmem>>, vector<16x512xf32>
    %198 = arith.truncf %186 : vector<16x128xf32> to vector<16x128xbf16>
    %cst_82 = arith.constant dense<0.000000e+00> : vector<16x512xf32>
    %199 = tpu.matmul %198, %1, %cst_82 {dimension_numbers = #tpu.dot_dimension_numbers<[1], [0], [0], [1], [0, 0, 1, 1], [], []>} : vector<16x128xbf16>, vector<128x512xbf16>, vector<16x512xf32> -> vector<16x512xf32>
    %200 = arith.addf %197, %199 : vector<16x512xf32>
    %201 = vector.extract_strided_slice %200 {offsets = [0, 0], sizes = [16, 128], strides = [1, 1]} : vector<16x512xf32> to vector<16x128xf32>
    %cst_83 = arith.constant 5.000000e-01 : f32
    %202 = vector.broadcast %cst_83 : f32 to vector<16x128xf32>
    %203 = arith.mulf %202, %201 : vector<16x128xf32>
    %204 = math.tanh %203 : vector<16x128xf32>
    %cst_84 = arith.constant 1.000000e+00 : f32
    %205 = vector.broadcast %cst_84 : f32 to vector<16x128xf32>
    %206 = arith.addf %204, %205 : vector<16x128xf32>
    %cst_85 = arith.constant 5.000000e-01 : f32
    %207 = vector.broadcast %cst_85 : f32 to vector<16x128xf32>
    %208 = arith.mulf %207, %206 : vector<16x128xf32>
    %209 = vector.extract_strided_slice %200 {offsets = [0, 128], sizes = [16, 128], strides = [1, 1]} : vector<16x512xf32> to vector<16x128xf32>
    %cst_86 = arith.constant 5.000000e-01 : f32
    %210 = vector.broadcast %cst_86 : f32 to vector<16x128xf32>
    %211 = arith.mulf %210, %209 : vector<16x128xf32>
    %212 = math.tanh %211 : vector<16x128xf32>
    %cst_87 = arith.constant 1.000000e+00 : f32
    %213 = vector.broadcast %cst_87 : f32 to vector<16x128xf32>
    %214 = arith.addf %212, %213 : vector<16x128xf32>
    %cst_88 = arith.constant 5.000000e-01 : f32
    %215 = vector.broadcast %cst_88 : f32 to vector<16x128xf32>
    %216 = arith.mulf %215, %214 : vector<16x128xf32>
    %217 = vector.extract_strided_slice %200 {offsets = [0, 256], sizes = [16, 128], strides = [1, 1]} : vector<16x512xf32> to vector<16x128xf32>
    %218 = math.tanh %217 : vector<16x128xf32>
    %219 = vector.extract_strided_slice %200 {offsets = [0, 384], sizes = [16, 128], strides = [1, 1]} : vector<16x512xf32> to vector<16x128xf32>
    %cst_89 = arith.constant 5.000000e-01 : f32
    %220 = vector.broadcast %cst_89 : f32 to vector<16x128xf32>
    %221 = arith.mulf %220, %219 : vector<16x128xf32>
    %222 = math.tanh %221 : vector<16x128xf32>
    %cst_90 = arith.constant 1.000000e+00 : f32
    %223 = vector.broadcast %cst_90 : f32 to vector<16x128xf32>
    %224 = arith.addf %222, %223 : vector<16x128xf32>
    %cst_91 = arith.constant 5.000000e-01 : f32
    %225 = vector.broadcast %cst_91 : f32 to vector<16x128xf32>
    %226 = arith.mulf %225, %224 : vector<16x128xf32>
    %227 = arith.mulf %216, %184 : vector<16x128xf32>
    %228 = arith.mulf %208, %218 : vector<16x128xf32>
    %229 = arith.addf %227, %228 : vector<16x128xf32>
    %230 = math.tanh %229 : vector<16x128xf32>
    %231 = arith.mulf %226, %230 : vector<16x128xf32>
    %232 = arith.truncf %231 : vector<16x128xf32> to vector<16x128xbf16>
    %c0_i32_92 = arith.constant 0 : i32
    %233 = arith.addi %c0_i32_92, %c4_i32 : i32
    %234 = arith.index_cast %233 : i32 to index
    %c0_93 = arith.constant 0 : index
    %c0_94 = arith.constant 0 : index
    %235 = vector.load %arg10[%234, %c0_93, %c0_94] : memref<8x16x128xbf16, #tpu.memory_space<vmem>>, vector<1x16x128xbf16>
    %236 = vector.shape_cast %235 : vector<1x16x128xbf16> to vector<16x128xbf16>
    %237 = vector.shape_cast %232 : vector<16x128xbf16> to vector<1x16x128xbf16>
    tpu.vector_store %arg10[%234, %c0_93, %c0_94], %237 {strides = array<i32>} : memref<8x16x128xbf16, #tpu.memory_space<vmem>>, vector<1x16x128xbf16>,
    %c5_i32 = arith.constant 5 : i32
    %c16_i32_95 = arith.constant 16 : i32
    %238 = arith.muli %c5_i32, %c16_i32_95 : i32
    %c0_i32_96 = arith.constant 0 : i32
    %239 = arith.addi %c0_i32_96, %238 : i32
    %240 = tpu.assume_multiple %239, 16 : i32
    %241 = arith.index_cast %240 : i32 to index
    %c0_97 = arith.constant 0 : index
    %242 = vector.load %arg13[%241, %c0_97] : memref<128x512xf32, #tpu.memory_space<vmem>>, vector<16x512xf32>
    %243 = arith.truncf %231 : vector<16x128xf32> to vector<16x128xbf16>
    %cst_98 = arith.constant dense<0.000000e+00> : vector<16x512xf32>
    %244 = tpu.matmul %243, %1, %cst_98 {dimension_numbers = #tpu.dot_dimension_numbers<[1], [0], [0], [1], [0, 0, 1, 1], [], []>} : vector<16x128xbf16>, vector<128x512xbf16>, vector<16x512xf32> -> vector<16x512xf32>
    %245 = arith.addf %242, %244 : vector<16x512xf32>
    %246 = vector.extract_strided_slice %245 {offsets = [0, 0], sizes = [16, 128], strides = [1, 1]} : vector<16x512xf32> to vector<16x128xf32>
    %cst_99 = arith.constant 5.000000e-01 : f32
    %247 = vector.broadcast %cst_99 : f32 to vector<16x128xf32>
    %248 = arith.mulf %247, %246 : vector<16x128xf32>
    %249 = math.tanh %248 : vector<16x128xf32>
    %cst_100 = arith.constant 1.000000e+00 : f32
    %250 = vector.broadcast %cst_100 : f32 to vector<16x128xf32>
    %251 = arith.addf %249, %250 : vector<16x128xf32>
    %cst_101 = arith.constant 5.000000e-01 : f32
    %252 = vector.broadcast %cst_101 : f32 to vector<16x128xf32>
    %253 = arith.mulf %252, %251 : vector<16x128xf32>
    %254 = vector.extract_strided_slice %245 {offsets = [0, 128], sizes = [16, 128], strides = [1, 1]} : vector<16x512xf32> to vector<16x128xf32>
    %cst_102 = arith.constant 5.000000e-01 : f32
    %255 = vector.broadcast %cst_102 : f32 to vector<16x128xf32>
    %256 = arith.mulf %255, %254 : vector<16x128xf32>
    %257 = math.tanh %256 : vector<16x128xf32>
    %cst_103 = arith.constant 1.000000e+00 : f32
    %258 = vector.broadcast %cst_103 : f32 to vector<16x128xf32>
    %259 = arith.addf %257, %258 : vector<16x128xf32>
    %cst_104 = arith.constant 5.000000e-01 : f32
    %260 = vector.broadcast %cst_104 : f32 to vector<16x128xf32>
    %261 = arith.mulf %260, %259 : vector<16x128xf32>
    %262 = vector.extract_strided_slice %245 {offsets = [0, 256], sizes = [16, 128], strides = [1, 1]} : vector<16x512xf32> to vector<16x128xf32>
    %263 = math.tanh %262 : vector<16x128xf32>
    %264 = vector.extract_strided_slice %245 {offsets = [0, 384], sizes = [16, 128], strides = [1, 1]} : vector<16x512xf32> to vector<16x128xf32>
    %cst_105 = arith.constant 5.000000e-01 : f32
    %265 = vector.broadcast %cst_105 : f32 to vector<16x128xf32>
    %266 = arith.mulf %265, %264 : vector<16x128xf32>
    %267 = math.tanh %266 : vector<16x128xf32>
    %cst_106 = arith.constant 1.000000e+00 : f32
    %268 = vector.broadcast %cst_106 : f32 to vector<16x128xf32>
    %269 = arith.addf %267, %268 : vector<16x128xf32>
    %cst_107 = arith.constant 5.000000e-01 : f32
    %270 = vector.broadcast %cst_107 : f32 to vector<16x128xf32>
    %271 = arith.mulf %270, %269 : vector<16x128xf32>
    %272 = arith.mulf %261, %229 : vector<16x128xf32>
    %273 = arith.mulf %253, %263 : vector<16x128xf32>
    %274 = arith.addf %272, %273 : vector<16x128xf32>
    %275 = math.tanh %274 : vector<16x128xf32>
    %276 = arith.mulf %271, %275 : vector<16x128xf32>
    %277 = arith.truncf %276 : vector<16x128xf32> to vector<16x128xbf16>
    %c0_i32_108 = arith.constant 0 : i32
    %278 = arith.addi %c0_i32_108, %c5_i32 : i32
    %279 = arith.index_cast %278 : i32 to index
    %c0_109 = arith.constant 0 : index
    %c0_110 = arith.constant 0 : index
    %280 = vector.load %arg10[%279, %c0_109, %c0_110] : memref<8x16x128xbf16, #tpu.memory_space<vmem>>, vector<1x16x128xbf16>
    %281 = vector.shape_cast %280 : vector<1x16x128xbf16> to vector<16x128xbf16>
    %282 = vector.shape_cast %277 : vector<16x128xbf16> to vector<1x16x128xbf16>
    tpu.vector_store %arg10[%279, %c0_109, %c0_110], %282 {strides = array<i32>} : memref<8x16x128xbf16, #tpu.memory_space<vmem>>, vector<1x16x128xbf16>,
    %c6_i32 = arith.constant 6 : i32
    %c16_i32_111 = arith.constant 16 : i32
    %283 = arith.muli %c6_i32, %c16_i32_111 : i32
    %c0_i32_112 = arith.constant 0 : i32
    %284 = arith.addi %c0_i32_112, %283 : i32
    %285 = tpu.assume_multiple %284, 16 : i32
    %286 = arith.index_cast %285 : i32 to index
    %c0_113 = arith.constant 0 : index
    %287 = vector.load %arg13[%286, %c0_113] : memref<128x512xf32, #tpu.memory_space<vmem>>, vector<16x512xf32>
    %288 = arith.truncf %276 : vector<16x128xf32> to vector<16x128xbf16>
    %cst_114 = arith.constant dense<0.000000e+00> : vector<16x512xf32>
    %289 = tpu.matmul %288, %1, %cst_114 {dimension_numbers = #tpu.dot_dimension_numbers<[1], [0], [0], [1], [0, 0, 1, 1], [], []>} : vector<16x128xbf16>, vector<128x512xbf16>, vector<16x512xf32> -> vector<16x512xf32>
    %290 = arith.addf %287, %289 : vector<16x512xf32>
    %291 = vector.extract_strided_slice %290 {offsets = [0, 0], sizes = [16, 128], strides = [1, 1]} : vector<16x512xf32> to vector<16x128xf32>
    %cst_115 = arith.constant 5.000000e-01 : f32
    %292 = vector.broadcast %cst_115 : f32 to vector<16x128xf32>
    %293 = arith.mulf %292, %291 : vector<16x128xf32>
    %294 = math.tanh %293 : vector<16x128xf32>
    %cst_116 = arith.constant 1.000000e+00 : f32
    %295 = vector.broadcast %cst_116 : f32 to vector<16x128xf32>
    %296 = arith.addf %294, %295 : vector<16x128xf32>
    %cst_117 = arith.constant 5.000000e-01 : f32
    %297 = vector.broadcast %cst_117 : f32 to vector<16x128xf32>
    %298 = arith.mulf %297, %296 : vector<16x128xf32>
    %299 = vector.extract_strided_slice %290 {offsets = [0, 128], sizes = [16, 128], strides = [1, 1]} : vector<16x512xf32> to vector<16x128xf32>
    %cst_118 = arith.constant 5.000000e-01 : f32
    %300 = vector.broadcast %cst_118 : f32 to vector<16x128xf32>
    %301 = arith.mulf %300, %299 : vector<16x128xf32>
    %302 = math.tanh %301 : vector<16x128xf32>
    %cst_119 = arith.constant 1.000000e+00 : f32
    %303 = vector.broadcast %cst_119 : f32 to vector<16x128xf32>
    %304 = arith.addf %302, %303 : vector<16x128xf32>
    %cst_120 = arith.constant 5.000000e-01 : f32
    %305 = vector.broadcast %cst_120 : f32 to vector<16x128xf32>
    %306 = arith.mulf %305, %304 : vector<16x128xf32>
    %307 = vector.extract_strided_slice %290 {offsets = [0, 256], sizes = [16, 128], strides = [1, 1]} : vector<16x512xf32> to vector<16x128xf32>
    %308 = math.tanh %307 : vector<16x128xf32>
    %309 = vector.extract_strided_slice %290 {offsets = [0, 384], sizes = [16, 128], strides = [1, 1]} : vector<16x512xf32> to vector<16x128xf32>
    %cst_121 = arith.constant 5.000000e-01 : f32
    %310 = vector.broadcast %cst_121 : f32 to vector<16x128xf32>
    %311 = arith.mulf %310, %309 : vector<16x128xf32>
    %312 = math.tanh %311 : vector<16x128xf32>
    %cst_122 = arith.constant 1.000000e+00 : f32
    %313 = vector.broadcast %cst_122 : f32 to vector<16x128xf32>
    %314 = arith.addf %312, %313 : vector<16x128xf32>
    %cst_123 = arith.constant 5.000000e-01 : f32
    %315 = vector.broadcast %cst_123 : f32 to vector<16x128xf32>
    %316 = arith.mulf %315, %314 : vector<16x128xf32>
    %317 = arith.mulf %306, %274 : vector<16x128xf32>
    %318 = arith.mulf %298, %308 : vector<16x128xf32>
    %319 = arith.addf %317, %318 : vector<16x128xf32>
    %320 = math.tanh %319 : vector<16x128xf32>
    %321 = arith.mulf %316, %320 : vector<16x128xf32>
    %322 = arith.truncf %321 : vector<16x128xf32> to vector<16x128xbf16>
    %c0_i32_124 = arith.constant 0 : i32
    %323 = arith.addi %c0_i32_124, %c6_i32 : i32
    %324 = arith.index_cast %323 : i32 to index
    %c0_125 = arith.constant 0 : index
    %c0_126 = arith.constant 0 : index
    %325 = vector.load %arg10[%324, %c0_125, %c0_126] : memref<8x16x128xbf16, #tpu.memory_space<vmem>>, vector<1x16x128xbf16>
    %326 = vector.shape_cast %325 : vector<1x16x128xbf16> to vector<16x128xbf16>
    %327 = vector.shape_cast %322 : vector<16x128xbf16> to vector<1x16x128xbf16>
    tpu.vector_store %arg10[%324, %c0_125, %c0_126], %327 {strides = array<i32>} : memref<8x16x128xbf16, #tpu.memory_space<vmem>>, vector<1x16x128xbf16>,
    %c7_i32 = arith.constant 7 : i32
    %c16_i32_127 = arith.constant 16 : i32
    %328 = arith.muli %c7_i32, %c16_i32_127 : i32
    %c0_i32_128 = arith.constant 0 : i32
    %329 = arith.addi %c0_i32_128, %328 : i32
    %330 = tpu.assume_multiple %329, 16 : i32
    %331 = arith.index_cast %330 : i32 to index
    %c0_129 = arith.constant 0 : index
    %332 = vector.load %arg13[%331, %c0_129] : memref<128x512xf32, #tpu.memory_space<vmem>>, vector<16x512xf32>
    %333 = arith.truncf %321 : vector<16x128xf32> to vector<16x128xbf16>
    %cst_130 = arith.constant dense<0.000000e+00> : vector<16x512xf32>
    %334 = tpu.matmul %333, %1, %cst_130 {dimension_numbers = #tpu.dot_dimension_numbers<[1], [0], [0], [1], [0, 0, 1, 1], [], []>} : vector<16x128xbf16>, vector<128x512xbf16>, vector<16x512xf32> -> vector<16x512xf32>
    %335 = arith.addf %332, %334 : vector<16x512xf32>
    %336 = vector.extract_strided_slice %335 {offsets = [0, 0], sizes = [16, 128], strides = [1, 1]} : vector<16x512xf32> to vector<16x128xf32>
    %cst_131 = arith.constant 5.000000e-01 : f32
    %337 = vector.broadcast %cst_131 : f32 to vector<16x128xf32>
    %338 = arith.mulf %337, %336 : vector<16x128xf32>
    %339 = math.tanh %338 : vector<16x128xf32>
    %cst_132 = arith.constant 1.000000e+00 : f32
    %340 = vector.broadcast %cst_132 : f32 to vector<16x128xf32>
    %341 = arith.addf %339, %340 : vector<16x128xf32>
    %cst_133 = arith.constant 5.000000e-01 : f32
    %342 = vector.broadcast %cst_133 : f32 to vector<16x128xf32>
    %343 = arith.mulf %342, %341 : vector<16x128xf32>
    %344 = vector.extract_strided_slice %335 {offsets = [0, 128], sizes = [16, 128], strides = [1, 1]} : vector<16x512xf32> to vector<16x128xf32>
    %cst_134 = arith.constant 5.000000e-01 : f32
    %345 = vector.broadcast %cst_134 : f32 to vector<16x128xf32>
    %346 = arith.mulf %345, %344 : vector<16x128xf32>
    %347 = math.tanh %346 : vector<16x128xf32>
    %cst_135 = arith.constant 1.000000e+00 : f32
    %348 = vector.broadcast %cst_135 : f32 to vector<16x128xf32>
    %349 = arith.addf %347, %348 : vector<16x128xf32>
    %cst_136 = arith.constant 5.000000e-01 : f32
    %350 = vector.broadcast %cst_136 : f32 to vector<16x128xf32>
    %351 = arith.mulf %350, %349 : vector<16x128xf32>
    %352 = vector.extract_strided_slice %335 {offsets = [0, 256], sizes = [16, 128], strides = [1, 1]} : vector<16x512xf32> to vector<16x128xf32>
    %353 = math.tanh %352 : vector<16x128xf32>
    %354 = vector.extract_strided_slice %335 {offsets = [0, 384], sizes = [16, 128], strides = [1, 1]} : vector<16x512xf32> to vector<16x128xf32>
    %cst_137 = arith.constant 5.000000e-01 : f32
    %355 = vector.broadcast %cst_137 : f32 to vector<16x128xf32>
    %356 = arith.mulf %355, %354 : vector<16x128xf32>
    %357 = math.tanh %356 : vector<16x128xf32>
    %cst_138 = arith.constant 1.000000e+00 : f32
    %358 = vector.broadcast %cst_138 : f32 to vector<16x128xf32>
    %359 = arith.addf %357, %358 : vector<16x128xf32>
    %cst_139 = arith.constant 5.000000e-01 : f32
    %360 = vector.broadcast %cst_139 : f32 to vector<16x128xf32>
    %361 = arith.mulf %360, %359 : vector<16x128xf32>
    %362 = arith.mulf %351, %319 : vector<16x128xf32>
    %363 = arith.mulf %343, %353 : vector<16x128xf32>
    %364 = arith.addf %362, %363 : vector<16x128xf32>
    %365 = math.tanh %364 : vector<16x128xf32>
    %366 = arith.mulf %361, %365 : vector<16x128xf32>
    %367 = arith.truncf %366 : vector<16x128xf32> to vector<16x128xbf16>
    %c0_i32_140 = arith.constant 0 : i32
    %368 = arith.addi %c0_i32_140, %c7_i32 : i32
    %369 = arith.index_cast %368 : i32 to index
    %c0_141 = arith.constant 0 : index
    %c0_142 = arith.constant 0 : index
    %370 = vector.load %arg10[%369, %c0_141, %c0_142] : memref<8x16x128xbf16, #tpu.memory_space<vmem>>, vector<1x16x128xbf16>
    %371 = vector.shape_cast %370 : vector<1x16x128xbf16> to vector<16x128xbf16>
    %372 = vector.shape_cast %367 : vector<16x128xbf16> to vector<1x16x128xbf16>
    tpu.vector_store %arg10[%369, %c0_141, %c0_142], %372 {strides = array<i32>} : memref<8x16x128xbf16, #tpu.memory_space<vmem>>, vector<1x16x128xbf16>,
    %c8_i32 = arith.constant 8 : i32
    %c0_143 = arith.constant 0 : index
    %c0_144 = arith.constant 0 : index
    %c0_145 = arith.constant 0 : index
    %373 = vector.load %arg11[%c0_143, %c0_144, %c0_145] : memref<2x16x128xf32, #tpu.memory_space<vmem>>, vector<1x16x128xf32>
    %374 = vector.shape_cast %373 : vector<1x16x128xf32> to vector<16x128xf32>
    %375 = vector.shape_cast %366 : vector<16x128xf32> to vector<1x16x128xf32>
    tpu.vector_store %arg11[%c0_143, %c0_144, %c0_145], %375 {strides = array<i32>} : memref<2x16x128xf32, #tpu.memory_space<vmem>>, vector<1x16x128xf32>,
    %c0_146 = arith.constant 0 : index
    %c0_147 = arith.constant 0 : index
    %c0_148 = arith.constant 0 : index
    %376 = vector.load %arg12[%c0_146, %c0_147, %c0_148] : memref<2x16x128xf32, #tpu.memory_space<vmem>>, vector<1x16x128xf32>
    %377 = vector.shape_cast %376 : vector<1x16x128xf32> to vector<16x128xf32>
    %378 = vector.shape_cast %364 : vector<16x128xf32> to vector<1x16x128xf32>
    tpu.vector_store %arg12[%c0_146, %c0_147, %c0_148], %378 {strides = array<i32>} : memref<2x16x128xf32, #tpu.memory_space<vmem>>, vector<1x16x128xf32>,
    %c0_149 = arith.constant 0 : index
    %c0_150 = arith.constant 0 : index
    %379 = vector.load %arg5[%c0_149, %c0_150] : memref<128x512xbf16, #tpu.memory_space<vmem>>, vector<128x512xbf16>
    %c0_151 = arith.constant 0 : index
    %c0_152 = arith.constant 0 : index
    %380 = vector.load %arg7[%c0_151, %c0_152] : memref<128x512xbf16, #tpu.memory_space<vmem>>, vector<128x512xbf16>
    %c0_153 = arith.constant 0 : index
    %c0_154 = arith.constant 0 : index
    %381 = vector.load %arg9[%c0_153, %c0_154] : memref<1x512xf32, #tpu.memory_space<vmem>>, vector<1x512xf32>
    %c0_155 = arith.constant 0 : index
    %c0_156 = arith.constant 0 : index
    %c0_157 = arith.constant 0 : index
    %382 = vector.load %arg10[%c0_155, %c0_156, %c0_157] : memref<8x16x128xbf16, #tpu.memory_space<vmem>>, vector<8x16x128xbf16>
    %383 = vector.shape_cast %382 : vector<8x16x128xbf16> to vector<128x128xbf16>
    %cst_158 = arith.constant dense<0.000000e+00> : vector<128x512xf32>
    %384 = tpu.matmul %383, %379, %cst_158 {dimension_numbers = #tpu.dot_dimension_numbers<[1], [0], [0], [1], [0, 0, 1, 1], [], []>} : vector<128x128xbf16>, vector<128x512xbf16>, vector<128x512xf32> -> vector<128x512xf32>
    %385 = vector.broadcast %381 : vector<1x512xf32> to vector<128x512xf32>
    %386 = arith.addf %384, %385 : vector<128x512xf32>
    %c0_159 = arith.constant 0 : index
    %c0_160 = arith.constant 0 : index
    %387 = vector.load %arg13[%c0_159, %c0_160] : memref<128x512xf32, #tpu.memory_space<vmem>>, vector<128x512xf32>
    tpu.vector_store %arg13[%c0_159, %c0_160], %386 {strides = array<i32>} : memref<128x512xf32, #tpu.memory_space<vmem>>, vector<128x512xf32>,
    %c1 = arith.constant 1 : index
    %c0_161 = arith.constant 0 : index
    %c0_162 = arith.constant 0 : index
    %388 = vector.load %arg2[%c1, %c0_161, %c0_162] : memref<2x16x128xf32, #tpu.memory_space<vmem>>, vector<1x16x128xf32>
    %389 = vector.shape_cast %388 : vector<1x16x128xf32> to vector<16x128xf32>
    %c1_163 = arith.constant 1 : index
    %c0_164 = arith.constant 0 : index
    %c0_165 = arith.constant 0 : index
    %390 = vector.load %arg3[%c1_163, %c0_164, %c0_165] : memref<2x16x128xf32, #tpu.memory_space<vmem>>, vector<1x16x128xf32>
    %391 = vector.shape_cast %390 : vector<1x16x128xf32> to vector<16x128xf32>
    %c0_i32_166 = arith.constant 0 : i32
    %c16_i32_167 = arith.constant 16 : i32
    %392 = arith.muli %c0_i32_166, %c16_i32_167 : i32
    %c0_i32_168 = arith.constant 0 : i32
    %393 = arith.addi %c0_i32_168, %392 : i32
    %394 = tpu.assume_multiple %393, 16 : i32
    %395 = arith.index_cast %394 : i32 to index
    %c0_169 = arith.constant 0 : index
    %396 = vector.load %arg13[%395, %c0_169] : memref<128x512xf32, #tpu.memory_space<vmem>>, vector<16x512xf32>
    %397 = arith.truncf %389 : vector<16x128xf32> to vector<16x128xbf16>
    %cst_170 = arith.constant dense<0.000000e+00> : vector<16x512xf32>
    %398 = tpu.matmul %397, %380, %cst_170 {dimension_numbers = #tpu.dot_dimension_numbers<[1], [0], [0], [1], [0, 0, 1, 1], [], []>} : vector<16x128xbf16>, vector<128x512xbf16>, vector<16x512xf32> -> vector<16x512xf32>
    %399 = arith.addf %396, %398 : vector<16x512xf32>
    %400 = vector.extract_strided_slice %399 {offsets = [0, 0], sizes = [16, 128], strides = [1, 1]} : vector<16x512xf32> to vector<16x128xf32>
    %cst_171 = arith.constant 5.000000e-01 : f32
    %401 = vector.broadcast %cst_171 : f32 to vector<16x128xf32>
    %402 = arith.mulf %401, %400 : vector<16x128xf32>
    %403 = math.tanh %402 : vector<16x128xf32>
    %cst_172 = arith.constant 1.000000e+00 : f32
    %404 = vector.broadcast %cst_172 : f32 to vector<16x128xf32>
    %405 = arith.addf %403, %404 : vector<16x128xf32>
    %cst_173 = arith.constant 5.000000e-01 : f32
    %406 = vector.broadcast %cst_173 : f32 to vector<16x128xf32>
    %407 = arith.mulf %406, %405 : vector<16x128xf32>
    %408 = vector.extract_strided_slice %399 {offsets = [0, 128], sizes = [16, 128], strides = [1, 1]} : vector<16x512xf32> to vector<16x128xf32>
    %cst_174 = arith.constant 5.000000e-01 : f32
    %409 = vector.broadcast %cst_174 : f32 to vector<16x128xf32>
    %410 = arith.mulf %409, %408 : vector<16x128xf32>
    %411 = math.tanh %410 : vector<16x128xf32>
    %cst_175 = arith.constant 1.000000e+00 : f32
    %412 = vector.broadcast %cst_175 : f32 to vector<16x128xf32>
    %413 = arith.addf %411, %412 : vector<16x128xf32>
    %cst_176 = arith.constant 5.000000e-01 : f32
    %414 = vector.broadcast %cst_176 : f32 to vector<16x128xf32>
    %415 = arith.mulf %414, %413 : vector<16x128xf32>
    %416 = vector.extract_strided_slice %399 {offsets = [0, 256], sizes = [16, 128], strides = [1, 1]} : vector<16x512xf32> to vector<16x128xf32>
    %417 = math.tanh %416 : vector<16x128xf32>
    %418 = vector.extract_strided_slice %399 {offsets = [0, 384], sizes = [16, 128], strides = [1, 1]} : vector<16x512xf32> to vector<16x128xf32>
    %cst_177 = arith.constant 5.000000e-01 : f32
    %419 = vector.broadcast %cst_177 : f32 to vector<16x128xf32>
    %420 = arith.mulf %419, %418 : vector<16x128xf32>
    %421 = math.tanh %420 : vector<16x128xf32>
    %cst_178 = arith.constant 1.000000e+00 : f32
    %422 = vector.broadcast %cst_178 : f32 to vector<16x128xf32>
    %423 = arith.addf %421, %422 : vector<16x128xf32>
    %cst_179 = arith.constant 5.000000e-01 : f32
    %424 = vector.broadcast %cst_179 : f32 to vector<16x128xf32>
    %425 = arith.mulf %424, %423 : vector<16x128xf32>
    %426 = arith.mulf %415, %391 : vector<16x128xf32>
    %427 = arith.mulf %407, %417 : vector<16x128xf32>
    %428 = arith.addf %426, %427 : vector<16x128xf32>
    %429 = math.tanh %428 : vector<16x128xf32>
    %430 = arith.mulf %425, %429 : vector<16x128xf32>
    %431 = arith.truncf %430 : vector<16x128xf32> to vector<16x128xbf16>
    %c0_i32_180 = arith.constant 0 : i32
    %432 = arith.addi %c0_i32_180, %c0_i32_166 : i32
    %433 = arith.index_cast %432 : i32 to index
    %c0_181 = arith.constant 0 : index
    %c0_182 = arith.constant 0 : index
    %434 = vector.load %arg10[%433, %c0_181, %c0_182] : memref<8x16x128xbf16, #tpu.memory_space<vmem>>, vector<1x16x128xbf16>
    %435 = vector.shape_cast %434 : vector<1x16x128xbf16> to vector<16x128xbf16>
    %436 = vector.shape_cast %431 : vector<16x128xbf16> to vector<1x16x128xbf16>
    tpu.vector_store %arg10[%433, %c0_181, %c0_182], %436 {strides = array<i32>} : memref<8x16x128xbf16, #tpu.memory_space<vmem>>, vector<1x16x128xbf16>,
    %c1_i32_183 = arith.constant 1 : i32
    %c16_i32_184 = arith.constant 16 : i32
    %437 = arith.muli %c1_i32_183, %c16_i32_184 : i32
    %c0_i32_185 = arith.constant 0 : i32
    %438 = arith.addi %c0_i32_185, %437 : i32
    %439 = tpu.assume_multiple %438, 16 : i32
    %440 = arith.index_cast %439 : i32 to index
    %c0_186 = arith.constant 0 : index
    %441 = vector.load %arg13[%440, %c0_186] : memref<128x512xf32, #tpu.memory_space<vmem>>, vector<16x512xf32>
    %442 = arith.truncf %430 : vector<16x128xf32> to vector<16x128xbf16>
    %cst_187 = arith.constant dense<0.000000e+00> : vector<16x512xf32>
    %443 = tpu.matmul %442, %380, %cst_187 {dimension_numbers = #tpu.dot_dimension_numbers<[1], [0], [0], [1], [0, 0, 1, 1], [], []>} : vector<16x128xbf16>, vector<128x512xbf16>, vector<16x512xf32> -> vector<16x512xf32>
    %444 = arith.addf %441, %443 : vector<16x512xf32>
    %445 = vector.extract_strided_slice %444 {offsets = [0, 0], sizes = [16, 128], strides = [1, 1]} : vector<16x512xf32> to vector<16x128xf32>
    %cst_188 = arith.constant 5.000000e-01 : f32
    %446 = vector.broadcast %cst_188 : f32 to vector<16x128xf32>
    %447 = arith.mulf %446, %445 : vector<16x128xf32>
    %448 = math.tanh %447 : vector<16x128xf32>
    %cst_189 = arith.constant 1.000000e+00 : f32
    %449 = vector.broadcast %cst_189 : f32 to vector<16x128xf32>
    %450 = arith.addf %448, %449 : vector<16x128xf32>
    %cst_190 = arith.constant 5.000000e-01 : f32
    %451 = vector.broadcast %cst_190 : f32 to vector<16x128xf32>
    %452 = arith.mulf %451, %450 : vector<16x128xf32>
    %453 = vector.extract_strided_slice %444 {offsets = [0, 128], sizes = [16, 128], strides = [1, 1]} : vector<16x512xf32> to vector<16x128xf32>
    %cst_191 = arith.constant 5.000000e-01 : f32
    %454 = vector.broadcast %cst_191 : f32 to vector<16x128xf32>
    %455 = arith.mulf %454, %453 : vector<16x128xf32>
    %456 = math.tanh %455 : vector<16x128xf32>
    %cst_192 = arith.constant 1.000000e+00 : f32
    %457 = vector.broadcast %cst_192 : f32 to vector<16x128xf32>
    %458 = arith.addf %456, %457 : vector<16x128xf32>
    %cst_193 = arith.constant 5.000000e-01 : f32
    %459 = vector.broadcast %cst_193 : f32 to vector<16x128xf32>
    %460 = arith.mulf %459, %458 : vector<16x128xf32>
    %461 = vector.extract_strided_slice %444 {offsets = [0, 256], sizes = [16, 128], strides = [1, 1]} : vector<16x512xf32> to vector<16x128xf32>
    %462 = math.tanh %461 : vector<16x128xf32>
    %463 = vector.extract_strided_slice %444 {offsets = [0, 384], sizes = [16, 128], strides = [1, 1]} : vector<16x512xf32> to vector<16x128xf32>
    %cst_194 = arith.constant 5.000000e-01 : f32
    %464 = vector.broadcast %cst_194 : f32 to vector<16x128xf32>
    %465 = arith.mulf %464, %463 : vector<16x128xf32>
    %466 = math.tanh %465 : vector<16x128xf32>
    %cst_195 = arith.constant 1.000000e+00 : f32
    %467 = vector.broadcast %cst_195 : f32 to vector<16x128xf32>
    %468 = arith.addf %466, %467 : vector<16x128xf32>
    %cst_196 = arith.constant 5.000000e-01 : f32
    %469 = vector.broadcast %cst_196 : f32 to vector<16x128xf32>
    %470 = arith.mulf %469, %468 : vector<16x128xf32>
    %471 = arith.mulf %460, %428 : vector<16x128xf32>
    %472 = arith.mulf %452, %462 : vector<16x128xf32>
    %473 = arith.addf %471, %472 : vector<16x128xf32>
    %474 = math.tanh %473 : vector<16x128xf32>
    %475 = arith.mulf %470, %474 : vector<16x128xf32>
    %476 = arith.truncf %475 : vector<16x128xf32> to vector<16x128xbf16>
    %c0_i32_197 = arith.constant 0 : i32
    %477 = arith.addi %c0_i32_197, %c1_i32_183 : i32
    %478 = arith.index_cast %477 : i32 to index
    %c0_198 = arith.constant 0 : index
    %c0_199 = arith.constant 0 : index
    %479 = vector.load %arg10[%478, %c0_198, %c0_199] : memref<8x16x128xbf16, #tpu.memory_space<vmem>>, vector<1x16x128xbf16>
    %480 = vector.shape_cast %479 : vector<1x16x128xbf16> to vector<16x128xbf16>
    %481 = vector.shape_cast %476 : vector<16x128xbf16> to vector<1x16x128xbf16>
    tpu.vector_store %arg10[%478, %c0_198, %c0_199], %481 {strides = array<i32>} : memref<8x16x128xbf16, #tpu.memory_space<vmem>>, vector<1x16x128xbf16>,
    %c2_i32_200 = arith.constant 2 : i32
    %c16_i32_201 = arith.constant 16 : i32
    %482 = arith.muli %c2_i32_200, %c16_i32_201 : i32
    %c0_i32_202 = arith.constant 0 : i32
    %483 = arith.addi %c0_i32_202, %482 : i32
    %484 = tpu.assume_multiple %483, 16 : i32
    %485 = arith.index_cast %484 : i32 to index
    %c0_203 = arith.constant 0 : index
    %486 = vector.load %arg13[%485, %c0_203] : memref<128x512xf32, #tpu.memory_space<vmem>>, vector<16x512xf32>
    %487 = arith.truncf %475 : vector<16x128xf32> to vector<16x128xbf16>
    %cst_204 = arith.constant dense<0.000000e+00> : vector<16x512xf32>
    %488 = tpu.matmul %487, %380, %cst_204 {dimension_numbers = #tpu.dot_dimension_numbers<[1], [0], [0], [1], [0, 0, 1, 1], [], []>} : vector<16x128xbf16>, vector<128x512xbf16>, vector<16x512xf32> -> vector<16x512xf32>
    %489 = arith.addf %486, %488 : vector<16x512xf32>
    %490 = vector.extract_strided_slice %489 {offsets = [0, 0], sizes = [16, 128], strides = [1, 1]} : vector<16x512xf32> to vector<16x128xf32>
    %cst_205 = arith.constant 5.000000e-01 : f32
    %491 = vector.broadcast %cst_205 : f32 to vector<16x128xf32>
    %492 = arith.mulf %491, %490 : vector<16x128xf32>
    %493 = math.tanh %492 : vector<16x128xf32>
    %cst_206 = arith.constant 1.000000e+00 : f32
    %494 = vector.broadcast %cst_206 : f32 to vector<16x128xf32>
    %495 = arith.addf %493, %494 : vector<16x128xf32>
    %cst_207 = arith.constant 5.000000e-01 : f32
    %496 = vector.broadcast %cst_207 : f32 to vector<16x128xf32>
    %497 = arith.mulf %496, %495 : vector<16x128xf32>
    %498 = vector.extract_strided_slice %489 {offsets = [0, 128], sizes = [16, 128], strides = [1, 1]} : vector<16x512xf32> to vector<16x128xf32>
    %cst_208 = arith.constant 5.000000e-01 : f32
    %499 = vector.broadcast %cst_208 : f32 to vector<16x128xf32>
    %500 = arith.mulf %499, %498 : vector<16x128xf32>
    %501 = math.tanh %500 : vector<16x128xf32>
    %cst_209 = arith.constant 1.000000e+00 : f32
    %502 = vector.broadcast %cst_209 : f32 to vector<16x128xf32>
    %503 = arith.addf %501, %502 : vector<16x128xf32>
    %cst_210 = arith.constant 5.000000e-01 : f32
    %504 = vector.broadcast %cst_210 : f32 to vector<16x128xf32>
    %505 = arith.mulf %504, %503 : vector<16x128xf32>
    %506 = vector.extract_strided_slice %489 {offsets = [0, 256], sizes = [16, 128], strides = [1, 1]} : vector<16x512xf32> to vector<16x128xf32>
    %507 = math.tanh %506 : vector<16x128xf32>
    %508 = vector.extract_strided_slice %489 {offsets = [0, 384], sizes = [16, 128], strides = [1, 1]} : vector<16x512xf32> to vector<16x128xf32>
    %cst_211 = arith.constant 5.000000e-01 : f32
    %509 = vector.broadcast %cst_211 : f32 to vector<16x128xf32>
    %510 = arith.mulf %509, %508 : vector<16x128xf32>
    %511 = math.tanh %510 : vector<16x128xf32>
    %cst_212 = arith.constant 1.000000e+00 : f32
    %512 = vector.broadcast %cst_212 : f32 to vector<16x128xf32>
    %513 = arith.addf %511, %512 : vector<16x128xf32>
    %cst_213 = arith.constant 5.000000e-01 : f32
    %514 = vector.broadcast %cst_213 : f32 to vector<16x128xf32>
    %515 = arith.mulf %514, %513 : vector<16x128xf32>
    %516 = arith.mulf %505, %473 : vector<16x128xf32>
    %517 = arith.mulf %497, %507 : vector<16x128xf32>
    %518 = arith.addf %516, %517 : vector<16x128xf32>
    %519 = math.tanh %518 : vector<16x128xf32>
    %520 = arith.mulf %515, %519 : vector<16x128xf32>
    %521 = arith.truncf %520 : vector<16x128xf32> to vector<16x128xbf16>
    %c0_i32_214 = arith.constant 0 : i32
    %522 = arith.addi %c0_i32_214, %c2_i32_200 : i32
    %523 = arith.index_cast %522 : i32 to index
    %c0_215 = arith.constant 0 : index
    %c0_216 = arith.constant 0 : index
    %524 = vector.load %arg10[%523, %c0_215, %c0_216] : memref<8x16x128xbf16, #tpu.memory_space<vmem>>, vector<1x16x128xbf16>
    %525 = vector.shape_cast %524 : vector<1x16x128xbf16> to vector<16x128xbf16>
    %526 = vector.shape_cast %521 : vector<16x128xbf16> to vector<1x16x128xbf16>
    tpu.vector_store %arg10[%523, %c0_215, %c0_216], %526 {strides = array<i32>} : memref<8x16x128xbf16, #tpu.memory_space<vmem>>, vector<1x16x128xbf16>,
    %c3_i32_217 = arith.constant 3 : i32
    %c16_i32_218 = arith.constant 16 : i32
    %527 = arith.muli %c3_i32_217, %c16_i32_218 : i32
    %c0_i32_219 = arith.constant 0 : i32
    %528 = arith.addi %c0_i32_219, %527 : i32
    %529 = tpu.assume_multiple %528, 16 : i32
    %530 = arith.index_cast %529 : i32 to index
    %c0_220 = arith.constant 0 : index
    %531 = vector.load %arg13[%530, %c0_220] : memref<128x512xf32, #tpu.memory_space<vmem>>, vector<16x512xf32>
    %532 = arith.truncf %520 : vector<16x128xf32> to vector<16x128xbf16>
    %cst_221 = arith.constant dense<0.000000e+00> : vector<16x512xf32>
    %533 = tpu.matmul %532, %380, %cst_221 {dimension_numbers = #tpu.dot_dimension_numbers<[1], [0], [0], [1], [0, 0, 1, 1], [], []>} : vector<16x128xbf16>, vector<128x512xbf16>, vector<16x512xf32> -> vector<16x512xf32>
    %534 = arith.addf %531, %533 : vector<16x512xf32>
    %535 = vector.extract_strided_slice %534 {offsets = [0, 0], sizes = [16, 128], strides = [1, 1]} : vector<16x512xf32> to vector<16x128xf32>
    %cst_222 = arith.constant 5.000000e-01 : f32
    %536 = vector.broadcast %cst_222 : f32 to vector<16x128xf32>
    %537 = arith.mulf %536, %535 : vector<16x128xf32>
    %538 = math.tanh %537 : vector<16x128xf32>
    %cst_223 = arith.constant 1.000000e+00 : f32
    %539 = vector.broadcast %cst_223 : f32 to vector<16x128xf32>
    %540 = arith.addf %538, %539 : vector<16x128xf32>
    %cst_224 = arith.constant 5.000000e-01 : f32
    %541 = vector.broadcast %cst_224 : f32 to vector<16x128xf32>
    %542 = arith.mulf %541, %540 : vector<16x128xf32>
    %543 = vector.extract_strided_slice %534 {offsets = [0, 128], sizes = [16, 128], strides = [1, 1]} : vector<16x512xf32> to vector<16x128xf32>
    %cst_225 = arith.constant 5.000000e-01 : f32
    %544 = vector.broadcast %cst_225 : f32 to vector<16x128xf32>
    %545 = arith.mulf %544, %543 : vector<16x128xf32>
    %546 = math.tanh %545 : vector<16x128xf32>
    %cst_226 = arith.constant 1.000000e+00 : f32
    %547 = vector.broadcast %cst_226 : f32 to vector<16x128xf32>
    %548 = arith.addf %546, %547 : vector<16x128xf32>
    %cst_227 = arith.constant 5.000000e-01 : f32
    %549 = vector.broadcast %cst_227 : f32 to vector<16x128xf32>
    %550 = arith.mulf %549, %548 : vector<16x128xf32>
    %551 = vector.extract_strided_slice %534 {offsets = [0, 256], sizes = [16, 128], strides = [1, 1]} : vector<16x512xf32> to vector<16x128xf32>
    %552 = math.tanh %551 : vector<16x128xf32>
    %553 = vector.extract_strided_slice %534 {offsets = [0, 384], sizes = [16, 128], strides = [1, 1]} : vector<16x512xf32> to vector<16x128xf32>
    %cst_228 = arith.constant 5.000000e-01 : f32
    %554 = vector.broadcast %cst_228 : f32 to vector<16x128xf32>
    %555 = arith.mulf %554, %553 : vector<16x128xf32>
    %556 = math.tanh %555 : vector<16x128xf32>
    %cst_229 = arith.constant 1.000000e+00 : f32
    %557 = vector.broadcast %cst_229 : f32 to vector<16x128xf32>
    %558 = arith.addf %556, %557 : vector<16x128xf32>
    %cst_230 = arith.constant 5.000000e-01 : f32
    %559 = vector.broadcast %cst_230 : f32 to vector<16x128xf32>
    %560 = arith.mulf %559, %558 : vector<16x128xf32>
    %561 = arith.mulf %550, %518 : vector<16x128xf32>
    %562 = arith.mulf %542, %552 : vector<16x128xf32>
    %563 = arith.addf %561, %562 : vector<16x128xf32>
    %564 = math.tanh %563 : vector<16x128xf32>
    %565 = arith.mulf %560, %564 : vector<16x128xf32>
    %566 = arith.truncf %565 : vector<16x128xf32> to vector<16x128xbf16>
    %c0_i32_231 = arith.constant 0 : i32
    %567 = arith.addi %c0_i32_231, %c3_i32_217 : i32
    %568 = arith.index_cast %567 : i32 to index
    %c0_232 = arith.constant 0 : index
    %c0_233 = arith.constant 0 : index
    %569 = vector.load %arg10[%568, %c0_232, %c0_233] : memref<8x16x128xbf16, #tpu.memory_space<vmem>>, vector<1x16x128xbf16>
    %570 = vector.shape_cast %569 : vector<1x16x128xbf16> to vector<16x128xbf16>
    %571 = vector.shape_cast %566 : vector<16x128xbf16> to vector<1x16x128xbf16>
    tpu.vector_store %arg10[%568, %c0_232, %c0_233], %571 {strides = array<i32>} : memref<8x16x128xbf16, #tpu.memory_space<vmem>>, vector<1x16x128xbf16>,
    %c4_i32_234 = arith.constant 4 : i32
    %c16_i32_235 = arith.constant 16 : i32
    %572 = arith.muli %c4_i32_234, %c16_i32_235 : i32
    %c0_i32_236 = arith.constant 0 : i32
    %573 = arith.addi %c0_i32_236, %572 : i32
    %574 = tpu.assume_multiple %573, 16 : i32
    %575 = arith.index_cast %574 : i32 to index
    %c0_237 = arith.constant 0 : index
    %576 = vector.load %arg13[%575, %c0_237] : memref<128x512xf32, #tpu.memory_space<vmem>>, vector<16x512xf32>
    %577 = arith.truncf %565 : vector<16x128xf32> to vector<16x128xbf16>
    %cst_238 = arith.constant dense<0.000000e+00> : vector<16x512xf32>
    %578 = tpu.matmul %577, %380, %cst_238 {dimension_numbers = #tpu.dot_dimension_numbers<[1], [0], [0], [1], [0, 0, 1, 1], [], []>} : vector<16x128xbf16>, vector<128x512xbf16>, vector<16x512xf32> -> vector<16x512xf32>
    %579 = arith.addf %576, %578 : vector<16x512xf32>
    %580 = vector.extract_strided_slice %579 {offsets = [0, 0], sizes = [16, 128], strides = [1, 1]} : vector<16x512xf32> to vector<16x128xf32>
    %cst_239 = arith.constant 5.000000e-01 : f32
    %581 = vector.broadcast %cst_239 : f32 to vector<16x128xf32>
    %582 = arith.mulf %581, %580 : vector<16x128xf32>
    %583 = math.tanh %582 : vector<16x128xf32>
    %cst_240 = arith.constant 1.000000e+00 : f32
    %584 = vector.broadcast %cst_240 : f32 to vector<16x128xf32>
    %585 = arith.addf %583, %584 : vector<16x128xf32>
    %cst_241 = arith.constant 5.000000e-01 : f32
    %586 = vector.broadcast %cst_241 : f32 to vector<16x128xf32>
    %587 = arith.mulf %586, %585 : vector<16x128xf32>
    %588 = vector.extract_strided_slice %579 {offsets = [0, 128], sizes = [16, 128], strides = [1, 1]} : vector<16x512xf32> to vector<16x128xf32>
    %cst_242 = arith.constant 5.000000e-01 : f32
    %589 = vector.broadcast %cst_242 : f32 to vector<16x128xf32>
    %590 = arith.mulf %589, %588 : vector<16x128xf32>
    %591 = math.tanh %590 : vector<16x128xf32>
    %cst_243 = arith.constant 1.000000e+00 : f32
    %592 = vector.broadcast %cst_243 : f32 to vector<16x128xf32>
    %593 = arith.addf %591, %592 : vector<16x128xf32>
    %cst_244 = arith.constant 5.000000e-01 : f32
    %594 = vector.broadcast %cst_244 : f32 to vector<16x128xf32>
    %595 = arith.mulf %594, %593 : vector<16x128xf32>
    %596 = vector.extract_strided_slice %579 {offsets = [0, 256], sizes = [16, 128], strides = [1, 1]} : vector<16x512xf32> to vector<16x128xf32>
    %597 = math.tanh %596 : vector<16x128xf32>
    %598 = vector.extract_strided_slice %579 {offsets = [0, 384], sizes = [16, 128], strides = [1, 1]} : vector<16x512xf32> to vector<16x128xf32>
    %cst_245 = arith.constant 5.000000e-01 : f32
    %599 = vector.broadcast %cst_245 : f32 to vector<16x128xf32>
    %600 = arith.mulf %599, %598 : vector<16x128xf32>
    %601 = math.tanh %600 : vector<16x128xf32>
    %cst_246 = arith.constant 1.000000e+00 : f32
    %602 = vector.broadcast %cst_246 : f32 to vector<16x128xf32>
    %603 = arith.addf %601, %602 : vector<16x128xf32>
    %cst_247 = arith.constant 5.000000e-01 : f32
    %604 = vector.broadcast %cst_247 : f32 to vector<16x128xf32>
    %605 = arith.mulf %604, %603 : vector<16x128xf32>
    %606 = arith.mulf %595, %563 : vector<16x128xf32>
    %607 = arith.mulf %587, %597 : vector<16x128xf32>
    %608 = arith.addf %606, %607 : vector<16x128xf32>
    %609 = math.tanh %608 : vector<16x128xf32>
    %610 = arith.mulf %605, %609 : vector<16x128xf32>
    %611 = arith.truncf %610 : vector<16x128xf32> to vector<16x128xbf16>
    %c0_i32_248 = arith.constant 0 : i32
    %612 = arith.addi %c0_i32_248, %c4_i32_234 : i32
    %613 = arith.index_cast %612 : i32 to index
    %c0_249 = arith.constant 0 : index
    %c0_250 = arith.constant 0 : index
    %614 = vector.load %arg10[%613, %c0_249, %c0_250] : memref<8x16x128xbf16, #tpu.memory_space<vmem>>, vector<1x16x128xbf16>
    %615 = vector.shape_cast %614 : vector<1x16x128xbf16> to vector<16x128xbf16>
    %616 = vector.shape_cast %611 : vector<16x128xbf16> to vector<1x16x128xbf16>
    tpu.vector_store %arg10[%613, %c0_249, %c0_250], %616 {strides = array<i32>} : memref<8x16x128xbf16, #tpu.memory_space<vmem>>, vector<1x16x128xbf16>,
    %c5_i32_251 = arith.constant 5 : i32
    %c16_i32_252 = arith.constant 16 : i32
    %617 = arith.muli %c5_i32_251, %c16_i32_252 : i32
    %c0_i32_253 = arith.constant 0 : i32
    %618 = arith.addi %c0_i32_253, %617 : i32
    %619 = tpu.assume_multiple %618, 16 : i32
    %620 = arith.index_cast %619 : i32 to index
    %c0_254 = arith.constant 0 : index
    %621 = vector.load %arg13[%620, %c0_254] : memref<128x512xf32, #tpu.memory_space<vmem>>, vector<16x512xf32>
    %622 = arith.truncf %610 : vector<16x128xf32> to vector<16x128xbf16>
    %cst_255 = arith.constant dense<0.000000e+00> : vector<16x512xf32>
    %623 = tpu.matmul %622, %380, %cst_255 {dimension_numbers = #tpu.dot_dimension_numbers<[1], [0], [0], [1], [0, 0, 1, 1], [], []>} : vector<16x128xbf16>, vector<128x512xbf16>, vector<16x512xf32> -> vector<16x512xf32>
    %624 = arith.addf %621, %623 : vector<16x512xf32>
    %625 = vector.extract_strided_slice %624 {offsets = [0, 0], sizes = [16, 128], strides = [1, 1]} : vector<16x512xf32> to vector<16x128xf32>
    %cst_256 = arith.constant 5.000000e-01 : f32
    %626 = vector.broadcast %cst_256 : f32 to vector<16x128xf32>
    %627 = arith.mulf %626, %625 : vector<16x128xf32>
    %628 = math.tanh %627 : vector<16x128xf32>
    %cst_257 = arith.constant 1.000000e+00 : f32
    %629 = vector.broadcast %cst_257 : f32 to vector<16x128xf32>
    %630 = arith.addf %628, %629 : vector<16x128xf32>
    %cst_258 = arith.constant 5.000000e-01 : f32
    %631 = vector.broadcast %cst_258 : f32 to vector<16x128xf32>
    %632 = arith.mulf %631, %630 : vector<16x128xf32>
    %633 = vector.extract_strided_slice %624 {offsets = [0, 128], sizes = [16, 128], strides = [1, 1]} : vector<16x512xf32> to vector<16x128xf32>
    %cst_259 = arith.constant 5.000000e-01 : f32
    %634 = vector.broadcast %cst_259 : f32 to vector<16x128xf32>
    %635 = arith.mulf %634, %633 : vector<16x128xf32>
    %636 = math.tanh %635 : vector<16x128xf32>
    %cst_260 = arith.constant 1.000000e+00 : f32
    %637 = vector.broadcast %cst_260 : f32 to vector<16x128xf32>
    %638 = arith.addf %636, %637 : vector<16x128xf32>
    %cst_261 = arith.constant 5.000000e-01 : f32
    %639 = vector.broadcast %cst_261 : f32 to vector<16x128xf32>
    %640 = arith.mulf %639, %638 : vector<16x128xf32>
    %641 = vector.extract_strided_slice %624 {offsets = [0, 256], sizes = [16, 128], strides = [1, 1]} : vector<16x512xf32> to vector<16x128xf32>
    %642 = math.tanh %641 : vector<16x128xf32>
    %643 = vector.extract_strided_slice %624 {offsets = [0, 384], sizes = [16, 128], strides = [1, 1]} : vector<16x512xf32> to vector<16x128xf32>
    %cst_262 = arith.constant 5.000000e-01 : f32
    %644 = vector.broadcast %cst_262 : f32 to vector<16x128xf32>
    %645 = arith.mulf %644, %643 : vector<16x128xf32>
    %646 = math.tanh %645 : vector<16x128xf32>
    %cst_263 = arith.constant 1.000000e+00 : f32
    %647 = vector.broadcast %cst_263 : f32 to vector<16x128xf32>
    %648 = arith.addf %646, %647 : vector<16x128xf32>
    %cst_264 = arith.constant 5.000000e-01 : f32
    %649 = vector.broadcast %cst_264 : f32 to vector<16x128xf32>
    %650 = arith.mulf %649, %648 : vector<16x128xf32>
    %651 = arith.mulf %640, %608 : vector<16x128xf32>
    %652 = arith.mulf %632, %642 : vector<16x128xf32>
    %653 = arith.addf %651, %652 : vector<16x128xf32>
    %654 = math.tanh %653 : vector<16x128xf32>
    %655 = arith.mulf %650, %654 : vector<16x128xf32>
    %656 = arith.truncf %655 : vector<16x128xf32> to vector<16x128xbf16>
    %c0_i32_265 = arith.constant 0 : i32
    %657 = arith.addi %c0_i32_265, %c5_i32_251 : i32
    %658 = arith.index_cast %657 : i32 to index
    %c0_266 = arith.constant 0 : index
    %c0_267 = arith.constant 0 : index
    %659 = vector.load %arg10[%658, %c0_266, %c0_267] : memref<8x16x128xbf16, #tpu.memory_space<vmem>>, vector<1x16x128xbf16>
    %660 = vector.shape_cast %659 : vector<1x16x128xbf16> to vector<16x128xbf16>
    %661 = vector.shape_cast %656 : vector<16x128xbf16> to vector<1x16x128xbf16>
    tpu.vector_store %arg10[%658, %c0_266, %c0_267], %661 {strides = array<i32>} : memref<8x16x128xbf16, #tpu.memory_space<vmem>>, vector<1x16x128xbf16>,
    %c6_i32_268 = arith.constant 6 : i32
    %c16_i32_269 = arith.constant 16 : i32
    %662 = arith.muli %c6_i32_268, %c16_i32_269 : i32
    %c0_i32_270 = arith.constant 0 : i32
    %663 = arith.addi %c0_i32_270, %662 : i32
    %664 = tpu.assume_multiple %663, 16 : i32
    %665 = arith.index_cast %664 : i32 to index
    %c0_271 = arith.constant 0 : index
    %666 = vector.load %arg13[%665, %c0_271] : memref<128x512xf32, #tpu.memory_space<vmem>>, vector<16x512xf32>
    %667 = arith.truncf %655 : vector<16x128xf32> to vector<16x128xbf16>
    %cst_272 = arith.constant dense<0.000000e+00> : vector<16x512xf32>
    %668 = tpu.matmul %667, %380, %cst_272 {dimension_numbers = #tpu.dot_dimension_numbers<[1], [0], [0], [1], [0, 0, 1, 1], [], []>} : vector<16x128xbf16>, vector<128x512xbf16>, vector<16x512xf32> -> vector<16x512xf32>
    %669 = arith.addf %666, %668 : vector<16x512xf32>
    %670 = vector.extract_strided_slice %669 {offsets = [0, 0], sizes = [16, 128], strides = [1, 1]} : vector<16x512xf32> to vector<16x128xf32>
    %cst_273 = arith.constant 5.000000e-01 : f32
    %671 = vector.broadcast %cst_273 : f32 to vector<16x128xf32>
    %672 = arith.mulf %671, %670 : vector<16x128xf32>
    %673 = math.tanh %672 : vector<16x128xf32>
    %cst_274 = arith.constant 1.000000e+00 : f32
    %674 = vector.broadcast %cst_274 : f32 to vector<16x128xf32>
    %675 = arith.addf %673, %674 : vector<16x128xf32>
    %cst_275 = arith.constant 5.000000e-01 : f32
    %676 = vector.broadcast %cst_275 : f32 to vector<16x128xf32>
    %677 = arith.mulf %676, %675 : vector<16x128xf32>
    %678 = vector.extract_strided_slice %669 {offsets = [0, 128], sizes = [16, 128], strides = [1, 1]} : vector<16x512xf32> to vector<16x128xf32>
    %cst_276 = arith.constant 5.000000e-01 : f32
    %679 = vector.broadcast %cst_276 : f32 to vector<16x128xf32>
    %680 = arith.mulf %679, %678 : vector<16x128xf32>
    %681 = math.tanh %680 : vector<16x128xf32>
    %cst_277 = arith.constant 1.000000e+00 : f32
    %682 = vector.broadcast %cst_277 : f32 to vector<16x128xf32>
    %683 = arith.addf %681, %682 : vector<16x128xf32>
    %cst_278 = arith.constant 5.000000e-01 : f32
    %684 = vector.broadcast %cst_278 : f32 to vector<16x128xf32>
    %685 = arith.mulf %684, %683 : vector<16x128xf32>
    %686 = vector.extract_strided_slice %669 {offsets = [0, 256], sizes = [16, 128], strides = [1, 1]} : vector<16x512xf32> to vector<16x128xf32>
    %687 = math.tanh %686 : vector<16x128xf32>
    %688 = vector.extract_strided_slice %669 {offsets = [0, 384], sizes = [16, 128], strides = [1, 1]} : vector<16x512xf32> to vector<16x128xf32>
    %cst_279 = arith.constant 5.000000e-01 : f32
    %689 = vector.broadcast %cst_279 : f32 to vector<16x128xf32>
    %690 = arith.mulf %689, %688 : vector<16x128xf32>
    %691 = math.tanh %690 : vector<16x128xf32>
    %cst_280 = arith.constant 1.000000e+00 : f32
    %692 = vector.broadcast %cst_280 : f32 to vector<16x128xf32>
    %693 = arith.addf %691, %692 : vector<16x128xf32>
    %cst_281 = arith.constant 5.000000e-01 : f32
    %694 = vector.broadcast %cst_281 : f32 to vector<16x128xf32>
    %695 = arith.mulf %694, %693 : vector<16x128xf32>
    %696 = arith.mulf %685, %653 : vector<16x128xf32>
    %697 = arith.mulf %677, %687 : vector<16x128xf32>
    %698 = arith.addf %696, %697 : vector<16x128xf32>
    %699 = math.tanh %698 : vector<16x128xf32>
    %700 = arith.mulf %695, %699 : vector<16x128xf32>
    %701 = arith.truncf %700 : vector<16x128xf32> to vector<16x128xbf16>
    %c0_i32_282 = arith.constant 0 : i32
    %702 = arith.addi %c0_i32_282, %c6_i32_268 : i32
    %703 = arith.index_cast %702 : i32 to index
    %c0_283 = arith.constant 0 : index
    %c0_284 = arith.constant 0 : index
    %704 = vector.load %arg10[%703, %c0_283, %c0_284] : memref<8x16x128xbf16, #tpu.memory_space<vmem>>, vector<1x16x128xbf16>
    %705 = vector.shape_cast %704 : vector<1x16x128xbf16> to vector<16x128xbf16>
    %706 = vector.shape_cast %701 : vector<16x128xbf16> to vector<1x16x128xbf16>
    tpu.vector_store %arg10[%703, %c0_283, %c0_284], %706 {strides = array<i32>} : memref<8x16x128xbf16, #tpu.memory_space<vmem>>, vector<1x16x128xbf16>,
    %c7_i32_285 = arith.constant 7 : i32
    %c16_i32_286 = arith.constant 16 : i32
    %707 = arith.muli %c7_i32_285, %c16_i32_286 : i32
    %c0_i32_287 = arith.constant 0 : i32
    %708 = arith.addi %c0_i32_287, %707 : i32
    %709 = tpu.assume_multiple %708, 16 : i32
    %710 = arith.index_cast %709 : i32 to index
    %c0_288 = arith.constant 0 : index
    %711 = vector.load %arg13[%710, %c0_288] : memref<128x512xf32, #tpu.memory_space<vmem>>, vector<16x512xf32>
    %712 = arith.truncf %700 : vector<16x128xf32> to vector<16x128xbf16>
    %cst_289 = arith.constant dense<0.000000e+00> : vector<16x512xf32>
    %713 = tpu.matmul %712, %380, %cst_289 {dimension_numbers = #tpu.dot_dimension_numbers<[1], [0], [0], [1], [0, 0, 1, 1], [], []>} : vector<16x128xbf16>, vector<128x512xbf16>, vector<16x512xf32> -> vector<16x512xf32>
    %714 = arith.addf %711, %713 : vector<16x512xf32>
    %715 = vector.extract_strided_slice %714 {offsets = [0, 0], sizes = [16, 128], strides = [1, 1]} : vector<16x512xf32> to vector<16x128xf32>
    %cst_290 = arith.constant 5.000000e-01 : f32
    %716 = vector.broadcast %cst_290 : f32 to vector<16x128xf32>
    %717 = arith.mulf %716, %715 : vector<16x128xf32>
    %718 = math.tanh %717 : vector<16x128xf32>
    %cst_291 = arith.constant 1.000000e+00 : f32
    %719 = vector.broadcast %cst_291 : f32 to vector<16x128xf32>
    %720 = arith.addf %718, %719 : vector<16x128xf32>
    %cst_292 = arith.constant 5.000000e-01 : f32
    %721 = vector.broadcast %cst_292 : f32 to vector<16x128xf32>
    %722 = arith.mulf %721, %720 : vector<16x128xf32>
    %723 = vector.extract_strided_slice %714 {offsets = [0, 128], sizes = [16, 128], strides = [1, 1]} : vector<16x512xf32> to vector<16x128xf32>
    %cst_293 = arith.constant 5.000000e-01 : f32
    %724 = vector.broadcast %cst_293 : f32 to vector<16x128xf32>
    %725 = arith.mulf %724, %723 : vector<16x128xf32>
    %726 = math.tanh %725 : vector<16x128xf32>
    %cst_294 = arith.constant 1.000000e+00 : f32
    %727 = vector.broadcast %cst_294 : f32 to vector<16x128xf32>
    %728 = arith.addf %726, %727 : vector<16x128xf32>
    %cst_295 = arith.constant 5.000000e-01 : f32
    %729 = vector.broadcast %cst_295 : f32 to vector<16x128xf32>
    %730 = arith.mulf %729, %728 : vector<16x128xf32>
    %731 = vector.extract_strided_slice %714 {offsets = [0, 256], sizes = [16, 128], strides = [1, 1]} : vector<16x512xf32> to vector<16x128xf32>
    %732 = math.tanh %731 : vector<16x128xf32>
    %733 = vector.extract_strided_slice %714 {offsets = [0, 384], sizes = [16, 128], strides = [1, 1]} : vector<16x512xf32> to vector<16x128xf32>
    %cst_296 = arith.constant 5.000000e-01 : f32
    %734 = vector.broadcast %cst_296 : f32 to vector<16x128xf32>
    %735 = arith.mulf %734, %733 : vector<16x128xf32>
    %736 = math.tanh %735 : vector<16x128xf32>
    %cst_297 = arith.constant 1.000000e+00 : f32
    %737 = vector.broadcast %cst_297 : f32 to vector<16x128xf32>
    %738 = arith.addf %736, %737 : vector<16x128xf32>
    %cst_298 = arith.constant 5.000000e-01 : f32
    %739 = vector.broadcast %cst_298 : f32 to vector<16x128xf32>
    %740 = arith.mulf %739, %738 : vector<16x128xf32>
    %741 = arith.mulf %730, %698 : vector<16x128xf32>
    %742 = arith.mulf %722, %732 : vector<16x128xf32>
    %743 = arith.addf %741, %742 : vector<16x128xf32>
    %744 = math.tanh %743 : vector<16x128xf32>
    %745 = arith.mulf %740, %744 : vector<16x128xf32>
    %746 = arith.truncf %745 : vector<16x128xf32> to vector<16x128xbf16>
    %c0_i32_299 = arith.constant 0 : i32
    %747 = arith.addi %c0_i32_299, %c7_i32_285 : i32
    %748 = arith.index_cast %747 : i32 to index
    %c0_300 = arith.constant 0 : index
    %c0_301 = arith.constant 0 : index
    %749 = vector.load %arg10[%748, %c0_300, %c0_301] : memref<8x16x128xbf16, #tpu.memory_space<vmem>>, vector<1x16x128xbf16>
    %750 = vector.shape_cast %749 : vector<1x16x128xbf16> to vector<16x128xbf16>
    %751 = vector.shape_cast %746 : vector<16x128xbf16> to vector<1x16x128xbf16>
    tpu.vector_store %arg10[%748, %c0_300, %c0_301], %751 {strides = array<i32>} : memref<8x16x128xbf16, #tpu.memory_space<vmem>>, vector<1x16x128xbf16>,
    %c8_i32_302 = arith.constant 8 : i32
    %c1_303 = arith.constant 1 : index
    %c0_304 = arith.constant 0 : index
    %c0_305 = arith.constant 0 : index
    %752 = vector.load %arg11[%c1_303, %c0_304, %c0_305] : memref<2x16x128xf32, #tpu.memory_space<vmem>>, vector<1x16x128xf32>
    %753 = vector.shape_cast %752 : vector<1x16x128xf32> to vector<16x128xf32>
    %754 = vector.shape_cast %745 : vector<16x128xf32> to vector<1x16x128xf32>
    tpu.vector_store %arg11[%c1_303, %c0_304, %c0_305], %754 {strides = array<i32>} : memref<2x16x128xf32, #tpu.memory_space<vmem>>, vector<1x16x128xf32>,
    %c1_306 = arith.constant 1 : index
    %c0_307 = arith.constant 0 : index
    %c0_308 = arith.constant 0 : index
    %755 = vector.load %arg12[%c1_306, %c0_307, %c0_308] : memref<2x16x128xf32, #tpu.memory_space<vmem>>, vector<1x16x128xf32>
    %756 = vector.shape_cast %755 : vector<1x16x128xf32> to vector<16x128xf32>
    %757 = vector.shape_cast %743 : vector<16x128xf32> to vector<1x16x128xf32>
    tpu.vector_store %arg12[%c1_306, %c0_307, %c0_308], %757 {strides = array<i32>} : memref<2x16x128xf32, #tpu.memory_space<vmem>>, vector<1x16x128xf32>,
    return
  }
  func.func @transform_0(%arg0: i32) -> (i32, i32, i32) {
    %c0_i32 = arith.constant 0 : i32
    %c0_i32_0 = arith.constant 0 : i32
    %c0_i32_1 = arith.constant 0 : i32
    return %c0_i32, %arg0, %c0_i32_0 : i32, i32, i32
  }
  func.func @transform_1(%arg0: i32) -> (i32, i32, i32) {
    %c0_i32 = arith.constant 0 : i32
    %c0_i32_0 = arith.constant 0 : i32
    %c0_i32_1 = arith.constant 0 : i32
    return %c0_i32, %arg0, %c0_i32_0 : i32, i32, i32
  }
  func.func @transform_2(%arg0: i32) -> (i32, i32, i32) {
    %c0_i32 = arith.constant 0 : i32
    %c0_i32_0 = arith.constant 0 : i32
    %c0_i32_1 = arith.constant 0 : i32
    return %c0_i32, %arg0, %c0_i32_0 : i32, i32, i32
  }
  func.func @transform_3(%arg0: i32) -> (i32, i32) {
    %c0_i32 = arith.constant 0 : i32
    %c0_i32_0 = arith.constant 0 : i32
    %c0_i32_1 = arith.constant 0 : i32
    return %c0_i32, %c0_i32_0 : i32, i32
  }
  func.func @transform_4(%arg0: i32) -> (i32, i32) {
    %c0_i32 = arith.constant 0 : i32
    %c0_i32_0 = arith.constant 0 : i32
    %c0_i32_1 = arith.constant 0 : i32
    return %c0_i32, %c0_i32_0 : i32, i32
  }
  func.func @transform_5(%arg0: i32) -> (i32, i32) {
    %c0_i32 = arith.constant 0 : i32
    %c0_i32_0 = arith.constant 0 : i32
    %c0_i32_1 = arith.constant 0 : i32
    return %c0_i32, %c0_i32_0 : i32, i32
  }
  func.func @transform_6(%arg0: i32) -> (i32, i32) {
    %c0_i32 = arith.constant 0 : i32
    %c0_i32_0 = arith.constant 0 : i32
    %c0_i32_1 = arith.constant 0 : i32
    return %c0_i32, %c0_i32_0 : i32, i32
  }
  func.func @transform_7(%arg0: i32) -> (i32, i32) {
    %c0_i32 = arith.constant 0 : i32
    %c0_i32_0 = arith.constant 0 : i32
    %c0_i32_1 = arith.constant 0 : i32
    return %c0_i32, %c0_i32_0 : i32, i32
  }
  func.func @transform_8(%arg0: i32) -> (i32, i32) {
    %c0_i32 = arith.constant 0 : i32
    %c0_i32_0 = arith.constant 0 : i32
    %c0_i32_1 = arith.constant 0 : i32
    return %c0_i32, %c0_i32_0 : i32, i32
  }
  func.func @transform_9(%arg0: i32) -> (i32, i32, i32) {
    %c0_i32 = arith.constant 0 : i32
    %c0_i32_0 = arith.constant 0 : i32
    %c0_i32_1 = arith.constant 0 : i32
    return %c0_i32, %arg0, %c0_i32_0 : i32, i32, i32
  }
  func.func @transform_10(%arg0: i32) -> (i32, i32, i32) {
    %c0_i32 = arith.constant 0 : i32
    %c0_i32_0 = arith.constant 0 : i32
    %c0_i32_1 = arith.constant 0 : i32
    return %c0_i32, %arg0, %c0_i32_0 : i32, i32, i32
  }
  func.func @transform_11(%arg0: i32) -> (i32, i32, i32) {
    %c0_i32 = arith.constant 0 : i32
    %c0_i32_0 = arith.constant 0 : i32
    %c0_i32_1 = arith.constant 0 : i32
    return %c0_i32, %arg0, %c0_i32_0 : i32, i32, i32
  }
}

</mosaic_0001>

<llo_original>
// kernel: tpu_custom_call.1
$region0: #{tpu_custom_call.1}
  #allocation0 [shape = 'u32[]', space=smem, size = 0x4, offset = 0x4, fixed_abs, tag = 'smem constant byte address 0x4 - core index']
  #allocation1 [shape = 'u32[144,128]{1,0:T(1,128)}', space=vmem, size = 0x12000, scoped, tag = 'internal scratch']
  #allocation2 [shape = 'f32[128,512]{1,0:T(8,128)}', space=vmem, size = 0x40000, scoped, tag = 'scratch operand']
  %s0 = inlined_call_operand.hbm [shape: bf16[8,16,16], index: 0, kind: input, shape index: {}]
  %s1 = inlined_call_operand.hbm [shape: f32[2,16,128], index: 1, kind: input, shape index: {}]
  %s2 = inlined_call_operand.hbm [shape: f32[2,16,128], index: 2, kind: input, shape index: {}]
  %s3 = inlined_call_operand.hbm [shape: bf16[16,512], index: 3, kind: input, shape index: {}]
  %s4 = inlined_call_operand.hbm [shape: bf16[128,512], index: 4, kind: input, shape index: {}]
  %s5 = inlined_call_operand.hbm [shape: bf16[128,512], index: 5, kind: input, shape index: {}]
  %s6 = inlined_call_operand.hbm [shape: bf16[128,512], index: 6, kind: input, shape index: {}]
  %s7 = inlined_call_operand.vmem [shape: f32[1,512], index: 7, kind: input, shape index: {}]
  %s8 = inlined_call_operand.vmem [shape: f32[1,512], index: 8, kind: input, shape index: {}]
  %s9 = inlined_call_operand.hbm [shape: bf16[8,16,128], index: 9, kind: output, shape index: {0}]
  %s10 = inlined_call_operand.hbm [shape: f32[2,16,128], index: 10, kind: output, shape index: {1}]
  %s11 = inlined_call_operand.hbm [shape: f32[2,16,128], index: 11, kind: output, shape index: {2}]
  %12 = xla_tuple %s9, %s10, %s11
  %s13 = sld [smem:[#allocation0]]
  $region90: #{tpu_custom_call.1} parent=0
    _
  %s15 = ssub.s32 1, %s13
  %s16 = scalar_select 0, %s15, %s13
  $region1: #{tpu_custom_call.1} parent=0
    #allocation3 [shape = 'u8[32768]{0}', space=vmem, size = 0x8000, scoped, tag = 'input window, operand 0, single buffered']
    #allocation4 [shape = 's32[1]{0}', space=sflag, size = 0x4, scoped, tag = 'scoped memory for tpu_custom_call.1']
    #allocation5 [shape = 's32[1]{0}', space=sflag, size = 0x4, scoped, tag = 'scoped memory for tpu_custom_call.1']
    #allocation6 [shape = 'u8[16384]{0}', space=vmem, size = 0x4000, scoped, tag = 'input window, operand 1, single buffered']
    #allocation7 [shape = 's32[1]{0}', space=sflag, size = 0x4, scoped, tag = 'scoped memory for tpu_custom_call.1']
    #allocation8 [shape = 'u8[16384]{0}', space=vmem, size = 0x4000, scoped, tag = 'input window, operand 2, single buffered']
    #allocation9 [shape = 'u8[16384]{0}', space=vmem, size = 0x4000, scoped, tag = 'input window, operand 3, single buffered']
    #allocation10 [shape = 's32[1]{0}', space=sflag, size = 0x4, scoped, tag = 'scoped memory for tpu_custom_call.1']
    #allocation11 [shape = 'u8[131072]{0}', space=vmem, size = 0x20000, scoped, tag = 'input window, operand 4, single buffered']
    #allocation12 [shape = 'u8[131072]{0}', space=vmem, size = 0x20000, scoped, tag = 'input window, operand 5, single buffered']
    #allocation13 [shape = 's32[1]{0}', space=sflag, size = 0x4, scoped, tag = 'scoped memory for tpu_custom_call.1']
    #allocation14 [shape = 'u8[131072]{0}', space=vmem, size = 0x20000, scoped, tag = 'input window, operand 6, single buffered']
    #allocation15 [shape = 'u8[32768]{0}', space=vmem, size = 0x8000, scoped, tag = 'output window, operand 0, single buffered']
    #allocation16 [shape = 'u8[16384]{0}', space=vmem, size = 0x4000, scoped, tag = 'output window, operand 1, single buffered']
    #allocation17 [shape = 's32[1]{0}', space=sflag, size = 0x4, scoped, tag = 'scoped memory for tpu_custom_call.1']
    #allocation18 [shape = 'u8[16384]{0}', space=vmem, size = 0x4000, scoped, tag = 'output window, operand 2, single buffered']
    %17 = vsyncpa [#allocation4], 0
    %18 = vsyncpa [#allocation7], 0
    %19 = vsyncpa [#allocation10], 0
    %20 = vsyncpa [#allocation13], 0
    %21 = vsyncpa [#allocation5], 0
    %22 = vsyncpa [#allocation17], 0
    // Predicated region
    $region2: #{tpu_custom_call.1} parent=1 // pred_check
      _
    $region3: #{tpu_custom_call.1} parent=1 // pred_check_branch
      %24 = sbr.rel (0) target = $region5
    $region4: #{tpu_custom_call.1} parent=1 // pred_region
      %s26 = ssub.s32 1024, 1024
      %27 = vsyncadd [#allocation4], %s26
      %s28 = sshll.u32 [#allocation3], 4
      %s29 = int_to_ptr.vmem [resolvable:$true] %s28
      %34 = dma.hbm_to_vmem [thread:$0]  %s0, 1024, %s29, [#allocation4], 64, 64, 4
    $region5: #{tpu_custom_call.1} parent=1 // pred_fallthru
      _
    // Predicated region
    $region6: #{tpu_custom_call.1} parent=1 // pred_check
      _
    $region7: #{tpu_custom_call.1} parent=1 // pred_check_branch
      %36 = sbr.rel (0) target = $region9
    $region8: #{tpu_custom_call.1} parent=1 // pred_region
      %s38 = ssub.s32 512, 512
      %39 = vsyncadd [#allocation7], %s38
      %s40 = sshll.u32 [#allocation6], 4
      %s41 = int_to_ptr.vmem [resolvable:$true] %s40
      %46 = dma.hbm_to_vmem [thread:$0]  %s1, 512, %s41, [#allocation7], 128, 128, 8
    $region9: #{tpu_custom_call.1} parent=1 // pred_fallthru
      _
    // Predicated region
    $region10: #{tpu_custom_call.1} parent=1 // pred_check
      _
    $region11: #{tpu_custom_call.1} parent=1 // pred_check_branch
      %48 = sbr.rel (0) target = $region13
    $region12: #{tpu_custom_call.1} parent=1 // pred_region
      %s50 = ssub.s32 512, 512
      %51 = vsyncadd [#allocation7], %s50
      %s52 = sshll.u32 [#allocation8], 4
      %s53 = int_to_ptr.vmem [resolvable:$true] %s52
      %58 = dma.hbm_to_vmem [thread:$0]  %s2, 512, %s53, [#allocation7], 128, 128, 8
    $region13: #{tpu_custom_call.1} parent=1 // pred_fallthru
      _
    // Predicated region
    $region14: #{tpu_custom_call.1} parent=1 // pred_check
      _
    $region15: #{tpu_custom_call.1} parent=1 // pred_check_branch
      %60 = sbr.rel (0) target = $region17
    $region16: #{tpu_custom_call.1} parent=1 // pred_region
      %s62 = ssub.s32 512, 512
      %63 = vsyncadd [#allocation10], %s62
      %s64 = sshll.u32 [#allocation9], 4
      %s65 = int_to_ptr.vmem [resolvable:$true] %s64
      %70 = dma.hbm_to_vmem [thread:$0]  %s3, 512, %s65, [#allocation10], 256, 256, 16
    $region17: #{tpu_custom_call.1} parent=1 // pred_fallthru
      _
    // Predicated region
    $region18: #{tpu_custom_call.1} parent=1 // pred_check
      _
    $region19: #{tpu_custom_call.1} parent=1 // pred_check_branch
      %72 = sbr.rel (0) target = $region21
    $region20: #{tpu_custom_call.1} parent=1 // pred_region
      %s74 = ssub.s32 4096, 4096
      %75 = vsyncadd [#allocation10], %s74
      %s76 = sshll.u32 [#allocation11], 4
      %s77 = int_to_ptr.vmem [resolvable:$true] %s76
      %82 = dma.hbm_to_vmem [thread:$0]  %s4, 4096, %s77, [#allocation10], 256, 256, 16
    $region21: #{tpu_custom_call.1} parent=1 // pred_fallthru
      _
    // Predicated region
    $region22: #{tpu_custom_call.1} parent=1 // pred_check
      _
    $region23: #{tpu_custom_call.1} parent=1 // pred_check_branch
      %84 = sbr.rel (0) target = $region25
    $region24: #{tpu_custom_call.1} parent=1 // pred_region
      %s86 = ssub.s32 4096, 4096
      %87 = vsyncadd [#allocation13], %s86
      %s88 = sshll.u32 [#allocation12], 4
      %s89 = int_to_ptr.vmem [resolvable:$true] %s88
      %94 = dma.hbm_to_vmem [thread:$0]  %s5, 4096, %s89, [#allocation13], 256, 256, 16
    $region25: #{tpu_custom_call.1} parent=1 // pred_fallthru
      _
    // Predicated region
    $region26: #{tpu_custom_call.1} parent=1 // pred_check
      _
    $region27: #{tpu_custom_call.1} parent=1 // pred_check_branch
      %96 = sbr.rel (0) target = $region29
    $region28: #{tpu_custom_call.1} parent=1 // pred_region
      %s98 = ssub.s32 4096, 4096
      %99 = vsyncadd [#allocation13], %s98
      %s100 = sshll.u32 [#allocation14], 4
      %s101 = int_to_ptr.vmem [resolvable:$true] %s100
      %106 = dma.hbm_to_vmem [thread:$0]  %s6, 4096, %s101, [#allocation13], 256, 256, 16
    $region29: #{tpu_custom_call.1} parent=1 // pred_fallthru
      _
    // Predicated region
    $region30: #{tpu_custom_call.1} parent=1 // pred_check
      _
    $region31: #{tpu_custom_call.1} parent=1 // pred_check_branch
      %108 = sbr.rel (0) target = $region33
    $region32: #{tpu_custom_call.1} parent=1 // pred_region
      _
    $region33: #{tpu_custom_call.1} parent=1 // pred_fallthru
      _
    // Predicated region
    $region34: #{tpu_custom_call.1} parent=1 // pred_check
      _
    $region35: #{tpu_custom_call.1} parent=1 // pred_check_branch
      %110 = sbr.rel (0) target = $region37
    $region36: #{tpu_custom_call.1} parent=1 // pred_region
      _
    $region37: #{tpu_custom_call.1} parent=1 // pred_fallthru
      _
    // Predicated region
    $region38: #{tpu_custom_call.1} parent=1 // pred_check
      _
    $region39: #{tpu_custom_call.1} parent=1 // pred_check_branch
      %112 = sbr.rel (0) target = $region41
    $region40: #{tpu_custom_call.1} parent=1 // pred_region
      %113 = dma.done [#allocation4], 1024
    $region41: #{tpu_custom_call.1} parent=1 // pred_fallthru
      _
    // Predicated region
    $region42: #{tpu_custom_call.1} parent=1 // pred_check
      _
    $region43: #{tpu_custom_call.1} parent=1 // pred_check_branch
      %115 = sbr.rel (0) target = $region45
    $region44: #{tpu_custom_call.1} parent=1 // pred_region
      %116 = dma.done [#allocation7], 512
    $region45: #{tpu_custom_call.1} parent=1 // pred_fallthru
      _
    // Predicated region
    $region46: #{tpu_custom_call.1} parent=1 // pred_check
      _
    $region47: #{tpu_custom_call.1} parent=1 // pred_check_branch
      %118 = sbr.rel (0) target = $region49
    $region48: #{tpu_custom_call.1} parent=1 // pred_region
      %119 = dma.done [#allocation7], 512
    $region49: #{tpu_custom_call.1} parent=1 // pred_fallthru
      _
    // Predicated region
    $region50: #{tpu_custom_call.1} parent=1 // pred_check
      _
    $region51: #{tpu_custom_call.1} parent=1 // pred_check_branch
      %121 = sbr.rel (0) target = $region53
    $region52: #{tpu_custom_call.1} parent=1 // pred_region
      %122 = dma.done [#allocation10], 512
    $region53: #{tpu_custom_call.1} parent=1 // pred_fallthru
      _
    // Predicated region
    $region54: #{tpu_custom_call.1} parent=1 // pred_check
      _
    $region55: #{tpu_custom_call.1} parent=1 // pred_check_branch
      %124 = sbr.rel (0) target = $region57
    $region56: #{tpu_custom_call.1} parent=1 // pred_region
      %125 = dma.done [#allocation10], 4096
    $region57: #{tpu_custom_call.1} parent=1 // pred_fallthru
      _
    // Predicated region
    $region58: #{tpu_custom_call.1} parent=1 // pred_check
      _
    $region59: #{tpu_custom_call.1} parent=1 // pred_check_branch
      %127 = sbr.rel (0) target = $region61
    $region60: #{tpu_custom_call.1} parent=1 // pred_region
      %128 = dma.done [#allocation13], 4096
    $region61: #{tpu_custom_call.1} parent=1 // pred_fallthru
      _
    // Predicated region
    $region62: #{tpu_custom_call.1} parent=1 // pred_check
      _
    $region63: #{tpu_custom_call.1} parent=1 // pred_check_branch
      %130 = sbr.rel (0) target = $region65
    $region64: #{tpu_custom_call.1} parent=1 // pred_region
      %131 = dma.done [#allocation13], 4096
    $region65: #{tpu_custom_call.1} parent=1 // pred_fallthru
      _
    %v133 = vld [vmem:[#allocation9] sm:$0xff]
    %v134 = vld [vmem:[#allocation9 + $0x8] sm:$0xff]
    %v135 = vld [vmem:[#allocation9 + $0x10] sm:$0xff]
    %v136 = vld [vmem:[#allocation9 + $0x18] sm:$0xff]
    %v137 = vld [vmem:[#allocation12] sm:$0xff]
    %v138 = vld [vmem:[#allocation12 + $0x8] sm:$0xff]
    %v139 = vld [vmem:[#allocation12 + $0x10] sm:$0xff]
    %v140 = vld [vmem:[#allocation12 + $0x18] sm:$0xff]
    %v141 = vld [vmem:[#allocation12 + $0x20] sm:$0xff]
    %v142 = vld [vmem:[#allocation12 + $0x28] sm:$0xff]
    %v143 = vld [vmem:[#allocation12 + $0x30] sm:$0xff]
    %v144 = vld [vmem:[#allocation12 + $0x38] sm:$0xff]
    %v145 = vld [vmem:[#allocation12 + $0x40] sm:$0xff]
    %v146 = vld [vmem:[#allocation12 + $0x48] sm:$0xff]
    %v147 = vld [vmem:[#allocation12 + $0x50] sm:$0xff]
    %v148 = vld [vmem:[#allocation12 + $0x58] sm:$0xff]
    %v149 = vld [vmem:[#allocation12 + $0x60] sm:$0xff]
    %v150 = vld [vmem:[#allocation12 + $0x68] sm:$0xff]
    %v151 = vld [vmem:[#allocation12 + $0x70] sm:$0xff]
    %v152 = vld [vmem:[#allocation12 + $0x78] sm:$0xff]
    %v153 = vld [vmem:[#allocation12 + $0x80] sm:$0xff]
    %v154 = vld [vmem:[#allocation12 + $0x88] sm:$0xff]
    %v155 = vld [vmem:[#allocation12 + $0x90] sm:$0xff]
    %v156 = vld [vmem:[#allocation12 + $0x98] sm:$0xff]
    %v157 = vld [vmem:[#allocation12 + $0xa0] sm:$0xff]
    %v158 = vld [vmem:[#allocation12 + $0xa8] sm:$0xff]
    %v159 = vld [vmem:[#allocation12 + $0xb0] sm:$0xff]
    %v160 = vld [vmem:[#allocation12 + $0xb8] sm:$0xff]
    %v161 = vld [vmem:[#allocation12 + $0xc0] sm:$0xff]
    %v162 = vld [vmem:[#allocation12 + $0xc8] sm:$0xff]
    %v163 = vld [vmem:[#allocation12 + $0xd0] sm:$0xff]
    %v164 = vld [vmem:[#allocation12 + $0xd8] sm:$0xff]
    %v165 = vld [vmem:[#allocation12 + $0xe0] sm:$0xff]
    %v166 = vld [vmem:[#allocation12 + $0xe8] sm:$0xff]
    %v167 = vld [vmem:[#allocation12 + $0xf0] sm:$0xff]
    %v168 = vld [vmem:[#allocation12 + $0xf8] sm:$0xff]
    %v169 = vld [vmem:[%s7] sm:$0xf]
    %v170 = vld [vmem:[#allocation3] sm:$0xf]
    %v171 = vld [vmem:[#allocation3 + $0x4] sm:$0xf]
    %v172 = vld [vmem:[#allocation3 + $0x8] sm:$0xf]
    %v173 = vld [vmem:[#allocation3 + $0xc] sm:$0xf]
    %v174 = vld [vmem:[#allocation3 + $0x10] sm:$0xf]
    %v175 = vld [vmem:[#allocation3 + $0x14] sm:$0xf]
    %v176 = vld [vmem:[#allocation3 + $0x18] sm:$0xf]
    %v177 = vld [vmem:[#allocation3 + $0x1c] sm:$0xf]
    %v178 = vld [vmem:[#allocation3 + $0x20] sm:$0xf]
    %v179 = vld [vmem:[#allocation3 + $0x24] sm:$0xf]
    %v180 = vld [vmem:[#allocation3 + $0x28] sm:$0xf]
    %v181 = vld [vmem:[#allocation3 + $0x2c] sm:$0xf]
    %v182 = vld [vmem:[#allocation3 + $0x30] sm:$0xf]
    %v183 = vld [vmem:[#allocation3 + $0x34] sm:$0xf]
    %v184 = vld [vmem:[#allocation3 + $0x38] sm:$0xf]
    %v185 = vld [vmem:[#allocation3 + $0x3c] sm:$0xf]
    %v187 = vlaneseq
    %v188 = vshrl.u32 %v187, 7
    %v189 = vsub.s32 0, %v188
    %v190 = vrot.slane %v169, %v189
    %v191 = vlaneseq
    %v192 = vshrl.u32 %v191, 7
    %v193 = vsub.s32 1, %v192
    %v194 = vrot.slane %v169, %v193
    %v195 = vlaneseq
    %v196 = vshrl.u32 %v195, 7
    %v197 = vsub.s32 2, %v196
    %v198 = vrot.slane %v169, %v197
    %v199 = vlaneseq
    %v200 = vshrl.u32 %v199, 7
    %v201 = vsub.s32 3, %v200
    %v202 = vrot.slane %v169, %v201
    %v223 = vunpack.c.l.b16 %v170
    %v224 = vunpack.c.l.b16 %v171
    %v225 = vunpack.c.l.b16 %v172
    %v226 = vunpack.c.l.b16 %v173
    %v227 = vunpack.c.l.b16 %v174
    %v228 = vunpack.c.l.b16 %v175
    %v229 = vunpack.c.l.b16 %v176
    %v230 = vunpack.c.l.b16 %v177
    %v231 = vunpack.c.l.b16 %v178
    %v232 = vunpack.c.l.b16 %v179
    %v233 = vunpack.c.l.b16 %v180
    %v234 = vunpack.c.l.b16 %v181
    %v235 = vunpack.c.l.b16 %v182
    %v236 = vunpack.c.l.b16 %v183
    %v237 = vunpack.c.l.b16 %v184
    %v238 = vunpack.c.l.b16 %v185
    %v239 = vpack.c.b16 %v224, %v223
    %v240 = vpack.c.b16 %v226, %v225
    %v241 = vpack.c.b16 %v228, %v227
    %v242 = vpack.c.b16 %v230, %v229
    %v243 = vpack.c.b16 %v232, %v231
    %v244 = vpack.c.b16 %v234, %v233
    %v245 = vpack.c.b16 %v236, %v235
    %v246 = vpack.c.b16 %v238, %v237
    %v251 = vunpack.c.l.b16 %v133
    %v252 = vunpack.c.h.b16 %v133
    %v253 = vunpack.c.l.b16 %v134
    %v254 = vunpack.c.h.b16 %v134
    %v255 = vunpack.c.l.b16 %v135
    %v256 = vunpack.c.h.b16 %v135
    %v257 = vunpack.c.l.b16 %v136
    %v258 = vunpack.c.h.b16 %v136
    %v259 = vpack.c.b16 %v255, %v251
    %v260 = vpack.c.b16 %v256, %v252
    %v261 = vpack.c.b16 %v257, %v253
    %v262 = vpack.c.b16 %v258, %v254
    %vm267 = vcmask 130048
    %v269 = vsel %vm267, %v239, 0
    %v272 = vsel %vm267, %v240, 0
    %v275 = vsel %vm267, %v241, 0
    %v278 = vsel %vm267, %v242, 0
    %v281 = vsel %vm267, %v243, 0
    %v284 = vsel %vm267, %v244, 0
    %v287 = vsel %vm267, %v245, 0
    %v290 = vsel %vm267, %v246, 0
    %292 = vmatprep.subr.bf16.mxu0 %v260
    %293 = vmatpush1.bf16.msra.mxu0 %v259
    %294 = vmatprep.subr.bf16.mxu0 0
    %295 = vmatpush1.bf16.msra.mxu0 0
    %296 = vmatprep.subr.bf16.mxu0 0
    %297 = vmatpush1.bf16.msra.mxu0 0
    %298 = vmatprep.subr.bf16.mxu0 0
    %299 = vmatpush1.bf16.msra.mxu0 0
    %300 = vmatprep.subr.bf16.mxu0 0
    %301 = vmatpush1.bf16.msra.mxu0 0
    %302 = vmatprep.subr.bf16.mxu0 0
    %303 = vmatpush1.bf16.msra.mxu0 0
    %304 = vmatprep.subr.bf16.mxu0 0
    %305 = vmatpush1.bf16.msra.mxu0 0
    %306 = vmatprep.subr.bf16.mxu0 0
    %307 = vmatpush1.bf16.msra.mxu0 0
    %308 = vmatprep.subr.bf16.mxu0 0
    %309 = vmatpush1.bf16.msra.mxu0 0
    %310 = vmatprep.subr.bf16.mxu0 0
    %311 = vmatpush1.bf16.msra.mxu0 0
    %312 = vmatprep.subr.bf16.mxu0 0
    %313 = vmatpush1.bf16.msra.mxu0 0
    %314 = vmatprep.subr.bf16.mxu0 0
    %315 = vmatpush1.bf16.msra.mxu0 0
    %316 = vmatprep.subr.bf16.mxu0 0
    %317 = vmatpush1.bf16.msra.mxu0 0
    %318 = vmatprep.subr.bf16.mxu0 0
    %319 = vmatpush1.bf16.msra.mxu0 0
    %320 = vmatprep.subr.bf16.mxu0 0
    %321 = vmatpush1.bf16.msra.mxu0 0
    %322 = vmatprep.subr.bf16.mxu0 0
    %323 = vmatpush1.bf16.msra.mxu0 0
    %324 = vmatprep.mubr.bf16.mxu0 0
    %325 = vmatmul.mubr.bf16.gmra.mrb[0].mxu0 %v269
    %v326 = vpop.f32.mrb[0].mxu0
    %v327 = vadd.f32 %v190, %v326
    %v328 = vpop.f32.mrb[0].mxu0
    %v329 = vadd.f32 %v194, %v328
    %v330 = vpop.f32.mrb[0].mxu0
    %v331 = vadd.f32 %v190, %v330
    %v332 = vpop.f32.mrb[0].mxu0
    %v333 = vadd.f32 %v194, %v332
    %334 = vmatprep.mubr.bf16.mxu0 0
    %335 = vmatmul.mubr.bf16.gmra.mrb[0].mxu0 %v272
    %v336 = vpop.f32.mrb[0].mxu0
    %v337 = vadd.f32 %v190, %v336
    %v338 = vpop.f32.mrb[0].mxu0
    %v339 = vadd.f32 %v194, %v338
    %v340 = vpop.f32.mrb[0].mxu0
    %v341 = vadd.f32 %v190, %v340
    %v342 = vpop.f32.mrb[0].mxu0
    %v343 = vadd.f32 %v194, %v342
    %344 = vmatprep.mubr.bf16.mxu0 0
    %345 = vmatmul.mubr.bf16.gmra.mrb[0].mxu0 %v275
    %v346 = vpop.f32.mrb[0].mxu0
    %v347 = vadd.f32 %v190, %v346
    %v348 = vpop.f32.mrb[0].mxu0
    %v349 = vadd.f32 %v194, %v348
    %v350 = vpop.f32.mrb[0].mxu0
    %v351 = vadd.f32 %v190, %v350
    %v352 = vpop.f32.mrb[0].mxu0
    %v353 = vadd.f32 %v194, %v352
    %354 = vmatprep.mubr.bf16.mxu0 0
    %355 = vmatmul.mubr.bf16.gmra.mrb[0].mxu0 %v278
    %v356 = vpop.f32.mrb[0].mxu0
    %v357 = vadd.f32 %v190, %v356
    %v358 = vpop.f32.mrb[0].mxu0
    %v359 = vadd.f32 %v194, %v358
    %v360 = vpop.f32.mrb[0].mxu0
    %v361 = vadd.f32 %v190, %v360
    %v362 = vpop.f32.mrb[0].mxu0
    %v363 = vadd.f32 %v194, %v362
    %364 = vmatprep.mubr.bf16.mxu0 0
    %365 = vmatmul.mubr.bf16.gmra.mrb[0].mxu0 %v281
    %v366 = vpop.f32.mrb[0].mxu0
    %v367 = vadd.f32 %v190, %v366
    %v368 = vpop.f32.mrb[0].mxu0
    %v369 = vadd.f32 %v194, %v368
    %v370 = vpop.f32.mrb[0].mxu0
    %v371 = vadd.f32 %v190, %v370
    %v372 = vpop.f32.mrb[0].mxu0
    %v373 = vadd.f32 %v194, %v372
    %374 = vmatprep.mubr.bf16.mxu0 0
    %375 = vmatmul.mubr.bf16.gmra.mrb[0].mxu0 %v284
    %v376 = vpop.f32.mrb[0].mxu0
    %v377 = vadd.f32 %v190, %v376
    %v378 = vpop.f32.mrb[0].mxu0
    %v379 = vadd.f32 %v194, %v378
    %v380 = vpop.f32.mrb[0].mxu0
    %v381 = vadd.f32 %v190, %v380
    %v382 = vpop.f32.mrb[0].mxu0
    %v383 = vadd.f32 %v194, %v382
    %384 = vmatprep.mubr.bf16.mxu0 0
    %385 = vmatmul.mubr.bf16.gmra.mrb[0].mxu0 %v287
    %v386 = vpop.f32.mrb[0].mxu0
    %v387 = vadd.f32 %v190, %v386
    %v388 = vpop.f32.mrb[0].mxu0
    %v389 = vadd.f32 %v194, %v388
    %v390 = vpop.f32.mrb[0].mxu0
    %v391 = vadd.f32 %v190, %v390
    %v392 = vpop.f32.mrb[0].mxu0
    %v393 = vadd.f32 %v194, %v392
    %394 = vmatprep.mubr.bf16.mxu0 0
    %395 = vmatmul.mubr.bf16.gmra.mrb[0].mxu0 %v290
    %v396 = vpop.f32.mrb[0].mxu0
    %v397 = vadd.f32 %v190, %v396
    %v398 = vpop.f32.mrb[0].mxu0
    %v399 = vadd.f32 %v194, %v398
    %v400 = vpop.f32.mrb[0].mxu0
    %v401 = vadd.f32 %v190, %v400
    %v402 = vpop.f32.mrb[0].mxu0
    %v403 = vadd.f32 %v194, %v402
    %404 = vdwg.mxu0
    %405 = vmatprep.subr.bf16.mxu0 %v262
    %406 = vmatpush1.bf16.msra.mxu0 %v261
    %407 = vmatprep.subr.bf16.mxu0 0
    %408 = vmatpush1.bf16.msra.mxu0 0
    %409 = vmatprep.subr.bf16.mxu0 0
    %410 = vmatpush1.bf16.msra.mxu0 0
    %411 = vmatprep.subr.bf16.mxu0 0
    %412 = vmatpush1.bf16.msra.mxu0 0
    %413 = vmatprep.subr.bf16.mxu0 0
    %414 = vmatpush1.bf16.msra.mxu0 0
    %415 = vmatprep.subr.bf16.mxu0 0
    %416 = vmatpush1.bf16.msra.mxu0 0
    %417 = vmatprep.subr.bf16.mxu0 0
    %418 = vmatpush1.bf16.msra.mxu0 0
    %419 = vmatprep.subr.bf16.mxu0 0
    %420 = vmatpush1.bf16.msra.mxu0 0
    %421 = vmatprep.subr.bf16.mxu0 0
    %422 = vmatpush1.bf16.msra.mxu0 0
    %423 = vmatprep.subr.bf16.mxu0 0
    %424 = vmatpush1.bf16.msra.mxu0 0
    %425 = vmatprep.subr.bf16.mxu0 0
    %426 = vmatpush1.bf16.msra.mxu0 0
    %427 = vmatprep.subr.bf16.mxu0 0
    %428 = vmatpush1.bf16.msra.mxu0 0
    %429 = vmatprep.subr.bf16.mxu0 0
    %430 = vmatpush1.bf16.msra.mxu0 0
    %431 = vmatprep.subr.bf16.mxu0 0
    %432 = vmatpush1.bf16.msra.mxu0 0
    %433 = vmatprep.subr.bf16.mxu0 0
    %434 = vmatpush1.bf16.msra.mxu0 0
    %435 = vmatprep.subr.bf16.mxu0 0
    %436 = vmatpush1.bf16.msra.mxu0 0
    %437 = vmatprep.mubr.bf16.mxu0 0
    %438 = vmatmul.mubr.bf16.gmra.mrb[0].mxu0 %v269
    %v439 = vpop.f32.mrb[0].mxu0
    %v440 = vadd.f32 %v198, %v439
    %v441 = vpop.f32.mrb[0].mxu0
    %v442 = vadd.f32 %v202, %v441
    %v443 = vpop.f32.mrb[0].mxu0
    %v444 = vadd.f32 %v198, %v443
    %v445 = vpop.f32.mrb[0].mxu0
    %v446 = vadd.f32 %v202, %v445
    %447 = vmatprep.mubr.bf16.mxu0 0
    %448 = vmatmul.mubr.bf16.gmra.mrb[0].mxu0 %v272
    %v449 = vpop.f32.mrb[0].mxu0
    %v450 = vadd.f32 %v198, %v449
    %v451 = vpop.f32.mrb[0].mxu0
    %v452 = vadd.f32 %v202, %v451
    %v453 = vpop.f32.mrb[0].mxu0
    %v454 = vadd.f32 %v198, %v453
    %v455 = vpop.f32.mrb[0].mxu0
    %v456 = vadd.f32 %v202, %v455
    %457 = vmatprep.mubr.bf16.mxu0 0
    %458 = vmatmul.mubr.bf16.gmra.mrb[0].mxu0 %v275
    %v459 = vpop.f32.mrb[0].mxu0
    %v460 = vadd.f32 %v198, %v459
    %v461 = vpop.f32.mrb[0].mxu0
    %v462 = vadd.f32 %v202, %v461
    %v463 = vpop.f32.mrb[0].mxu0
    %v464 = vadd.f32 %v198, %v463
    %v465 = vpop.f32.mrb[0].mxu0
    %v466 = vadd.f32 %v202, %v465
    %467 = vmatprep.mubr.bf16.mxu0 0
    %468 = vmatmul.mubr.bf16.gmra.mrb[0].mxu0 %v278
    %v469 = vpop.f32.mrb[0].mxu0
    %v470 = vadd.f32 %v198, %v469
    %v471 = vpop.f32.mrb[0].mxu0
    %v472 = vadd.f32 %v202, %v471
    %v473 = vpop.f32.mrb[0].mxu0
    %v474 = vadd.f32 %v198, %v473
    %v475 = vpop.f32.mrb[0].mxu0
    %v476 = vadd.f32 %v202, %v475
    %477 = vmatprep.mubr.bf16.mxu0 0
    %478 = vmatmul.mubr.bf16.gmra.mrb[0].mxu0 %v281
    %v479 = vpop.f32.mrb[0].mxu0
    %v480 = vadd.f32 %v198, %v479
    %v481 = vpop.f32.mrb[0].mxu0
    %v482 = vadd.f32 %v202, %v481
    %v483 = vpop.f32.mrb[0].mxu0
    %v484 = vadd.f32 %v198, %v483
    %v485 = vpop.f32.mrb[0].mxu0
    %v486 = vadd.f32 %v202, %v485
    %487 = vmatprep.mubr.bf16.mxu0 0
    %488 = vmatmul.mubr.bf16.gmra.mrb[0].mxu0 %v284
    %v489 = vpop.f32.mrb[0].mxu0
    %v490 = vadd.f32 %v198, %v489
    %v491 = vpop.f32.mrb[0].mxu0
    %v492 = vadd.f32 %v202, %v491
    %v493 = vpop.f32.mrb[0].mxu0
    %v494 = vadd.f32 %v198, %v493
    %v495 = vpop.f32.mrb[0].mxu0
    %v496 = vadd.f32 %v202, %v495
    %497 = vmatprep.mubr.bf16.mxu0 0
    %498 = vmatmul.mubr.bf16.gmra.mrb[0].mxu0 %v287
    %v499 = vpop.f32.mrb[0].mxu0
    %v500 = vadd.f32 %v198, %v499
    %v501 = vpop.f32.mrb[0].mxu0
    %v502 = vadd.f32 %v202, %v501
    %v503 = vpop.f32.mrb[0].mxu0
    %v504 = vadd.f32 %v198, %v503
    %v505 = vpop.f32.mrb[0].mxu0
    %v506 = vadd.f32 %v202, %v505
    %507 = vmatprep.mubr.bf16.mxu0 0
    %508 = vmatmul.mubr.bf16.gmra.mrb[0].mxu0 %v290
    %v509 = vpop.f32.mrb[0].mxu0
    %v510 = vadd.f32 %v198, %v509
    %v511 = vpop.f32.mrb[0].mxu0
    %v512 = vadd.f32 %v202, %v511
    %v513 = vpop.f32.mrb[0].mxu0
    %v514 = vadd.f32 %v198, %v513
    %v515 = vpop.f32.mrb[0].mxu0
    %v516 = vadd.f32 %v202, %v515
    %517 = vdwg.mxu0
    %518 = vst [vmem:[#allocation2] sm:$0xff] %v327
    %519 = vst [vmem:[#allocation2 + $0x8] sm:$0xff] %v329
    %520 = vst [vmem:[#allocation2 + $0x10] sm:$0xff] %v440
    %521 = vst [vmem:[#allocation2 + $0x18] sm:$0xff] %v442
    %522 = vst [vmem:[#allocation2 + $0x20] sm:$0xff] %v331
    %523 = vst [vmem:[#allocation2 + $0x28] sm:$0xff] %v333
    %524 = vst [vmem:[#allocation2 + $0x30] sm:$0xff] %v444
    %525 = vst [vmem:[#allocation2 + $0x38] sm:$0xff] %v446
    %526 = vst [vmem:[#allocation2 + $0x40] sm:$0xff] %v337
    %527 = vst [vmem:[#allocation2 + $0x48] sm:$0xff] %v339
    %528 = vst [vmem:[#allocation2 + $0x50] sm:$0xff] %v450
    %529 = vst [vmem:[#allocation2 + $0x58] sm:$0xff] %v452
    %530 = vst [vmem:[#allocation2 + $0x60] sm:$0xff] %v341
    %531 = vst [vmem:[#allocation2 + $0x68] sm:$0xff] %v343
    %532 = vst [vmem:[#allocation2 + $0x70] sm:$0xff] %v454
    %533 = vst [vmem:[#allocation2 + $0x78] sm:$0xff] %v456
    %534 = vst [vmem:[#allocation2 + $0x80] sm:$0xff] %v347
    %535 = vst [vmem:[#allocation2 + $0x88] sm:$0xff] %v349
    %536 = vst [vmem:[#allocation2 + $0x90] sm:$0xff] %v460
    %537 = vst [vmem:[#allocation2 + $0x98] sm:$0xff] %v462
    %538 = vst [vmem:[#allocation2 + $0xa0] sm:$0xff] %v351
    %539 = vst [vmem:[#allocation2 + $0xa8] sm:$0xff] %v353
    %540 = vst [vmem:[#allocation2 + $0xb0] sm:$0xff] %v464
    %541 = vst [vmem:[#allocation2 + $0xb8] sm:$0xff] %v466
    %542 = vst [vmem:[#allocation2 + $0xc0] sm:$0xff] %v357
    %543 = vst [vmem:[#allocation2 + $0xc8] sm:$0xff] %v359
    %544 = vst [vmem:[#allocation2 + $0xd0] sm:$0xff] %v470
    %545 = vst [vmem:[#allocation2 + $0xd8] sm:$0xff] %v472
    %546 = vst [vmem:[#allocation2 + $0xe0] sm:$0xff] %v361
    %547 = vst [vmem:[#allocation2 + $0xe8] sm:$0xff] %v363
    %548 = vst [vmem:[#allocation2 + $0xf0] sm:$0xff] %v474
    %549 = vst [vmem:[#allocation2 + $0xf8] sm:$0xff] %v476
    %550 = vst [vmem:[#allocation2 + $0x100] sm:$0xff] %v367
    %551 = vst [vmem:[#allocation2 + $0x108] sm:$0xff] %v369
    %552 = vst [vmem:[#allocation2 + $0x110] sm:$0xff] %v480
    %553 = vst [vmem:[#allocation2 + $0x118] sm:$0xff] %v482
    %554 = vst [vmem:[#allocation2 + $0x120] sm:$0xff] %v371
    %555 = vst [vmem:[#allocation2 + $0x128] sm:$0xff] %v373
    %556 = vst [vmem:[#allocation2 + $0x130] sm:$0xff] %v484
    %557 = vst [vmem:[#allocation2 + $0x138] sm:$0xff] %v486
    %558 = vst [vmem:[#allocation2 + $0x140] sm:$0xff] %v377
    %559 = vst [vmem:[#allocation2 + $0x148] sm:$0xff] %v379
    %560 = vst [vmem:[#allocation2 + $0x150] sm:$0xff] %v490
    %561 = vst [vmem:[#allocation2 + $0x158] sm:$0xff] %v492
    %562 = vst [vmem:[#allocation2 + $0x160] sm:$0xff] %v381
    %563 = vst [vmem:[#allocation2 + $0x168] sm:$0xff] %v383
    %564 = vst [vmem:[#allocation2 + $0x170] sm:$0xff] %v494
    %565 = vst [vmem:[#allocation2 + $0x178] sm:$0xff] %v496
    %566 = vst [vmem:[#allocation2 + $0x180] sm:$0xff] %v387
    %567 = vst [vmem:[#allocation2 + $0x188] sm:$0xff] %v389
    %568 = vst [vmem:[#allocation2 + $0x190] sm:$0xff] %v500
    %569 = vst [vmem:[#allocation2 + $0x198] sm:$0xff] %v502
    %570 = vst [vmem:[#allocation2 + $0x1a0] sm:$0xff] %v391
    %571 = vst [vmem:[#allocation2 + $0x1a8] sm:$0xff] %v393
    %572 = vst [vmem:[#allocation2 + $0x1b0] sm:$0xff] %v504
    %573 = vst [vmem:[#allocation2 + $0x1b8] sm:$0xff] %v506
    %574 = vst [vmem:[#allocation2 + $0x1c0] sm:$0xff] %v397
    %575 = vst [vmem:[#allocation2 + $0x1c8] sm:$0xff] %v399
    %576 = vst [vmem:[#allocation2 + $0x1d0] sm:$0xff] %v510
    %577 = vst [vmem:[#allocation2 + $0x1d8] sm:$0xff] %v512
    %578 = vst [vmem:[#allocation2 + $0x1e0] sm:$0xff] %v401
    %579 = vst [vmem:[#allocation2 + $0x1e8] sm:$0xff] %v403
    %580 = vst [vmem:[#allocation2 + $0x1f0] sm:$0xff] %v514
    %581 = vst [vmem:[#allocation2 + $0x1f8] sm:$0xff] %v516
    %v582 = vld [vmem:[#allocation6] sm:$0xff]
    %v583 = vld [vmem:[#allocation6 + $0x8] sm:$0xff]
    %v584 = vld [vmem:[#allocation8] sm:$0xff]
    %v585 = vld [vmem:[#allocation8 + $0x8] sm:$0xff]
    %s586 = smul.u32 0, 4
    %s587 = smul.addr %s586, 8
    %s588 = scalar_lea.vmem [#allocation2], %s587
    %v589 = vld [vmem:[%s588] sm:$0xff]
    %v590 = vld [vmem:[%s588 + $0x8] sm:$0xff]
    %v591 = vld [vmem:[%s588 + $0x10] sm:$0xff]
    %v592 = vld [vmem:[%s588 + $0x18] sm:$0xff]
    %v593 = vld [vmem:[%s588 + $0x20] sm:$0xff]
    %v594 = vld [vmem:[%s588 + $0x28] sm:$0xff]
    %v595 = vld [vmem:[%s588 + $0x30] sm:$0xff]
    %v596 = vld [vmem:[%s588 + $0x38] sm:$0xff]
    %v597 = vpack.c.bf16 %v583, %v582
    %v630 = vunpack.c.l.b16 %v137
    %v631 = vunpack.c.h.b16 %v137
    %v632 = vunpack.c.l.b16 %v138
    %v633 = vunpack.c.h.b16 %v138
    %v634 = vunpack.c.l.b16 %v139
    %v635 = vunpack.c.h.b16 %v139
    %v636 = vunpack.c.l.b16 %v140
    %v637 = vunpack.c.h.b16 %v140
    %v638 = vunpack.c.l.b16 %v141
    %v639 = vunpack.c.h.b16 %v141
    %v640 = vunpack.c.l.b16 %v142
    %v641 = vunpack.c.h.b16 %v142
    %v642 = vunpack.c.l.b16 %v143
    %v643 = vunpack.c.h.b16 %v143
    %v644 = vunpack.c.l.b16 %v144
    %v645 = vunpack.c.h.b16 %v144
    %v646 = vunpack.c.l.b16 %v145
    %v647 = vunpack.c.h.b16 %v145
    %v648 = vunpack.c.l.b16 %v146
    %v649 = vunpack.c.h.b16 %v146
    %v650 = vunpack.c.l.b16 %v147
    %v651 = vunpack.c.h.b16 %v147
    %v652 = vunpack.c.l.b16 %v148
    %v653 = vunpack.c.h.b16 %v148
    %v654 = vunpack.c.l.b16 %v149
    %v655 = vunpack.c.h.b16 %v149
    %v656 = vunpack.c.l.b16 %v150
    %v657 = vunpack.c.h.b16 %v150
    %v658 = vunpack.c.l.b16 %v151
    %v659 = vunpack.c.h.b16 %v151
    %v660 = vunpack.c.l.b16 %v152
    %v661 = vunpack.c.h.b16 %v152
    %v662 = vunpack.c.l.b16 %v153
    %v663 = vunpack.c.h.b16 %v153
    %v664 = vunpack.c.l.b16 %v154
    %v665 = vunpack.c.h.b16 %v154
    %v666 = vunpack.c.l.b16 %v155
    %v667 = vunpack.c.h.b16 %v155
    %v668 = vunpack.c.l.b16 %v156
    %v669 = vunpack.c.h.b16 %v156
    %v670 = vunpack.c.l.b16 %v157
    %v671 = vunpack.c.h.b16 %v157
    %v672 = vunpack.c.l.b16 %v158
    %v673 = vunpack.c.h.b16 %v158
    %v674 = vunpack.c.l.b16 %v159
    %v675 = vunpack.c.h.b16 %v159
    %v676 = vunpack.c.l.b16 %v160
    %v677 = vunpack.c.h.b16 %v160
    %v678 = vunpack.c.l.b16 %v161
    %v679 = vunpack.c.h.b16 %v161
    %v680 = vunpack.c.l.b16 %v162
    %v681 = vunpack.c.h.b16 %v162
    %v682 = vunpack.c.l.b16 %v163
    %v683 = vunpack.c.h.b16 %v163
    %v684 = vunpack.c.l.b16 %v164
    %v685 = vunpack.c.h.b16 %v164
    %v686 = vunpack.c.l.b16 %v165
    %v687 = vunpack.c.h.b16 %v165
    %v688 = vunpack.c.l.b16 %v166
    %v689 = vunpack.c.h.b16 %v166
    %v690 = vunpack.c.l.b16 %v167
    %v691 = vunpack.c.h.b16 %v167
    %v692 = vunpack.c.l.b16 %v168
    %v693 = vunpack.c.h.b16 %v168
    %v694 = vpack.c.b16 %v634, %v630
    %v695 = vpack.c.b16 %v635, %v631
    %v696 = vpack.c.b16 %v636, %v632
    %v697 = vpack.c.b16 %v637, %v633
    %v698 = vpack.c.b16 %v642, %v638
    %v699 = vpack.c.b16 %v643, %v639
    %v700 = vpack.c.b16 %v644, %v640
    %v701 = vpack.c.b16 %v645, %v641
    %v702 = vpack.c.b16 %v650, %v646
    %v703 = vpack.c.b16 %v651, %v647
    %v704 = vpack.c.b16 %v652, %v648
    %v705 = vpack.c.b16 %v653, %v649
    %v706 = vpack.c.b16 %v658, %v654
    %v707 = vpack.c.b16 %v659, %v655
    %v708 = vpack.c.b16 %v660, %v656
    %v709 = vpack.c.b16 %v661, %v657
    %v710 = vpack.c.b16 %v666, %v662
    %v711 = vpack.c.b16 %v667, %v663
    %v712 = vpack.c.b16 %v668, %v664
    %v713 = vpack.c.b16 %v669, %v665
    %v714 = vpack.c.b16 %v674, %v670
    %v715 = vpack.c.b16 %v675, %v671
    %v716 = vpack.c.b16 %v676, %v672
    %v717 = vpack.c.b16 %v677, %v673
    %v718 = vpack.c.b16 %v682, %v678
    %v719 = vpack.c.b16 %v683, %v679
    %v720 = vpack.c.b16 %v684, %v680
    %v721 = vpack.c.b16 %v685, %v681
    %v722 = vpack.c.b16 %v690, %v686
    %v723 = vpack.c.b16 %v691, %v687
    %v724 = vpack.c.b16 %v692, %v688
    %v725 = vpack.c.b16 %v693, %v689
    %758 = vmatprep.subr.bf16.mxu0 %v695
    %759 = vmatpush1.bf16.msra.mxu0 %v694
    %760 = vmatprep.subr.bf16.mxu0 %v699
    %761 = vmatpush1.bf16.msra.mxu0 %v698
    %762 = vmatprep.subr.bf16.mxu0 %v703
    %763 = vmatpush1.bf16.msra.mxu0 %v702
    %764 = vmatprep.subr.bf16.mxu0 %v707
    %765 = vmatpush1.bf16.msra.mxu0 %v706
    %766 = vmatprep.subr.bf16.mxu0 %v711
    %767 = vmatpush1.bf16.msra.mxu0 %v710
    %768 = vmatprep.subr.bf16.mxu0 %v715
    %769 = vmatpush1.bf16.msra.mxu0 %v714
    %770 = vmatprep.subr.bf16.mxu0 %v719
    %771 = vmatpush1.bf16.msra.mxu0 %v718
    %772 = vmatprep.subr.bf16.mxu0 %v723
    %773 = vmatpush1.bf16.msra.mxu0 %v722
    %774 = vmatprep.subr.bf16.mxu0 0
    %775 = vmatpush1.bf16.msra.mxu0 0
    %776 = vmatprep.subr.bf16.mxu0 0
    %777 = vmatpush1.bf16.msra.mxu0 0
    %778 = vmatprep.subr.bf16.mxu0 0
    %779 = vmatpush1.bf16.msra.mxu0 0
    %780 = vmatprep.subr.bf16.mxu0 0
    %781 = vmatpush1.bf16.msra.mxu0 0
    %782 = vmatprep.subr.bf16.mxu0 0
    %783 = vmatpush1.bf16.msra.mxu0 0
    %784 = vmatprep.subr.bf16.mxu0 0
    %785 = vmatpush1.bf16.msra.mxu0 0
    %786 = vmatprep.subr.bf16.mxu0 0
    %787 = vmatpush1.bf16.msra.mxu0 0
    %788 = vmatprep.subr.bf16.mxu0 0
    %789 = vmatpush1.bf16.msra.mxu0 0
    %790 = vmatprep.mubr.bf16.mxu0 0
    %791 = vmatmul.mubr.bf16.gmra.mrb[0].mxu0 %v597
    %v792 = vpop.f32.mrb[0].mxu0
    %v793 = vadd.f32 0.0, %v792
    %v794 = vpop.f32.mrb[0].mxu0
    %v795 = vadd.f32 0.0, %v794
    %v796 = vpop.f32.mrb[0].mxu0
    %v797 = vadd.f32 0.0, %v796
    %v798 = vpop.f32.mrb[0].mxu0
    %v799 = vadd.f32 0.0, %v798
    %800 = vdwg.mxu0
    %801 = vmatprep.subr.bf16.mxu0 %v697
    %802 = vmatpush1.bf16.msra.mxu0 %v696
    %803 = vmatprep.subr.bf16.mxu0 %v701
    %804 = vmatpush1.bf16.msra.mxu0 %v700
    %805 = vmatprep.subr.bf16.mxu0 %v705
    %806 = vmatpush1.bf16.msra.mxu0 %v704
    %807 = vmatprep.subr.bf16.mxu0 %v709
    %808 = vmatpush1.bf16.msra.mxu0 %v708
    %809 = vmatprep.subr.bf16.mxu0 %v713
    %810 = vmatpush1.bf16.msra.mxu0 %v712
    %811 = vmatprep.subr.bf16.mxu0 %v717
    %812 = vmatpush1.bf16.msra.mxu0 %v716
    %813 = vmatprep.subr.bf16.mxu0 %v721
    %814 = vmatpush1.bf16.msra.mxu0 %v720
    %815 = vmatprep.subr.bf16.mxu0 %v725
    %816 = vmatpush1.bf16.msra.mxu0 %v724
    %817 = vmatprep.subr.bf16.mxu0 0
    %818 = vmatpush1.bf16.msra.mxu0 0
    %819 = vmatprep.subr.bf16.mxu0 0
    %820 = vmatpush1.bf16.msra.mxu0 0
    %821 = vmatprep.subr.bf16.mxu0 0
    %822 = vmatpush1.bf16.msra.mxu0 0
    %823 = vmatprep.subr.bf16.mxu0 0
    %824 = vmatpush1.bf16.msra.mxu0 0
    %825 = vmatprep.subr.bf16.mxu0 0
    %826 = vmatpush1.bf16.msra.mxu0 0
    %827 = vmatprep.subr.bf16.mxu0 0
    %828 = vmatpush1.bf16.msra.mxu0 0
    %829 = vmatprep.subr.bf16.mxu0 0
    %830 = vmatpush1.bf16.msra.mxu0 0
    %831 = vmatprep.subr.bf16.mxu0 0
    %832 = vmatpush1.bf16.msra.mxu0 0
    %833 = vmatprep.mubr.bf16.mxu0 0
    %834 = vmatmul.mubr.bf16.gmra.mrb[0].mxu0 %v597
    %v835 = vpop.f32.mrb[0].mxu0
    %v836 = vadd.f32 0.0, %v835
    %v837 = vpop.f32.mrb[0].mxu0
    %v838 = vadd.f32 0.0, %v837
    %v839 = vpop.f32.mrb[0].mxu0
    %v840 = vadd.f32 0.0, %v839
    %v841 = vpop.f32.mrb[0].mxu0
    %v842 = vadd.f32 0.0, %v841
    %843 = vdwg.mxu0
    %v844 = vadd.f32 %v589, %v793
    %v845 = vadd.f32 %v590, %v795
    %v846 = vadd.f32 %v591, %v836
    %v847 = vadd.f32 %v592, %v838
    %v848 = vadd.f32 %v593, %v797
    %v849 = vadd.f32 %v594, %v799
    %v850 = vadd.f32 %v595, %v840
    %v851 = vadd.f32 %v596, %v842
    %v852 = vmul.f32 %v844, 0.5
    %v853 = vmul.f32 %v848, 0.5
    %v854 = vtanh.pop %v852
    %v855 = vtanh.pop %v853
    %v856 = vadd.f32 %v854, 1.0
    %v857 = vadd.f32 %v855, 1.0
    %v858 = vmul.f32 %v856, 0.5
    %v859 = vmul.f32 %v857, 0.5
    %v860 = vmul.f32 %v845, 0.5
    %v861 = vmul.f32 %v849, 0.5
    %v862 = vtanh.pop %v860
    %v863 = vtanh.pop %v861
    %v864 = vadd.f32 %v862, 1.0
    %v865 = vadd.f32 %v863, 1.0
    %v866 = vmul.f32 %v864, 0.5
    %v867 = vmul.f32 %v865, 0.5
    %v868 = vtanh.pop %v846
    %v869 = vtanh.pop %v850
    %v870 = vmul.f32 %v847, 0.5
    %v871 = vmul.f32 %v851, 0.5
    %v872 = vtanh.pop %v870
    %v873 = vtanh.pop %v871
    %v874 = vadd.f32 %v872, 1.0
    %v875 = vadd.f32 %v873, 1.0
    %v876 = vmul.f32 %v874, 0.5
    %v877 = vmul.f32 %v875, 0.5
    %v878 = vmul.f32 %v866, %v584
    %v879 = vmul.f32 %v867, %v585
    %v880 = vmul.f32 %v858, %v868
    %v881 = vmul.f32 %v859, %v869
    %v882 = vadd.f32 %v878, %v880
    %v883 = vadd.f32 %v879, %v881
    %v884 = vtanh.pop %v882
    %v885 = vtanh.pop %v883
    %v886 = vmul.f32 %v876, %v884
    %v887 = vmul.f32 %v877, %v885
    %v888 = vpack.c.bf16 %v887, %v886
    %v890 = vunpack.c.l.b16 %v888
    %v891 = vunpack.c.h.b16 %v888
    %v892 = vpack.c.b16 %v890, %v890
    %v893 = vpack.c.b16 %v891, %v891
    %896 = vst [vmem:[#allocation15] sm:$0xf] %v892
    %897 = vst [vmem:[#allocation15 + $0x4] sm:$0xf] %v893
    %s898 = smul.u32 2, 4
    %s899 = smul.addr %s898, 8
    %s900 = scalar_lea.vmem [#allocation2], %s899
    %v901 = vld [vmem:[%s900] sm:$0xff]
    %v902 = vld [vmem:[%s900 + $0x8] sm:$0xff]
    %v903 = vld [vmem:[%s900 + $0x10] sm:$0xff]
    %v904 = vld [vmem:[%s900 + $0x18] sm:$0xff]
    %v905 = vld [vmem:[%s900 + $0x20] sm:$0xff]
    %v906 = vld [vmem:[%s900 + $0x28] sm:$0xff]
    %v907 = vld [vmem:[%s900 + $0x30] sm:$0xff]
    %v908 = vld [vmem:[%s900 + $0x38] sm:$0xff]
    %909 = vmatprep.subr.bf16.mxu0 %v695
    %910 = vmatpush1.bf16.msra.mxu0 %v694
    %911 = vmatprep.subr.bf16.mxu0 %v699
    %912 = vmatpush1.bf16.msra.mxu0 %v698
    %913 = vmatprep.subr.bf16.mxu0 %v703
    %914 = vmatpush1.bf16.msra.mxu0 %v702
    %915 = vmatprep.subr.bf16.mxu0 %v707
    %916 = vmatpush1.bf16.msra.mxu0 %v706
    %917 = vmatprep.subr.bf16.mxu0 %v711
    %918 = vmatpush1.bf16.msra.mxu0 %v710
    %919 = vmatprep.subr.bf16.mxu0 %v715
    %920 = vmatpush1.bf16.msra.mxu0 %v714
    %921 = vmatprep.subr.bf16.mxu0 %v719
    %922 = vmatpush1.bf16.msra.mxu0 %v718
    %923 = vmatprep.subr.bf16.mxu0 %v723
    %924 = vmatpush1.bf16.msra.mxu0 %v722
    %925 = vmatprep.subr.bf16.mxu0 0
    %926 = vmatpush1.bf16.msra.mxu0 0
    %927 = vmatprep.subr.bf16.mxu0 0
    %928 = vmatpush1.bf16.msra.mxu0 0
    %929 = vmatprep.subr.bf16.mxu0 0
    %930 = vmatpush1.bf16.msra.mxu0 0
    %931 = vmatprep.subr.bf16.mxu0 0
    %932 = vmatpush1.bf16.msra.mxu0 0
    %933 = vmatprep.subr.bf16.mxu0 0
    %934 = vmatpush1.bf16.msra.mxu0 0
    %935 = vmatprep.subr.bf16.mxu0 0
    %936 = vmatpush1.bf16.msra.mxu0 0
    %937 = vmatprep.subr.bf16.mxu0 0
    %938 = vmatpush1.bf16.msra.mxu0 0
    %939 = vmatprep.subr.bf16.mxu0 0
    %940 = vmatpush1.bf16.msra.mxu0 0
    %941 = vmatprep.mubr.bf16.mxu0 0
    %942 = vmatmul.mubr.bf16.gmra.mrb[0].mxu0 %v888
    %v943 = vpop.f32.mrb[0].mxu0
    %v944 = vadd.f32 0.0, %v943
    %v945 = vpop.f32.mrb[0].mxu0
    %v946 = vadd.f32 0.0, %v945
    %v947 = vpop.f32.mrb[0].mxu0
    %v948 = vadd.f32 0.0, %v947
    %v949 = vpop.f32.mrb[0].mxu0
    %v950 = vadd.f32 0.0, %v949
    %951 = vdwg.mxu0
    %952 = vmatprep.subr.bf16.mxu0 %v697
    %953 = vmatpush1.bf16.msra.mxu0 %v696
    %954 = vmatprep.subr.bf16.mxu0 %v701
    %955 = vmatpush1.bf16.msra.mxu0 %v700
    %956 = vmatprep.subr.bf16.mxu0 %v705
    %957 = vmatpush1.bf16.msra.mxu0 %v704
    %958 = vmatprep.subr.bf16.mxu0 %v709
    %959 = vmatpush1.bf16.msra.mxu0 %v708
    %960 = vmatprep.subr.bf16.mxu0 %v713
    %961 = vmatpush1.bf16.msra.mxu0 %v712
    %962 = vmatprep.subr.bf16.mxu0 %v717
    %963 = vmatpush1.bf16.msra.mxu0 %v716
    %964 = vmatprep.subr.bf16.mxu0 %v721
    %965 = vmatpush1.bf16.msra.mxu0 %v720
    %966 = vmatprep.subr.bf16.mxu0 %v725
    %967 = vmatpush1.bf16.msra.mxu0 %v724
    %968 = vmatprep.subr.bf16.mxu0 0
    %969 = vmatpush1.bf16.msra.mxu0 0
    %970 = vmatprep.subr.bf16.mxu0 0
    %971 = vmatpush1.bf16.msra.mxu0 0
    %972 = vmatprep.subr.bf16.mxu0 0
    %973 = vmatpush1.bf16.msra.mxu0 0
    %974 = vmatprep.subr.bf16.mxu0 0
    %975 = vmatpush1.bf16.msra.mxu0 0
    %976 = vmatprep.subr.bf16.mxu0 0
    %977 = vmatpush1.bf16.msra.mxu0 0
    %978 = vmatprep.subr.bf16.mxu0 0
    %979 = vmatpush1.bf16.msra.mxu0 0
    %980 = vmatprep.subr.bf16.mxu0 0
    %981 = vmatpush1.bf16.msra.mxu0 0
    %982 = vmatprep.subr.bf16.mxu0 0
    %983 = vmatpush1.bf16.msra.mxu0 0
    %984 = vmatprep.mubr.bf16.mxu0 0
    %985 = vmatmul.mubr.bf16.gmra.mrb[0].mxu0 %v888
    %v986 = vpop.f32.mrb[0].mxu0
    %v987 = vadd.f32 0.0, %v986
    %v988 = vpop.f32.mrb[0].mxu0
    %v989 = vadd.f32 0.0, %v988
    %v990 = vpop.f32.mrb[0].mxu0
    %v991 = vadd.f32 0.0, %v990
    %v992 = vpop.f32.mrb[0].mxu0
    %v993 = vadd.f32 0.0, %v992
    %994 = vdwg.mxu0
    %v995 = vadd.f32 %v901, %v944
    %v996 = vadd.f32 %v902, %v946
    %v997 = vadd.f32 %v903, %v987
    %v998 = vadd.f32 %v904, %v989
    %v999 = vadd.f32 %v905, %v948
    %v1000 = vadd.f32 %v906, %v950
    %v1001 = vadd.f32 %v907, %v991
    %v1002 = vadd.f32 %v908, %v993
    %v1003 = vmul.f32 %v995, 0.5
    %v1004 = vmul.f32 %v999, 0.5
    %v1005 = vtanh.pop %v1003
    %v1006 = vtanh.pop %v1004
    %v1007 = vadd.f32 %v1005, 1.0
    %v1008 = vadd.f32 %v1006, 1.0
    %v1009 = vmul.f32 %v1007, 0.5
    %v1010 = vmul.f32 %v1008, 0.5
    %v1011 = vmul.f32 %v996, 0.5
    %v1012 = vmul.f32 %v1000, 0.5
    %v1013 = vtanh.pop %v1011
    %v1014 = vtanh.pop %v1012
    %v1015 = vadd.f32 %v1013, 1.0
    %v1016 = vadd.f32 %v1014, 1.0
    %v1017 = vmul.f32 %v1015, 0.5
    %v1018 = vmul.f32 %v1016, 0.5
    %v1019 = vtanh.pop %v997
    %v1020 = vtanh.pop %v1001
    %v1021 = vmul.f32 %v998, 0.5
    %v1022 = vmul.f32 %v1002, 0.5
    %v1023 = vtanh.pop %v1021
    %v1024 = vtanh.pop %v1022
    %v1025 = vadd.f32 %v1023, 1.0
    %v1026 = vadd.f32 %v1024, 1.0
    %v1027 = vmul.f32 %v1025, 0.5
    %v1028 = vmul.f32 %v1026, 0.5
    %v1029 = vmul.f32 %v1017, %v882
    %v1030 = vmul.f32 %v1018, %v883
    %v1031 = vmul.f32 %v1009, %v1019
    %v1032 = vmul.f32 %v1010, %v1020
    %v1033 = vadd.f32 %v1029, %v1031
    %v1034 = vadd.f32 %v1030, %v1032
    %v1035 = vtanh.pop %v1033
    %v1036 = vtanh.pop %v1034
    %v1037 = vmul.f32 %v1027, %v1035
    %v1038 = vmul.f32 %v1028, %v1036
    %v1039 = vpack.c.bf16 %v1038, %v1037
    %v1041 = vunpack.c.l.b16 %v1039
    %v1042 = vunpack.c.h.b16 %v1039
    %v1043 = vpack.c.b16 %v1041, %v1041
    %v1044 = vpack.c.b16 %v1042, %v1042
    %s1047 = scalar_lea.vmem [#allocation15], 8
    %1048 = vst [vmem:[%s1047] sm:$0xf] %v1043
    %1049 = vst [vmem:[%s1047 + $0x4] sm:$0xf] %v1044
    %s1050 = smul.u32 4, 4
    %s1051 = smul.addr %s1050, 8
    %s1052 = scalar_lea.vmem [#allocation2], %s1051
    %v1053 = vld [vmem:[%s1052] sm:$0xff]
    %v1054 = vld [vmem:[%s1052 + $0x8] sm:$0xff]
    %v1055 = vld [vmem:[%s1052 + $0x10] sm:$0xff]
    %v1056 = vld [vmem:[%s1052 + $0x18] sm:$0xff]
    %v1057 = vld [vmem:[%s1052 + $0x20] sm:$0xff]
    %v1058 = vld [vmem:[%s1052 + $0x28] sm:$0xff]
    %v1059 = vld [vmem:[%s1052 + $0x30] sm:$0xff]
    %v1060 = vld [vmem:[%s1052 + $0x38] sm:$0xff]
    %1061 = vmatprep.subr.bf16.mxu0 %v695
    %1062 = vmatpush1.bf16.msra.mxu0 %v694
    %1063 = vmatprep.subr.bf16.mxu0 %v699
    %1064 = vmatpush1.bf16.msra.mxu0 %v698
    %1065 = vmatprep.subr.bf16.mxu0 %v703
    %1066 = vmatpush1.bf16.msra.mxu0 %v702
    %1067 = vmatprep.subr.bf16.mxu0 %v707
    %1068 = vmatpush1.bf16.msra.mxu0 %v706
    %1069 = vmatprep.subr.bf16.mxu0 %v711
    %1070 = vmatpush1.bf16.msra.mxu0 %v710
    %1071 = vmatprep.subr.bf16.mxu0 %v715
    %1072 = vmatpush1.bf16.msra.mxu0 %v714
    %1073 = vmatprep.subr.bf16.mxu0 %v719
    %1074 = vmatpush1.bf16.msra.mxu0 %v718
    %1075 = vmatprep.subr.bf16.mxu0 %v723
    %1076 = vmatpush1.bf16.msra.mxu0 %v722
    %1077 = vmatprep.subr.bf16.mxu0 0
    %1078 = vmatpush1.bf16.msra.mxu0 0
    %1079 = vmatprep.subr.bf16.mxu0 0
    %1080 = vmatpush1.bf16.msra.mxu0 0
    %1081 = vmatprep.subr.bf16.mxu0 0
    %1082 = vmatpush1.bf16.msra.mxu0 0
    %1083 = vmatprep.subr.bf16.mxu0 0
    %1084 = vmatpush1.bf16.msra.mxu0 0
    %1085 = vmatprep.subr.bf16.mxu0 0
    %1086 = vmatpush1.bf16.msra.mxu0 0
    %1087 = vmatprep.subr.bf16.mxu0 0
    %1088 = vmatpush1.bf16.msra.mxu0 0
    %1089 = vmatprep.subr.bf16.mxu0 0
    %1090 = vmatpush1.bf16.msra.mxu0 0
    %1091 = vmatprep.subr.bf16.mxu0 0
    %1092 = vmatpush1.bf16.msra.mxu0 0
    %1093 = vmatprep.mubr.bf16.mxu0 0
    %1094 = vmatmul.mubr.bf16.gmra.mrb[0].mxu0 %v1039
    %v1095 = vpop.f32.mrb[0].mxu0
    %v1096 = vadd.f32 0.0, %v1095
    %v1097 = vpop.f32.mrb[0].mxu0
    %v1098 = vadd.f32 0.0, %v1097
    %v1099 = vpop.f32.mrb[0].mxu0
    %v1100 = vadd.f32 0.0, %v1099
    %v1101 = vpop.f32.mrb[0].mxu0
    %v1102 = vadd.f32 0.0, %v1101
    %1103 = vdwg.mxu0
    %1104 = vmatprep.subr.bf16.mxu0 %v697
    %1105 = vmatpush1.bf16.msra.mxu0 %v696
    %1106 = vmatprep.subr.bf16.mxu0 %v701
    %1107 = vmatpush1.bf16.msra.mxu0 %v700
    %1108 = vmatprep.subr.bf16.mxu0 %v705
    %1109 = vmatpush1.bf16.msra.mxu0 %v704
    %1110 = vmatprep.subr.bf16.mxu0 %v709
    %1111 = vmatpush1.bf16.msra.mxu0 %v708
    %1112 = vmatprep.subr.bf16.mxu0 %v713
    %1113 = vmatpush1.bf16.msra.mxu0 %v712
    %1114 = vmatprep.subr.bf16.mxu0 %v717
    %1115 = vmatpush1.bf16.msra.mxu0 %v716
    %1116 = vmatprep.subr.bf16.mxu0 %v721
    %1117 = vmatpush1.bf16.msra.mxu0 %v720
    %1118 = vmatprep.subr.bf16.mxu0 %v725
    %1119 = vmatpush1.bf16.msra.mxu0 %v724
    %1120 = vmatprep.subr.bf16.mxu0 0
    %1121 = vmatpush1.bf16.msra.mxu0 0
    %1122 = vmatprep.subr.bf16.mxu0 0
    %1123 = vmatpush1.bf16.msra.mxu0 0
    %1124 = vmatprep.subr.bf16.mxu0 0
    %1125 = vmatpush1.bf16.msra.mxu0 0
    %1126 = vmatprep.subr.bf16.mxu0 0
    %1127 = vmatpush1.bf16.msra.mxu0 0
    %1128 = vmatprep.subr.bf16.mxu0 0
    %1129 = vmatpush1.bf16.msra.mxu0 0
    %1130 = vmatprep.subr.bf16.mxu0 0
    %1131 = vmatpush1.bf16.msra.mxu0 0
    %1132 = vmatprep.subr.bf16.mxu0 0
    %1133 = vmatpush1.bf16.msra.mxu0 0
    %1134 = vmatprep.subr.bf16.mxu0 0
    %1135 = vmatpush1.bf16.msra.mxu0 0
    %1136 = vmatprep.mubr.bf16.mxu0 0
    %1137 = vmatmul.mubr.bf16.gmra.mrb[0].mxu0 %v1039
    %v1138 = vpop.f32.mrb[0].mxu0
    %v1139 = vadd.f32 0.0, %v1138
    %v1140 = vpop.f32.mrb[0].mxu0
    %v1141 = vadd.f32 0.0, %v1140
    %v1142 = vpop.f32.mrb[0].mxu0
    %v1143 = vadd.f32 0.0, %v1142
    %v1144 = vpop.f32.mrb[0].mxu0
    %v1145 = vadd.f32 0.0, %v1144
    %1146 = vdwg.mxu0
    %v1147 = vadd.f32 %v1053, %v1096
    %v1148 = vadd.f32 %v1054, %v1098
    %v1149 = vadd.f32 %v1055, %v1139
    %v1150 = vadd.f32 %v1056, %v1141
    %v1151 = vadd.f32 %v1057, %v1100
    %v1152 = vadd.f32 %v1058, %v1102
    %v1153 = vadd.f32 %v1059, %v1143
    %v1154 = vadd.f32 %v1060, %v1145
    %v1155 = vmul.f32 %v1147, 0.5
    %v1156 = vmul.f32 %v1151, 0.5
    %v1157 = vtanh.pop %v1155
    %v1158 = vtanh.pop %v1156
    %v1159 = vadd.f32 %v1157, 1.0
    %v1160 = vadd.f32 %v1158, 1.0
    %v1161 = vmul.f32 %v1159, 0.5
    %v1162 = vmul.f32 %v1160, 0.5
    %v1163 = vmul.f32 %v1148, 0.5
    %v1164 = vmul.f32 %v1152, 0.5
    %v1165 = vtanh.pop %v1163
    %v1166 = vtanh.pop %v1164
    %v1167 = vadd.f32 %v1165, 1.0
    %v1168 = vadd.f32 %v1166, 1.0
    %v1169 = vmul.f32 %v1167, 0.5
    %v1170 = vmul.f32 %v1168, 0.5
    %v1171 = vtanh.pop %v1149
    %v1172 = vtanh.pop %v1153
    %v1173 = vmul.f32 %v1150, 0.5
    %v1174 = vmul.f32 %v1154, 0.5
    %v1175 = vtanh.pop %v1173
    %v1176 = vtanh.pop %v1174
    %v1177 = vadd.f32 %v1175, 1.0
    %v1178 = vadd.f32 %v1176, 1.0
    %v1179 = vmul.f32 %v1177, 0.5
    %v1180 = vmul.f32 %v1178, 0.5
    %v1181 = vmul.f32 %v1169, %v1033
    %v1182 = vmul.f32 %v1170, %v1034
    %v1183 = vmul.f32 %v1161, %v1171
    %v1184 = vmul.f32 %v1162, %v1172
    %v1185 = vadd.f32 %v1181, %v1183
    %v1186 = vadd.f32 %v1182, %v1184
    %v1187 = vtanh.pop %v1185
    %v1188 = vtanh.pop %v1186
    %v1189 = vmul.f32 %v1179, %v1187
    %v1190 = vmul.f32 %v1180, %v1188
    %v1191 = vpack.c.bf16 %v1190, %v1189
    %v1193 = vunpack.c.l.b16 %v1191
    %v1194 = vunpack.c.h.b16 %v1191
    %v1195 = vpack.c.b16 %v1193, %v1193
    %v1196 = vpack.c.b16 %v1194, %v1194
    %s1199 = scalar_lea.vmem [#allocation15], 16
    %1200 = vst [vmem:[%s1199] sm:$0xf] %v1195
    %1201 = vst [vmem:[%s1199 + $0x4] sm:$0xf] %v1196
    %s1202 = smul.u32 6, 4
    %s1203 = smul.addr %s1202, 8
    %s1204 = scalar_lea.vmem [#allocation2], %s1203
    %v1205 = vld [vmem:[%s1204] sm:$0xff]
    %v1206 = vld [vmem:[%s1204 + $0x8] sm:$0xff]
    %v1207 = vld [vmem:[%s1204 + $0x10] sm:$0xff]
    %v1208 = vld [vmem:[%s1204 + $0x18] sm:$0xff]
    %v1209 = vld [vmem:[%s1204 + $0x20] sm:$0xff]
    %v1210 = vld [vmem:[%s1204 + $0x28] sm:$0xff]
    %v1211 = vld [vmem:[%s1204 + $0x30] sm:$0xff]
    %v1212 = vld [vmem:[%s1204 + $0x38] sm:$0xff]
    %1213 = vmatprep.subr.bf16.mxu0 %v695
    %1214 = vmatpush1.bf16.msra.mxu0 %v694
    %1215 = vmatprep.subr.bf16.mxu0 %v699
    %1216 = vmatpush1.bf16.msra.mxu0 %v698
    %1217 = vmatprep.subr.bf16.mxu0 %v703
    %1218 = vmatpush1.bf16.msra.mxu0 %v702
    %1219 = vmatprep.subr.bf16.mxu0 %v707
    %1220 = vmatpush1.bf16.msra.mxu0 %v706
    %1221 = vmatprep.subr.bf16.mxu0 %v711
    %1222 = vmatpush1.bf16.msra.mxu0 %v710
    %1223 = vmatprep.subr.bf16.mxu0 %v715
    %1224 = vmatpush1.bf16.msra.mxu0 %v714
    %1225 = vmatprep.subr.bf16.mxu0 %v719
    %1226 = vmatpush1.bf16.msra.mxu0 %v718
    %1227 = vmatprep.subr.bf16.mxu0 %v723
    %1228 = vmatpush1.bf16.msra.mxu0 %v722
    %1229 = vmatprep.subr.bf16.mxu0 0
    %1230 = vmatpush1.bf16.msra.mxu0 0
    %1231 = vmatprep.subr.bf16.mxu0 0
    %1232 = vmatpush1.bf16.msra.mxu0 0
    %1233 = vmatprep.subr.bf16.mxu0 0
    %1234 = vmatpush1.bf16.msra.mxu0 0
    %1235 = vmatprep.subr.bf16.mxu0 0
    %1236 = vmatpush1.bf16.msra.mxu0 0
    %1237 = vmatprep.subr.bf16.mxu0 0
    %1238 = vmatpush1.bf16.msra.mxu0 0
    %1239 = vmatprep.subr.bf16.mxu0 0
    %1240 = vmatpush1.bf16.msra.mxu0 0
    %1241 = vmatprep.subr.bf16.mxu0 0
    %1242 = vmatpush1.bf16.msra.mxu0 0
    %1243 = vmatprep.subr.bf16.mxu0 0
    %1244 = vmatpush1.bf16.msra.mxu0 0
    %1245 = vmatprep.mubr.bf16.mxu0 0
    %1246 = vmatmul.mubr.bf16.gmra.mrb[0].mxu0 %v1191
    %v1247 = vpop.f32.mrb[0].mxu0
    %v1248 = vadd.f32 0.0, %v1247
    %v1249 = vpop.f32.mrb[0].mxu0
    %v1250 = vadd.f32 0.0, %v1249
    %v1251 = vpop.f32.mrb[0].mxu0
    %v1252 = vadd.f32 0.0, %v1251
    %v1253 = vpop.f32.mrb[0].mxu0
    %v1254 = vadd.f32 0.0, %v1253
    %1255 = vdwg.mxu0
    %1256 = vmatprep.subr.bf16.mxu0 %v697
    %1257 = vmatpush1.bf16.msra.mxu0 %v696
    %1258 = vmatprep.subr.bf16.mxu0 %v701
    %1259 = vmatpush1.bf16.msra.mxu0 %v700
    %1260 = vmatprep.subr.bf16.mxu0 %v705
    %1261 = vmatpush1.bf16.msra.mxu0 %v704
    %1262 = vmatprep.subr.bf16.mxu0 %v709
    %1263 = vmatpush1.bf16.msra.mxu0 %v708
    %1264 = vmatprep.subr.bf16.mxu0 %v713
    %1265 = vmatpush1.bf16.msra.mxu0 %v712
    %1266 = vmatprep.subr.bf16.mxu0 %v717
    %1267 = vmatpush1.bf16.msra.mxu0 %v716
    %1268 = vmatprep.subr.bf16.mxu0 %v721
    %1269 = vmatpush1.bf16.msra.mxu0 %v720
    %1270 = vmatprep.subr.bf16.mxu0 %v725
    %1271 = vmatpush1.bf16.msra.mxu0 %v724
    %1272 = vmatprep.subr.bf16.mxu0 0
    %1273 = vmatpush1.bf16.msra.mxu0 0
    %1274 = vmatprep.subr.bf16.mxu0 0
    %1275 = vmatpush1.bf16.msra.mxu0 0
    %1276 = vmatprep.subr.bf16.mxu0 0
    %1277 = vmatpush1.bf16.msra.mxu0 0
    %1278 = vmatprep.subr.bf16.mxu0 0
    %1279 = vmatpush1.bf16.msra.mxu0 0
    %1280 = vmatprep.subr.bf16.mxu0 0
    %1281 = vmatpush1.bf16.msra.mxu0 0
    %1282 = vmatprep.subr.bf16.mxu0 0
    %1283 = vmatpush1.bf16.msra.mxu0 0
    %1284 = vmatprep.subr.bf16.mxu0 0
    %1285 = vmatpush1.bf16.msra.mxu0 0
    %1286 = vmatprep.subr.bf16.mxu0 0
    %1287 = vmatpush1.bf16.msra.mxu0 0
    %1288 = vmatprep.mubr.bf16.mxu0 0
    %1289 = vmatmul.mubr.bf16.gmra.mrb[0].mxu0 %v1191
    %v1290 = vpop.f32.mrb[0].mxu0
    %v1291 = vadd.f32 0.0, %v1290
    %v1292 = vpop.f32.mrb[0].mxu0
    %v1293 = vadd.f32 0.0, %v1292
    %v1294 = vpop.f32.mrb[0].mxu0
    %v1295 = vadd.f32 0.0, %v1294
    %v1296 = vpop.f32.mrb[0].mxu0
    %v1297 = vadd.f32 0.0, %v1296
    %1298 = vdwg.mxu0
    %v1299 = vadd.f32 %v1205, %v1248
    %v1300 = vadd.f32 %v1206, %v1250
    %v1301 = vadd.f32 %v1207, %v1291
    %v1302 = vadd.f32 %v1208, %v1293
    %v1303 = vadd.f32 %v1209, %v1252
    %v1304 = vadd.f32 %v1210, %v1254
    %v1305 = vadd.f32 %v1211, %v1295
    %v1306 = vadd.f32 %v1212, %v1297
    %v1307 = vmul.f32 %v1299, 0.5
    %v1308 = vmul.f32 %v1303, 0.5
    %v1309 = vtanh.pop %v1307
    %v1310 = vtanh.pop %v1308
    %v1311 = vadd.f32 %v1309, 1.0
    %v1312 = vadd.f32 %v1310, 1.0
    %v1313 = vmul.f32 %v1311, 0.5
    %v1314 = vmul.f32 %v1312, 0.5
    %v1315 = vmul.f32 %v1300, 0.5
    %v1316 = vmul.f32 %v1304, 0.5
    %v1317 = vtanh.pop %v1315
    %v1318 = vtanh.pop %v1316
    %v1319 = vadd.f32 %v1317, 1.0
    %v1320 = vadd.f32 %v1318, 1.0
    %v1321 = vmul.f32 %v1319, 0.5
    %v1322 = vmul.f32 %v1320, 0.5
    %v1323 = vtanh.pop %v1301
    %v1324 = vtanh.pop %v1305
    %v1325 = vmul.f32 %v1302, 0.5
    %v1326 = vmul.f32 %v1306, 0.5
    %v1327 = vtanh.pop %v1325
    %v1328 = vtanh.pop %v1326
    %v1329 = vadd.f32 %v1327, 1.0
    %v1330 = vadd.f32 %v1328, 1.0
    %v1331 = vmul.f32 %v1329, 0.5
    %v1332 = vmul.f32 %v1330, 0.5
    %v1333 = vmul.f32 %v1321, %v1185
    %v1334 = vmul.f32 %v1322, %v1186
    %v1335 = vmul.f32 %v1313, %v1323
    %v1336 = vmul.f32 %v1314, %v1324
    %v1337 = vadd.f32 %v1333, %v1335
    %v1338 = vadd.f32 %v1334, %v1336
    %v1339 = vtanh.pop %v1337
    %v1340 = vtanh.pop %v1338
    %v1341 = vmul.f32 %v1331, %v1339
    %v1342 = vmul.f32 %v1332, %v1340
    %v1343 = vpack.c.bf16 %v1342, %v1341
    %v1345 = vunpack.c.l.b16 %v1343
    %v1346 = vunpack.c.h.b16 %v1343
    %v1347 = vpack.c.b16 %v1345, %v1345
    %v1348 = vpack.c.b16 %v1346, %v1346
    %s1351 = scalar_lea.vmem [#allocation15], 24
    %1352 = vst [vmem:[%s1351] sm:$0xf] %v1347
    %1353 = vst [vmem:[%s1351 + $0x4] sm:$0xf] %v1348
    %s1354 = smul.u32 8, 4
    %s1355 = smul.addr %s1354, 8
    %s1356 = scalar_lea.vmem [#allocation2], %s1355
    %v1357 = vld [vmem:[%s1356] sm:$0xff]
    %v1358 = vld [vmem:[%s1356 + $0x8] sm:$0xff]
    %v1359 = vld [vmem:[%s1356 + $0x10] sm:$0xff]
    %v1360 = vld [vmem:[%s1356 + $0x18] sm:$0xff]
    %v1361 = vld [vmem:[%s1356 + $0x20] sm:$0xff]
    %v1362 = vld [vmem:[%s1356 + $0x28] sm:$0xff]
    %v1363 = vld [vmem:[%s1356 + $0x30] sm:$0xff]
    %v1364 = vld [vmem:[%s1356 + $0x38] sm:$0xff]
    %1365 = vmatprep.subr.bf16.mxu0 %v695
    %1366 = vmatpush1.bf16.msra.mxu0 %v694
    %1367 = vmatprep.subr.bf16.mxu0 %v699
    %1368 = vmatpush1.bf16.msra.mxu0 %v698
    %1369 = vmatprep.subr.bf16.mxu0 %v703
    %1370 = vmatpush1.bf16.msra.mxu0 %v702
    %1371 = vmatprep.subr.bf16.mxu0 %v707
    %1372 = vmatpush1.bf16.msra.mxu0 %v706
    %1373 = vmatprep.subr.bf16.mxu0 %v711
    %1374 = vmatpush1.bf16.msra.mxu0 %v710
    %1375 = vmatprep.subr.bf16.mxu0 %v715
    %1376 = vmatpush1.bf16.msra.mxu0 %v714
    %1377 = vmatprep.subr.bf16.mxu0 %v719
    %1378 = vmatpush1.bf16.msra.mxu0 %v718
    %1379 = vmatprep.subr.bf16.mxu0 %v723
    %1380 = vmatpush1.bf16.msra.mxu0 %v722
    %1381 = vmatprep.subr.bf16.mxu0 0
    %1382 = vmatpush1.bf16.msra.mxu0 0
    %1383 = vmatprep.subr.bf16.mxu0 0
    %1384 = vmatpush1.bf16.msra.mxu0 0
    %1385 = vmatprep.subr.bf16.mxu0 0
    %1386 = vmatpush1.bf16.msra.mxu0 0
    %1387 = vmatprep.subr.bf16.mxu0 0
    %1388 = vmatpush1.bf16.msra.mxu0 0
    %1389 = vmatprep.subr.bf16.mxu0 0
    %1390 = vmatpush1.bf16.msra.mxu0 0
    %1391 = vmatprep.subr.bf16.mxu0 0
    %1392 = vmatpush1.bf16.msra.mxu0 0
    %1393 = vmatprep.subr.bf16.mxu0 0
    %1394 = vmatpush1.bf16.msra.mxu0 0
    %1395 = vmatprep.subr.bf16.mxu0 0
    %1396 = vmatpush1.bf16.msra.mxu0 0
    %1397 = vmatprep.mubr.bf16.mxu0 0
    %1398 = vmatmul.mubr.bf16.gmra.mrb[0].mxu0 %v1343
    %v1399 = vpop.f32.mrb[0].mxu0
    %v1400 = vadd.f32 0.0, %v1399
    %v1401 = vpop.f32.mrb[0].mxu0
    %v1402 = vadd.f32 0.0, %v1401
    %v1403 = vpop.f32.mrb[0].mxu0
    %v1404 = vadd.f32 0.0, %v1403
    %v1405 = vpop.f32.mrb[0].mxu0
    %v1406 = vadd.f32 0.0, %v1405
    %1407 = vdwg.mxu0
    %1408 = vmatprep.subr.bf16.mxu0 %v697
    %1409 = vmatpush1.bf16.msra.mxu0 %v696
    %1410 = vmatprep.subr.bf16.mxu0 %v701
    %1411 = vmatpush1.bf16.msra.mxu0 %v700
    %1412 = vmatprep.subr.bf16.mxu0 %v705
    %1413 = vmatpush1.bf16.msra.mxu0 %v704
    %1414 = vmatprep.subr.bf16.mxu0 %v709
    %1415 = vmatpush1.bf16.msra.mxu0 %v708
    %1416 = vmatprep.subr.bf16.mxu0 %v713
    %1417 = vmatpush1.bf16.msra.mxu0 %v712
    %1418 = vmatprep.subr.bf16.mxu0 %v717
    %1419 = vmatpush1.bf16.msra.mxu0 %v716
    %1420 = vmatprep.subr.bf16.mxu0 %v721
    %1421 = vmatpush1.bf16.msra.mxu0 %v720
    %1422 = vmatprep.subr.bf16.mxu0 %v725
    %1423 = vmatpush1.bf16.msra.mxu0 %v724
    %1424 = vmatprep.subr.bf16.mxu0 0
    %1425 = vmatpush1.bf16.msra.mxu0 0
    %1426 = vmatprep.subr.bf16.mxu0 0
    %1427 = vmatpush1.bf16.msra.mxu0 0
    %1428 = vmatprep.subr.bf16.mxu0 0
    %1429 = vmatpush1.bf16.msra.mxu0 0
    %1430 = vmatprep.subr.bf16.mxu0 0
    %1431 = vmatpush1.bf16.msra.mxu0 0
    %1432 = vmatprep.subr.bf16.mxu0 0
    %1433 = vmatpush1.bf16.msra.mxu0 0
    %1434 = vmatprep.subr.bf16.mxu0 0
    %1435 = vmatpush1.bf16.msra.mxu0 0
    %1436 = vmatprep.subr.bf16.mxu0 0
    %1437 = vmatpush1.bf16.msra.mxu0 0
    %1438 = vmatprep.subr.bf16.mxu0 0
    %1439 = vmatpush1.bf16.msra.mxu0 0
    %1440 = vmatprep.mubr.bf16.mxu0 0
    %1441 = vmatmul.mubr.bf16.gmra.mrb[0].mxu0 %v1343
    %v1442 = vpop.f32.mrb[0].mxu0
    %v1443 = vadd.f32 0.0, %v1442
    %v1444 = vpop.f32.mrb[0].mxu0
    %v1445 = vadd.f32 0.0, %v1444
    %v1446 = vpop.f32.mrb[0].mxu0
    %v1447 = vadd.f32 0.0, %v1446
    %v1448 = vpop.f32.mrb[0].mxu0
    %v1449 = vadd.f32 0.0, %v1448
    %1450 = vdwg.mxu0
    %v1451 = vadd.f32 %v1357, %v1400
    %v1452 = vadd.f32 %v1358, %v1402
    %v1453 = vadd.f32 %v1359, %v1443
    %v1454 = vadd.f32 %v1360, %v1445
    %v1455 = vadd.f32 %v1361, %v1404
    %v1456 = vadd.f32 %v1362, %v1406
    %v1457 = vadd.f32 %v1363, %v1447
    %v1458 = vadd.f32 %v1364, %v1449
    %v1459 = vmul.f32 %v1451, 0.5
    %v1460 = vmul.f32 %v1455, 0.5
    %v1461 = vtanh.pop %v1459
    %v1462 = vtanh.pop %v1460
    %v1463 = vadd.f32 %v1461, 1.0
    %v1464 = vadd.f32 %v1462, 1.0
    %v1465 = vmul.f32 %v1463, 0.5
    %v1466 = vmul.f32 %v1464, 0.5
    %v1467 = vmul.f32 %v1452, 0.5
    %v1468 = vmul.f32 %v1456, 0.5
    %v1469 = vtanh.pop %v1467
    %v1470 = vtanh.pop %v1468
    %v1471 = vadd.f32 %v1469, 1.0
    %v1472 = vadd.f32 %v1470, 1.0
    %v1473 = vmul.f32 %v1471, 0.5
    %v1474 = vmul.f32 %v1472, 0.5
    %v1475 = vtanh.pop %v1453
    %v1476 = vtanh.pop %v1457
    %v1477 = vmul.f32 %v1454, 0.5
    %v1478 = vmul.f32 %v1458, 0.5
    %v1479 = vtanh.pop %v1477
    %v1480 = vtanh.pop %v1478
    %v1481 = vadd.f32 %v1479, 1.0
    %v1482 = vadd.f32 %v1480, 1.0
    %v1483 = vmul.f32 %v1481, 0.5
    %v1484 = vmul.f32 %v1482, 0.5
    %v1485 = vmul.f32 %v1473, %v1337
    %v1486 = vmul.f32 %v1474, %v1338
    %v1487 = vmul.f32 %v1465, %v1475
    %v1488 = vmul.f32 %v1466, %v1476
    %v1489 = vadd.f32 %v1485, %v1487
    %v1490 = vadd.f32 %v1486, %v1488
    %v1491 = vtanh.pop %v1489
    %v1492 = vtanh.pop %v1490
    %v1493 = vmul.f32 %v1483, %v1491
    %v1494 = vmul.f32 %v1484, %v1492
    %v1495 = vpack.c.bf16 %v1494, %v1493
    %v1497 = vunpack.c.l.b16 %v1495
    %v1498 = vunpack.c.h.b16 %v1495
    %v1499 = vpack.c.b16 %v1497, %v1497
    %v1500 = vpack.c.b16 %v1498, %v1498
    %s1503 = scalar_lea.vmem [#allocation15], 32
    %1504 = vst [vmem:[%s1503] sm:$0xf] %v1499
    %1505 = vst [vmem:[%s1503 + $0x4] sm:$0xf] %v1500
    %s1506 = smul.u32 10, 4
    %s1507 = smul.addr %s1506, 8
    %s1508 = scalar_lea.vmem [#allocation2], %s1507
    %v1509 = vld [vmem:[%s1508] sm:$0xff]
    %v1510 = vld [vmem:[%s1508 + $0x8] sm:$0xff]
    %v1511 = vld [vmem:[%s1508 + $0x10] sm:$0xff]
    %v1512 = vld [vmem:[%s1508 + $0x18] sm:$0xff]
    %v1513 = vld [vmem:[%s1508 + $0x20] sm:$0xff]
    %v1514 = vld [vmem:[%s1508 + $0x28] sm:$0xff]
    %v1515 = vld [vmem:[%s1508 + $0x30] sm:$0xff]
    %v1516 = vld [vmem:[%s1508 + $0x38] sm:$0xff]
    %1517 = vmatprep.subr.bf16.mxu0 %v695
    %1518 = vmatpush1.bf16.msra.mxu0 %v694
    %1519 = vmatprep.subr.bf16.mxu0 %v699
    %1520 = vmatpush1.bf16.msra.mxu0 %v698
    %1521 = vmatprep.subr.bf16.mxu0 %v703
    %1522 = vmatpush1.bf16.msra.mxu0 %v702
    %1523 = vmatprep.subr.bf16.mxu0 %v707
    %1524 = vmatpush1.bf16.msra.mxu0 %v706
    %1525 = vmatprep.subr.bf16.mxu0 %v711
    %1526 = vmatpush1.bf16.msra.mxu0 %v710
    %1527 = vmatprep.subr.bf16.mxu0 %v715
    %1528 = vmatpush1.bf16.msra.mxu0 %v714
    %1529 = vmatprep.subr.bf16.mxu0 %v719
    %1530 = vmatpush1.bf16.msra.mxu0 %v718
    %1531 = vmatprep.subr.bf16.mxu0 %v723
    %1532 = vmatpush1.bf16.msra.mxu0 %v722
    %1533 = vmatprep.subr.bf16.mxu0 0
    %1534 = vmatpush1.bf16.msra.mxu0 0
    %1535 = vmatprep.subr.bf16.mxu0 0
    %1536 = vmatpush1.bf16.msra.mxu0 0
    %1537 = vmatprep.subr.bf16.mxu0 0
    %1538 = vmatpush1.bf16.msra.mxu0 0
    %1539 = vmatprep.subr.bf16.mxu0 0
    %1540 = vmatpush1.bf16.msra.mxu0 0
    %1541 = vmatprep.subr.bf16.mxu0 0
    %1542 = vmatpush1.bf16.msra.mxu0 0
    %1543 = vmatprep.subr.bf16.mxu0 0
    %1544 = vmatpush1.bf16.msra.mxu0 0
    %1545 = vmatprep.subr.bf16.mxu0 0
    %1546 = vmatpush1.bf16.msra.mxu0 0
    %1547 = vmatprep.subr.bf16.mxu0 0
    %1548 = vmatpush1.bf16.msra.mxu0 0
    %1549 = vmatprep.mubr.bf16.mxu0 0
    %1550 = vmatmul.mubr.bf16.gmra.mrb[0].mxu0 %v1495
    %v1551 = vpop.f32.mrb[0].mxu0
    %v1552 = vadd.f32 0.0, %v1551
    %v1553 = vpop.f32.mrb[0].mxu0
    %v1554 = vadd.f32 0.0, %v1553
    %v1555 = vpop.f32.mrb[0].mxu0
    %v1556 = vadd.f32 0.0, %v1555
    %v1557 = vpop.f32.mrb[0].mxu0
    %v1558 = vadd.f32 0.0, %v1557
    %1559 = vdwg.mxu0
    %1560 = vmatprep.subr.bf16.mxu0 %v697
    %1561 = vmatpush1.bf16.msra.mxu0 %v696
    %1562 = vmatprep.subr.bf16.mxu0 %v701
    %1563 = vmatpush1.bf16.msra.mxu0 %v700
    %1564 = vmatprep.subr.bf16.mxu0 %v705
    %1565 = vmatpush1.bf16.msra.mxu0 %v704
    %1566 = vmatprep.subr.bf16.mxu0 %v709
    %1567 = vmatpush1.bf16.msra.mxu0 %v708
    %1568 = vmatprep.subr.bf16.mxu0 %v713
    %1569 = vmatpush1.bf16.msra.mxu0 %v712
    %1570 = vmatprep.subr.bf16.mxu0 %v717
    %1571 = vmatpush1.bf16.msra.mxu0 %v716
    %1572 = vmatprep.subr.bf16.mxu0 %v721
    %1573 = vmatpush1.bf16.msra.mxu0 %v720
    %1574 = vmatprep.subr.bf16.mxu0 %v725
    %1575 = vmatpush1.bf16.msra.mxu0 %v724
    %1576 = vmatprep.subr.bf16.mxu0 0
    %1577 = vmatpush1.bf16.msra.mxu0 0
    %1578 = vmatprep.subr.bf16.mxu0 0
    %1579 = vmatpush1.bf16.msra.mxu0 0
    %1580 = vmatprep.subr.bf16.mxu0 0
    %1581 = vmatpush1.bf16.msra.mxu0 0
    %1582 = vmatprep.subr.bf16.mxu0 0
    %1583 = vmatpush1.bf16.msra.mxu0 0
    %1584 = vmatprep.subr.bf16.mxu0 0
    %1585 = vmatpush1.bf16.msra.mxu0 0
    %1586 = vmatprep.subr.bf16.mxu0 0
    %1587 = vmatpush1.bf16.msra.mxu0 0
    %1588 = vmatprep.subr.bf16.mxu0 0
    %1589 = vmatpush1.bf16.msra.mxu0 0
    %1590 = vmatprep.subr.bf16.mxu0 0
    %1591 = vmatpush1.bf16.msra.mxu0 0
    %1592 = vmatprep.mubr.bf16.mxu0 0
    %1593 = vmatmul.mubr.bf16.gmra.mrb[0].mxu0 %v1495
    %v1594 = vpop.f32.mrb[0].mxu0
    %v1595 = vadd.f32 0.0, %v1594
    %v1596 = vpop.f32.mrb[0].mxu0
    %v1597 = vadd.f32 0.0, %v1596
    %v1598 = vpop.f32.mrb[0].mxu0
    %v1599 = vadd.f32 0.0, %v1598
    %v1600 = vpop.f32.mrb[0].mxu0
    %v1601 = vadd.f32 0.0, %v1600
    %1602 = vdwg.mxu0
    %v1603 = vadd.f32 %v1509, %v1552
    %v1604 = vadd.f32 %v1510, %v1554
    %v1605 = vadd.f32 %v1511, %v1595
    %v1606 = vadd.f32 %v1512, %v1597
    %v1607 = vadd.f32 %v1513, %v1556
    %v1608 = vadd.f32 %v1514, %v1558
    %v1609 = vadd.f32 %v1515, %v1599
    %v1610 = vadd.f32 %v1516, %v1601
    %v1611 = vmul.f32 %v1603, 0.5
    %v1612 = vmul.f32 %v1607, 0.5
    %v1613 = vtanh.pop %v1611
    %v1614 = vtanh.pop %v1612
    %v1615 = vadd.f32 %v1613, 1.0
    %v1616 = vadd.f32 %v1614, 1.0
    %v1617 = vmul.f32 %v1615, 0.5
    %v1618 = vmul.f32 %v1616, 0.5
    %v1619 = vmul.f32 %v1604, 0.5
    %v1620 = vmul.f32 %v1608, 0.5
    %v1621 = vtanh.pop %v1619
    %v1622 = vtanh.pop %v1620
    %v1623 = vadd.f32 %v1621, 1.0
    %v1624 = vadd.f32 %v1622, 1.0
    %v1625 = vmul.f32 %v1623, 0.5
    %v1626 = vmul.f32 %v1624, 0.5
    %v1627 = vtanh.pop %v1605
    %v1628 = vtanh.pop %v1609
    %v1629 = vmul.f32 %v1606, 0.5
    %v1630 = vmul.f32 %v1610, 0.5
    %v1631 = vtanh.pop %v1629
    %v1632 = vtanh.pop %v1630
    %v1633 = vadd.f32 %v1631, 1.0
    %v1634 = vadd.f32 %v1632, 1.0
    %v1635 = vmul.f32 %v1633, 0.5
    %v1636 = vmul.f32 %v1634, 0.5
    %v1637 = vmul.f32 %v1625, %v1489
    %v1638 = vmul.f32 %v1626, %v1490
    %v1639 = vmul.f32 %v1617, %v1627
    %v1640 = vmul.f32 %v1618, %v1628
    %v1641 = vadd.f32 %v1637, %v1639
    %v1642 = vadd.f32 %v1638, %v1640
    %v1643 = vtanh.pop %v1641
    %v1644 = vtanh.pop %v1642
    %v1645 = vmul.f32 %v1635, %v1643
    %v1646 = vmul.f32 %v1636, %v1644
    %v1647 = vpack.c.bf16 %v1646, %v1645
    %v1649 = vunpack.c.l.b16 %v1647
    %v1650 = vunpack.c.h.b16 %v1647
    %v1651 = vpack.c.b16 %v1649, %v1649
    %v1652 = vpack.c.b16 %v1650, %v1650
    %s1655 = scalar_lea.vmem [#allocation15], 40
    %1656 = vst [vmem:[%s1655] sm:$0xf] %v1651
    %1657 = vst [vmem:[%s1655 + $0x4] sm:$0xf] %v1652
    %s1658 = smul.u32 12, 4
    %s1659 = smul.addr %s1658, 8
    %s1660 = scalar_lea.vmem [#allocation2], %s1659
    %v1661 = vld [vmem:[%s1660] sm:$0xff]
    %v1662 = vld [vmem:[%s1660 + $0x8] sm:$0xff]
    %v1663 = vld [vmem:[%s1660 + $0x10] sm:$0xff]
    %v1664 = vld [vmem:[%s1660 + $0x18] sm:$0xff]
    %v1665 = vld [vmem:[%s1660 + $0x20] sm:$0xff]
    %v1666 = vld [vmem:[%s1660 + $0x28] sm:$0xff]
    %v1667 = vld [vmem:[%s1660 + $0x30] sm:$0xff]
    %v1668 = vld [vmem:[%s1660 + $0x38] sm:$0xff]
    %1669 = vmatprep.subr.bf16.mxu0 %v695
    %1670 = vmatpush1.bf16.msra.mxu0 %v694
    %1671 = vmatprep.subr.bf16.mxu0 %v699
    %1672 = vmatpush1.bf16.msra.mxu0 %v698
    %1673 = vmatprep.subr.bf16.mxu0 %v703
    %1674 = vmatpush1.bf16.msra.mxu0 %v702
    %1675 = vmatprep.subr.bf16.mxu0 %v707
    %1676 = vmatpush1.bf16.msra.mxu0 %v706
    %1677 = vmatprep.subr.bf16.mxu0 %v711
    %1678 = vmatpush1.bf16.msra.mxu0 %v710
    %1679 = vmatprep.subr.bf16.mxu0 %v715
    %1680 = vmatpush1.bf16.msra.mxu0 %v714
    %1681 = vmatprep.subr.bf16.mxu0 %v719
    %1682 = vmatpush1.bf16.msra.mxu0 %v718
    %1683 = vmatprep.subr.bf16.mxu0 %v723
    %1684 = vmatpush1.bf16.msra.mxu0 %v722
    %1685 = vmatprep.subr.bf16.mxu0 0
    %1686 = vmatpush1.bf16.msra.mxu0 0
    %1687 = vmatprep.subr.bf16.mxu0 0
    %1688 = vmatpush1.bf16.msra.mxu0 0
    %1689 = vmatprep.subr.bf16.mxu0 0
    %1690 = vmatpush1.bf16.msra.mxu0 0
    %1691 = vmatprep.subr.bf16.mxu0 0
    %1692 = vmatpush1.bf16.msra.mxu0 0
    %1693 = vmatprep.subr.bf16.mxu0 0
    %1694 = vmatpush1.bf16.msra.mxu0 0
    %1695 = vmatprep.subr.bf16.mxu0 0
    %1696 = vmatpush1.bf16.msra.mxu0 0
    %1697 = vmatprep.subr.bf16.mxu0 0
    %1698 = vmatpush1.bf16.msra.mxu0 0
    %1699 = vmatprep.subr.bf16.mxu0 0
    %1700 = vmatpush1.bf16.msra.mxu0 0
    %1701 = vmatprep.mubr.bf16.mxu0 0
    %1702 = vmatmul.mubr.bf16.gmra.mrb[0].mxu0 %v1647
    %v1703 = vpop.f32.mrb[0].mxu0
    %v1704 = vadd.f32 0.0, %v1703
    %v1705 = vpop.f32.mrb[0].mxu0
    %v1706 = vadd.f32 0.0, %v1705
    %v1707 = vpop.f32.mrb[0].mxu0
    %v1708 = vadd.f32 0.0, %v1707
    %v1709 = vpop.f32.mrb[0].mxu0
    %v1710 = vadd.f32 0.0, %v1709
    %1711 = vdwg.mxu0
    %1712 = vmatprep.subr.bf16.mxu0 %v697
    %1713 = vmatpush1.bf16.msra.mxu0 %v696
    %1714 = vmatprep.subr.bf16.mxu0 %v701
    %1715 = vmatpush1.bf16.msra.mxu0 %v700
    %1716 = vmatprep.subr.bf16.mxu0 %v705
    %1717 = vmatpush1.bf16.msra.mxu0 %v704
    %1718 = vmatprep.subr.bf16.mxu0 %v709
    %1719 = vmatpush1.bf16.msra.mxu0 %v708
    %1720 = vmatprep.subr.bf16.mxu0 %v713
    %1721 = vmatpush1.bf16.msra.mxu0 %v712
    %1722 = vmatprep.subr.bf16.mxu0 %v717
    %1723 = vmatpush1.bf16.msra.mxu0 %v716
    %1724 = vmatprep.subr.bf16.mxu0 %v721
    %1725 = vmatpush1.bf16.msra.mxu0 %v720
    %1726 = vmatprep.subr.bf16.mxu0 %v725
    %1727 = vmatpush1.bf16.msra.mxu0 %v724
    %1728 = vmatprep.subr.bf16.mxu0 0
    %1729 = vmatpush1.bf16.msra.mxu0 0
    %1730 = vmatprep.subr.bf16.mxu0 0
    %1731 = vmatpush1.bf16.msra.mxu0 0
    %1732 = vmatprep.subr.bf16.mxu0 0
    %1733 = vmatpush1.bf16.msra.mxu0 0
    %1734 = vmatprep.subr.bf16.mxu0 0
    %1735 = vmatpush1.bf16.msra.mxu0 0
    %1736 = vmatprep.subr.bf16.mxu0 0
    %1737 = vmatpush1.bf16.msra.mxu0 0
    %1738 = vmatprep.subr.bf16.mxu0 0
    %1739 = vmatpush1.bf16.msra.mxu0 0
    %1740 = vmatprep.subr.bf16.mxu0 0
    %1741 = vmatpush1.bf16.msra.mxu0 0
    %1742 = vmatprep.subr.bf16.mxu0 0
    %1743 = vmatpush1.bf16.msra.mxu0 0
    %1744 = vmatprep.mubr.bf16.mxu0 0
    %1745 = vmatmul.mubr.bf16.gmra.mrb[0].mxu0 %v1647
    %v1746 = vpop.f32.mrb[0].mxu0
    %v1747 = vadd.f32 0.0, %v1746
    %v1748 = vpop.f32.mrb[0].mxu0
    %v1749 = vadd.f32 0.0, %v1748
    %v1750 = vpop.f32.mrb[0].mxu0
    %v1751 = vadd.f32 0.0, %v1750
    %v1752 = vpop.f32.mrb[0].mxu0
    %v1753 = vadd.f32 0.0, %v1752
    %1754 = vdwg.mxu0
    %v1755 = vadd.f32 %v1661, %v1704
    %v1756 = vadd.f32 %v1662, %v1706
    %v1757 = vadd.f32 %v1663, %v1747
    %v1758 = vadd.f32 %v1664, %v1749
    %v1759 = vadd.f32 %v1665, %v1708
    %v1760 = vadd.f32 %v1666, %v1710
    %v1761 = vadd.f32 %v1667, %v1751
    %v1762 = vadd.f32 %v1668, %v1753
    %v1763 = vmul.f32 %v1755, 0.5
    %v1764 = vmul.f32 %v1759, 0.5
    %v1765 = vtanh.pop %v1763
    %v1766 = vtanh.pop %v1764
    %v1767 = vadd.f32 %v1765, 1.0
    %v1768 = vadd.f32 %v1766, 1.0
    %v1769 = vmul.f32 %v1767, 0.5
    %v1770 = vmul.f32 %v1768, 0.5
    %v1771 = vmul.f32 %v1756, 0.5
    %v1772 = vmul.f32 %v1760, 0.5
    %v1773 = vtanh.pop %v1771
    %v1774 = vtanh.pop %v1772
    %v1775 = vadd.f32 %v1773, 1.0
    %v1776 = vadd.f32 %v1774, 1.0
    %v1777 = vmul.f32 %v1775, 0.5
    %v1778 = vmul.f32 %v1776, 0.5
    %v1779 = vtanh.pop %v1757
    %v1780 = vtanh.pop %v1761
    %v1781 = vmul.f32 %v1758, 0.5
    %v1782 = vmul.f32 %v1762, 0.5
    %v1783 = vtanh.pop %v1781
    %v1784 = vtanh.pop %v1782
    %v1785 = vadd.f32 %v1783, 1.0
    %v1786 = vadd.f32 %v1784, 1.0
    %v1787 = vmul.f32 %v1785, 0.5
    %v1788 = vmul.f32 %v1786, 0.5
    %v1789 = vmul.f32 %v1777, %v1641
    %v1790 = vmul.f32 %v1778, %v1642
    %v1791 = vmul.f32 %v1769, %v1779
    %v1792 = vmul.f32 %v1770, %v1780
    %v1793 = vadd.f32 %v1789, %v1791
    %v1794 = vadd.f32 %v1790, %v1792
    %v1795 = vtanh.pop %v1793
    %v1796 = vtanh.pop %v1794
    %v1797 = vmul.f32 %v1787, %v1795
    %v1798 = vmul.f32 %v1788, %v1796
    %v1799 = vpack.c.bf16 %v1798, %v1797
    %v1801 = vunpack.c.l.b16 %v1799
    %v1802 = vunpack.c.h.b16 %v1799
    %v1803 = vpack.c.b16 %v1801, %v1801
    %v1804 = vpack.c.b16 %v1802, %v1802
    %s1807 = scalar_lea.vmem [#allocation15], 48
    %1808 = vst [vmem:[%s1807] sm:$0xf] %v1803
    %1809 = vst [vmem:[%s1807 + $0x4] sm:$0xf] %v1804
    %s1810 = smul.u32 14, 4
    %s1811 = smul.addr %s1810, 8
    %s1812 = scalar_lea.vmem [#allocation2], %s1811
    %v1813 = vld [vmem:[%s1812] sm:$0xff]
    %v1814 = vld [vmem:[%s1812 + $0x8] sm:$0xff]
    %v1815 = vld [vmem:[%s1812 + $0x10] sm:$0xff]
    %v1816 = vld [vmem:[%s1812 + $0x18] sm:$0xff]
    %v1817 = vld [vmem:[%s1812 + $0x20] sm:$0xff]
    %v1818 = vld [vmem:[%s1812 + $0x28] sm:$0xff]
    %v1819 = vld [vmem:[%s1812 + $0x30] sm:$0xff]
    %v1820 = vld [vmem:[%s1812 + $0x38] sm:$0xff]
    %1821 = vmatprep.subr.bf16.mxu0 %v695
    %1822 = vmatpush1.bf16.msra.mxu0 %v694
    %1823 = vmatprep.subr.bf16.mxu0 %v699
    %1824 = vmatpush1.bf16.msra.mxu0 %v698
    %1825 = vmatprep.subr.bf16.mxu0 %v703
    %1826 = vmatpush1.bf16.msra.mxu0 %v702
    %1827 = vmatprep.subr.bf16.mxu0 %v707
    %1828 = vmatpush1.bf16.msra.mxu0 %v706
    %1829 = vmatprep.subr.bf16.mxu0 %v711
    %1830 = vmatpush1.bf16.msra.mxu0 %v710
    %1831 = vmatprep.subr.bf16.mxu0 %v715
    %1832 = vmatpush1.bf16.msra.mxu0 %v714
    %1833 = vmatprep.subr.bf16.mxu0 %v719
    %1834 = vmatpush1.bf16.msra.mxu0 %v718
    %1835 = vmatprep.subr.bf16.mxu0 %v723
    %1836 = vmatpush1.bf16.msra.mxu0 %v722
    %1837 = vmatprep.subr.bf16.mxu0 0
    %1838 = vmatpush1.bf16.msra.mxu0 0
    %1839 = vmatprep.subr.bf16.mxu0 0
    %1840 = vmatpush1.bf16.msra.mxu0 0
    %1841 = vmatprep.subr.bf16.mxu0 0
    %1842 = vmatpush1.bf16.msra.mxu0 0
    %1843 = vmatprep.subr.bf16.mxu0 0
    %1844 = vmatpush1.bf16.msra.mxu0 0
    %1845 = vmatprep.subr.bf16.mxu0 0
    %1846 = vmatpush1.bf16.msra.mxu0 0
    %1847 = vmatprep.subr.bf16.mxu0 0
    %1848 = vmatpush1.bf16.msra.mxu0 0
    %1849 = vmatprep.subr.bf16.mxu0 0
    %1850 = vmatpush1.bf16.msra.mxu0 0
    %1851 = vmatprep.subr.bf16.mxu0 0
    %1852 = vmatpush1.bf16.msra.mxu0 0
    %1853 = vmatprep.mubr.bf16.mxu0 0
    %1854 = vmatmul.mubr.bf16.gmra.mrb[0].mxu0 %v1799
    %v1855 = vpop.f32.mrb[0].mxu0
    %v1856 = vadd.f32 0.0, %v1855
    %v1857 = vpop.f32.mrb[0].mxu0
    %v1858 = vadd.f32 0.0, %v1857
    %v1859 = vpop.f32.mrb[0].mxu0
    %v1860 = vadd.f32 0.0, %v1859
    %v1861 = vpop.f32.mrb[0].mxu0
    %v1862 = vadd.f32 0.0, %v1861
    %1863 = vdwg.mxu0
    %1864 = vmatprep.subr.bf16.mxu0 %v697
    %1865 = vmatpush1.bf16.msra.mxu0 %v696
    %1866 = vmatprep.subr.bf16.mxu0 %v701
    %1867 = vmatpush1.bf16.msra.mxu0 %v700
    %1868 = vmatprep.subr.bf16.mxu0 %v705
    %1869 = vmatpush1.bf16.msra.mxu0 %v704
    %1870 = vmatprep.subr.bf16.mxu0 %v709
    %1871 = vmatpush1.bf16.msra.mxu0 %v708
    %1872 = vmatprep.subr.bf16.mxu0 %v713
    %1873 = vmatpush1.bf16.msra.mxu0 %v712
    %1874 = vmatprep.subr.bf16.mxu0 %v717
    %1875 = vmatpush1.bf16.msra.mxu0 %v716
    %1876 = vmatprep.subr.bf16.mxu0 %v721
    %1877 = vmatpush1.bf16.msra.mxu0 %v720
    %1878 = vmatprep.subr.bf16.mxu0 %v725
    %1879 = vmatpush1.bf16.msra.mxu0 %v724
    %1880 = vmatprep.subr.bf16.mxu0 0
    %1881 = vmatpush1.bf16.msra.mxu0 0
    %1882 = vmatprep.subr.bf16.mxu0 0
    %1883 = vmatpush1.bf16.msra.mxu0 0
    %1884 = vmatprep.subr.bf16.mxu0 0
    %1885 = vmatpush1.bf16.msra.mxu0 0
    %1886 = vmatprep.subr.bf16.mxu0 0
    %1887 = vmatpush1.bf16.msra.mxu0 0
    %1888 = vmatprep.subr.bf16.mxu0 0
    %1889 = vmatpush1.bf16.msra.mxu0 0
    %1890 = vmatprep.subr.bf16.mxu0 0
    %1891 = vmatpush1.bf16.msra.mxu0 0
    %1892 = vmatprep.subr.bf16.mxu0 0
    %1893 = vmatpush1.bf16.msra.mxu0 0
    %1894 = vmatprep.subr.bf16.mxu0 0
    %1895 = vmatpush1.bf16.msra.mxu0 0
    %1896 = vmatprep.mubr.bf16.mxu0 0
    %1897 = vmatmul.mubr.bf16.gmra.mrb[0].mxu0 %v1799
    %v1898 = vpop.f32.mrb[0].mxu0
    %v1899 = vadd.f32 0.0, %v1898
    %v1900 = vpop.f32.mrb[0].mxu0
    %v1901 = vadd.f32 0.0, %v1900
    %v1902 = vpop.f32.mrb[0].mxu0
    %v1903 = vadd.f32 0.0, %v1902
    %v1904 = vpop.f32.mrb[0].mxu0
    %v1905 = vadd.f32 0.0, %v1904
    %1906 = vdwg.mxu0
    %v1907 = vadd.f32 %v1813, %v1856
    %v1908 = vadd.f32 %v1814, %v1858
    %v1909 = vadd.f32 %v1815, %v1899
    %v1910 = vadd.f32 %v1816, %v1901
    %v1911 = vadd.f32 %v1817, %v1860
    %v1912 = vadd.f32 %v1818, %v1862
    %v1913 = vadd.f32 %v1819, %v1903
    %v1914 = vadd.f32 %v1820, %v1905
    %v1915 = vmul.f32 %v1907, 0.5
    %v1916 = vmul.f32 %v1911, 0.5
    %v1917 = vtanh.pop %v1915
    %v1918 = vtanh.pop %v1916
    %v1919 = vadd.f32 %v1917, 1.0
    %v1920 = vadd.f32 %v1918, 1.0
    %v1921 = vmul.f32 %v1919, 0.5
    %v1922 = vmul.f32 %v1920, 0.5
    %v1923 = vmul.f32 %v1908, 0.5
    %v1924 = vmul.f32 %v1912, 0.5
    %v1925 = vtanh.pop %v1923
    %v1926 = vtanh.pop %v1924
    %v1927 = vadd.f32 %v1925, 1.0
    %v1928 = vadd.f32 %v1926, 1.0
    %v1929 = vmul.f32 %v1927, 0.5
    %v1930 = vmul.f32 %v1928, 0.5
    %v1931 = vtanh.pop %v1909
    %v1932 = vtanh.pop %v1913
    %v1933 = vmul.f32 %v1910, 0.5
    %v1934 = vmul.f32 %v1914, 0.5
    %v1935 = vtanh.pop %v1933
    %v1936 = vtanh.pop %v1934
    %v1937 = vadd.f32 %v1935, 1.0
    %v1938 = vadd.f32 %v1936, 1.0
    %v1939 = vmul.f32 %v1937, 0.5
    %v1940 = vmul.f32 %v1938, 0.5
    %v1941 = vmul.f32 %v1929, %v1793
    %v1942 = vmul.f32 %v1930, %v1794
    %v1943 = vmul.f32 %v1921, %v1931
    %v1944 = vmul.f32 %v1922, %v1932
    %v1945 = vadd.f32 %v1941, %v1943
    %v1946 = vadd.f32 %v1942, %v1944
    %v1947 = vtanh.pop %v1945
    %v1948 = vtanh.pop %v1946
    %v1949 = vmul.f32 %v1939, %v1947
    %v1950 = vmul.f32 %v1940, %v1948
    %v1951 = vpack.c.bf16 %v1950, %v1949
    %v1953 = vunpack.c.l.b16 %v1951
    %v1954 = vunpack.c.h.b16 %v1951
    %v1955 = vpack.c.b16 %v1953, %v1953
    %v1956 = vpack.c.b16 %v1954, %v1954
    %s1959 = scalar_lea.vmem [#allocation15], 56
    %1960 = vst [vmem:[%s1959] sm:$0xf] %v1955
    %1961 = vst [vmem:[%s1959 + $0x4] sm:$0xf] %v1956
    %1962 = vst [vmem:[#allocation16] sm:$0xff] %v1949
    %1963 = vst [vmem:[#allocation16 + $0x8] sm:$0xff] %v1950
    %1964 = vst [vmem:[#allocation18] sm:$0xff] %v1945
    %1965 = vst [vmem:[#allocation18 + $0x8] sm:$0xff] %v1946
    %v1966 = vld [vmem:[#allocation11] sm:$0xff]
    %v1967 = vld [vmem:[#allocation11 + $0x8] sm:$0xff]
    %v1968 = vld [vmem:[#allocation11 + $0x10] sm:$0xff]
    %v1969 = vld [vmem:[#allocation11 + $0x18] sm:$0xff]
    %v1970 = vld [vmem:[#allocation11 + $0x20] sm:$0xff]
    %v1971 = vld [vmem:[#allocation11 + $0x28] sm:$0xff]
    %v1972 = vld [vmem:[#allocation11 + $0x30] sm:$0xff]
    %v1973 = vld [vmem:[#allocation11 + $0x38] sm:$0xff]
    %v1974 = vld [vmem:[#allocation11 + $0x40] sm:$0xff]
    %v1975 = vld [vmem:[#allocation11 + $0x48] sm:$0xff]
    %v1976 = vld [vmem:[#allocation11 + $0x50] sm:$0xff]
    %v1977 = vld [vmem:[#allocation11 + $0x58] sm:$0xff]
    %v1978 = vld [vmem:[#allocation11 + $0x60] sm:$0xff]
    %v1979 = vld [vmem:[#allocation11 + $0x68] sm:$0xff]
    %v1980 = vld [vmem:[#allocation11 + $0x70] sm:$0xff]
    %v1981 = vld [vmem:[#allocation11 + $0x78] sm:$0xff]
    %v1982 = vld [vmem:[#allocation11 + $0x80] sm:$0xff]
    %v1983 = vld [vmem:[#allocation11 + $0x88] sm:$0xff]
    %v1984 = vld [vmem:[#allocation11 + $0x90] sm:$0xff]
    %v1985 = vld [vmem:[#allocation11 + $0x98] sm:$0xff]
    %v1986 = vld [vmem:[#allocation11 + $0xa0] sm:$0xff]
    %v1987 = vld [vmem:[#allocation11 + $0xa8] sm:$0xff]
    %v1988 = vld [vmem:[#allocation11 + $0xb0] sm:$0xff]
    %v1989 = vld [vmem:[#allocation11 + $0xb8] sm:$0xff]
    %v1990 = vld [vmem:[#allocation11 + $0xc0] sm:$0xff]
    %v1991 = vld [vmem:[#allocation11 + $0xc8] sm:$0xff]
    %v1992 = vld [vmem:[#allocation11 + $0xd0] sm:$0xff]
    %v1993 = vld [vmem:[#allocation11 + $0xd8] sm:$0xff]
    %v1994 = vld [vmem:[#allocation11 + $0xe0] sm:$0xff]
    %v1995 = vld [vmem:[#allocation11 + $0xe8] sm:$0xff]
    %v1996 = vld [vmem:[#allocation11 + $0xf0] sm:$0xff]
    %v1997 = vld [vmem:[#allocation11 + $0xf8] sm:$0xff]
    %v1998 = vld [vmem:[#allocation14] sm:$0xff]
    %v1999 = vld [vmem:[#allocation14 + $0x8] sm:$0xff]
    %v2000 = vld [vmem:[#allocation14 + $0x10] sm:$0xff]
    %v2001 = vld [vmem:[#allocation14 + $0x18] sm:$0xff]
    %v2002 = vld [vmem:[#allocation14 + $0x20] sm:$0xff]
    %v2003 = vld [vmem:[#allocation14 + $0x28] sm:$0xff]
    %v2004 = vld [vmem:[#allocation14 + $0x30] sm:$0xff]
    %v2005 = vld [vmem:[#allocation14 + $0x38] sm:$0xff]
    %v2006 = vld [vmem:[#allocation14 + $0x40] sm:$0xff]
    %v2007 = vld [vmem:[#allocation14 + $0x48] sm:$0xff]
    %v2008 = vld [vmem:[#allocation14 + $0x50] sm:$0xff]
    %v2009 = vld [vmem:[#allocation14 + $0x58] sm:$0xff]
    %v2010 = vld [vmem:[#allocation14 + $0x60] sm:$0xff]
    %v2011 = vld [vmem:[#allocation14 + $0x68] sm:$0xff]
    %v2012 = vld [vmem:[#allocation14 + $0x70] sm:$0xff]
    %v2013 = vld [vmem:[#allocation14 + $0x78] sm:$0xff]
    %v2014 = vld [vmem:[#allocation14 + $0x80] sm:$0xff]
    %v2015 = vld [vmem:[#allocation14 + $0x88] sm:$0xff]
    %v2016 = vld [vmem:[#allocation14 + $0x90] sm:$0xff]
    %v2017 = vld [vmem:[#allocation14 + $0x98] sm:$0xff]
    %v2018 = vld [vmem:[#allocation14 + $0xa0] sm:$0xff]
    %v2019 = vld [vmem:[#allocation14 + $0xa8] sm:$0xff]
    %v2020 = vld [vmem:[#allocation14 + $0xb0] sm:$0xff]
    %v2021 = vld [vmem:[#allocation14 + $0xb8] sm:$0xff]
    %v2022 = vld [vmem:[#allocation14 + $0xc0] sm:$0xff]
    %v2023 = vld [vmem:[#allocation14 + $0xc8] sm:$0xff]
    %v2024 = vld [vmem:[#allocation14 + $0xd0] sm:$0xff]
    %v2025 = vld [vmem:[#allocation14 + $0xd8] sm:$0xff]
    %v2026 = vld [vmem:[#allocation14 + $0xe0] sm:$0xff]
    %v2027 = vld [vmem:[#allocation14 + $0xe8] sm:$0xff]
    %v2028 = vld [vmem:[#allocation14 + $0xf0] sm:$0xff]
    %v2029 = vld [vmem:[#allocation14 + $0xf8] sm:$0xff]
    %v2030 = vld [vmem:[%s8] sm:$0xf]
    %v2031 = vld [vmem:[#allocation15] sm:$0xf]
    %v2032 = vld [vmem:[#allocation15 + $0x4] sm:$0xf]
    %v2033 = vld [vmem:[#allocation15 + $0x8] sm:$0xf]
    %v2034 = vld [vmem:[#allocation15 + $0xc] sm:$0xf]
    %v2035 = vld [vmem:[#allocation15 + $0x10] sm:$0xf]
    %v2036 = vld [vmem:[#allocation15 + $0x14] sm:$0xf]
    %v2037 = vld [vmem:[#allocation15 + $0x18] sm:$0xf]
    %v2038 = vld [vmem:[#allocation15 + $0x1c] sm:$0xf]
    %v2039 = vld [vmem:[#allocation15 + $0x20] sm:$0xf]
    %v2040 = vld [vmem:[#allocation15 + $0x24] sm:$0xf]
    %v2041 = vld [vmem:[#allocation15 + $0x28] sm:$0xf]
    %v2042 = vld [vmem:[#allocation15 + $0x2c] sm:$0xf]
    %v2043 = vld [vmem:[#allocation15 + $0x30] sm:$0xf]
    %v2044 = vld [vmem:[#allocation15 + $0x34] sm:$0xf]
    %v2045 = vld [vmem:[#allocation15 + $0x38] sm:$0xf]
    %v2046 = vld [vmem:[#allocation15 + $0x3c] sm:$0xf]
    %v2048 = vlaneseq
    %v2049 = vshrl.u32 %v2048, 7
    %v2050 = vsub.s32 0, %v2049
    %v2051 = vrot.slane %v2030, %v2050
    %v2052 = vlaneseq
    %v2053 = vshrl.u32 %v2052, 7
    %v2054 = vsub.s32 1, %v2053
    %v2055 = vrot.slane %v2030, %v2054
    %v2056 = vlaneseq
    %v2057 = vshrl.u32 %v2056, 7
    %v2058 = vsub.s32 2, %v2057
    %v2059 = vrot.slane %v2030, %v2058
    %v2060 = vlaneseq
    %v2061 = vshrl.u32 %v2060, 7
    %v2062 = vsub.s32 3, %v2061
    %v2063 = vrot.slane %v2030, %v2062
    %v2084 = vunpack.c.l.b16 %v2031
    %v2085 = vunpack.c.l.b16 %v2032
    %v2086 = vunpack.c.l.b16 %v2033
    %v2087 = vunpack.c.l.b16 %v2034
    %v2088 = vunpack.c.l.b16 %v2035
    %v2089 = vunpack.c.l.b16 %v2036
    %v2090 = vunpack.c.l.b16 %v2037
    %v2091 = vunpack.c.l.b16 %v2038
    %v2092 = vunpack.c.l.b16 %v2039
    %v2093 = vunpack.c.l.b16 %v2040
    %v2094 = vunpack.c.l.b16 %v2041
    %v2095 = vunpack.c.l.b16 %v2042
    %v2096 = vunpack.c.l.b16 %v2043
    %v2097 = vunpack.c.l.b16 %v2044
    %v2098 = vunpack.c.l.b16 %v2045
    %v2099 = vunpack.c.l.b16 %v2046
    %v2100 = vpack.c.b16 %v2085, %v2084
    %v2101 = vpack.c.b16 %v2087, %v2086
    %v2102 = vpack.c.b16 %v2089, %v2088
    %v2103 = vpack.c.b16 %v2091, %v2090
    %v2104 = vpack.c.b16 %v2093, %v2092
    %v2105 = vpack.c.b16 %v2095, %v2094
    %v2106 = vpack.c.b16 %v2097, %v2096
    %v2107 = vpack.c.b16 %v2099, %v2098
    %v2148 = vunpack.c.l.b16 %v1966
    %v2149 = vunpack.c.h.b16 %v1966
    %v2150 = vunpack.c.l.b16 %v1967
    %v2151 = vunpack.c.h.b16 %v1967
    %v2152 = vunpack.c.l.b16 %v1968
    %v2153 = vunpack.c.h.b16 %v1968
    %v2154 = vunpack.c.l.b16 %v1969
    %v2155 = vunpack.c.h.b16 %v1969
    %v2156 = vunpack.c.l.b16 %v1970
    %v2157 = vunpack.c.h.b16 %v1970
    %v2158 = vunpack.c.l.b16 %v1971
    %v2159 = vunpack.c.h.b16 %v1971
    %v2160 = vunpack.c.l.b16 %v1972
    %v2161 = vunpack.c.h.b16 %v1972
    %v2162 = vunpack.c.l.b16 %v1973
    %v2163 = vunpack.c.h.b16 %v1973
    %v2164 = vunpack.c.l.b16 %v1974
    %v2165 = vunpack.c.h.b16 %v1974
    %v2166 = vunpack.c.l.b16 %v1975
    %v2167 = vunpack.c.h.b16 %v1975
    %v2168 = vunpack.c.l.b16 %v1976
    %v2169 = vunpack.c.h.b16 %v1976
    %v2170 = vunpack.c.l.b16 %v1977
    %v2171 = vunpack.c.h.b16 %v1977
    %v2172 = vunpack.c.l.b16 %v1978
    %v2173 = vunpack.c.h.b16 %v1978
    %v2174 = vunpack.c.l.b16 %v1979
    %v2175 = vunpack.c.h.b16 %v1979
    %v2176 = vunpack.c.l.b16 %v1980
    %v2177 = vunpack.c.h.b16 %v1980
    %v2178 = vunpack.c.l.b16 %v1981
    %v2179 = vunpack.c.h.b16 %v1981
    %v2180 = vunpack.c.l.b16 %v1982
    %v2181 = vunpack.c.h.b16 %v1982
    %v2182 = vunpack.c.l.b16 %v1983
    %v2183 = vunpack.c.h.b16 %v1983
    %v2184 = vunpack.c.l.b16 %v1984
    %v2185 = vunpack.c.h.b16 %v1984
    %v2186 = vunpack.c.l.b16 %v1985
    %v2187 = vunpack.c.h.b16 %v1985
    %v2188 = vunpack.c.l.b16 %v1986
    %v2189 = vunpack.c.h.b16 %v1986
    %v2190 = vunpack.c.l.b16 %v1987
    %v2191 = vunpack.c.h.b16 %v1987
    %v2192 = vunpack.c.l.b16 %v1988
    %v2193 = vunpack.c.h.b16 %v1988
    %v2194 = vunpack.c.l.b16 %v1989
    %v2195 = vunpack.c.h.b16 %v1989
    %v2196 = vunpack.c.l.b16 %v1990
    %v2197 = vunpack.c.h.b16 %v1990
    %v2198 = vunpack.c.l.b16 %v1991
    %v2199 = vunpack.c.h.b16 %v1991
    %v2200 = vunpack.c.l.b16 %v1992
    %v2201 = vunpack.c.h.b16 %v1992
    %v2202 = vunpack.c.l.b16 %v1993
    %v2203 = vunpack.c.h.b16 %v1993
    %v2204 = vunpack.c.l.b16 %v1994
    %v2205 = vunpack.c.h.b16 %v1994
    %v2206 = vunpack.c.l.b16 %v1995
    %v2207 = vunpack.c.h.b16 %v1995
    %v2208 = vunpack.c.l.b16 %v1996
    %v2209 = vunpack.c.h.b16 %v1996
    %v2210 = vunpack.c.l.b16 %v1997
    %v2211 = vunpack.c.h.b16 %v1997
    %v2212 = vpack.c.b16 %v2152, %v2148
    %v2213 = vpack.c.b16 %v2153, %v2149
    %v2214 = vpack.c.b16 %v2154, %v2150
    %v2215 = vpack.c.b16 %v2155, %v2151
    %v2216 = vpack.c.b16 %v2160, %v2156
    %v2217 = vpack.c.b16 %v2161, %v2157
    %v2218 = vpack.c.b16 %v2162, %v2158
    %v2219 = vpack.c.b16 %v2163, %v2159
    %v2220 = vpack.c.b16 %v2168, %v2164
    %v2221 = vpack.c.b16 %v2169, %v2165
    %v2222 = vpack.c.b16 %v2170, %v2166
    %v2223 = vpack.c.b16 %v2171, %v2167
    %v2224 = vpack.c.b16 %v2176, %v2172
    %v2225 = vpack.c.b16 %v2177, %v2173
    %v2226 = vpack.c.b16 %v2178, %v2174
    %v2227 = vpack.c.b16 %v2179, %v2175
    %v2228 = vpack.c.b16 %v2184, %v2180
    %v2229 = vpack.c.b16 %v2185, %v2181
    %v2230 = vpack.c.b16 %v2186, %v2182
    %v2231 = vpack.c.b16 %v2187, %v2183
    %v2232 = vpack.c.b16 %v2192, %v2188
    %v2233 = vpack.c.b16 %v2193, %v2189
    %v2234 = vpack.c.b16 %v2194, %v2190
    %v2235 = vpack.c.b16 %v2195, %v2191
    %v2236 = vpack.c.b16 %v2200, %v2196
    %v2237 = vpack.c.b16 %v2201, %v2197
    %v2238 = vpack.c.b16 %v2202, %v2198
    %v2239 = vpack.c.b16 %v2203, %v2199
    %v2240 = vpack.c.b16 %v2208, %v2204
    %v2241 = vpack.c.b16 %v2209, %v2205
    %v2242 = vpack.c.b16 %v2210, %v2206
    %v2243 = vpack.c.b16 %v2211, %v2207
    %2276 = vmatprep.subr.bf16.mxu0 %v2213
    %2277 = vmatpush1.bf16.msra.mxu0 %v2212
    %2278 = vmatprep.subr.bf16.mxu0 %v2217
    %2279 = vmatpush1.bf16.msra.mxu0 %v2216
    %2280 = vmatprep.subr.bf16.mxu0 %v2221
    %2281 = vmatpush1.bf16.msra.mxu0 %v2220
    %2282 = vmatprep.subr.bf16.mxu0 %v2225
    %2283 = vmatpush1.bf16.msra.mxu0 %v2224
    %2284 = vmatprep.subr.bf16.mxu0 %v2229
    %2285 = vmatpush1.bf16.msra.mxu0 %v2228
    %2286 = vmatprep.subr.bf16.mxu0 %v2233
    %2287 = vmatpush1.bf16.msra.mxu0 %v2232
    %2288 = vmatprep.subr.bf16.mxu0 %v2237
    %2289 = vmatpush1.bf16.msra.mxu0 %v2236
    %2290 = vmatprep.subr.bf16.mxu0 %v2241
    %2291 = vmatpush1.bf16.msra.mxu0 %v2240
    %2292 = vmatprep.subr.bf16.mxu0 0
    %2293 = vmatpush1.bf16.msra.mxu0 0
    %2294 = vmatprep.subr.bf16.mxu0 0
    %2295 = vmatpush1.bf16.msra.mxu0 0
    %2296 = vmatprep.subr.bf16.mxu0 0
    %2297 = vmatpush1.bf16.msra.mxu0 0
    %2298 = vmatprep.subr.bf16.mxu0 0
    %2299 = vmatpush1.bf16.msra.mxu0 0
    %2300 = vmatprep.subr.bf16.mxu0 0
    %2301 = vmatpush1.bf16.msra.mxu0 0
    %2302 = vmatprep.subr.bf16.mxu0 0
    %2303 = vmatpush1.bf16.msra.mxu0 0
    %2304 = vmatprep.subr.bf16.mxu0 0
    %2305 = vmatpush1.bf16.msra.mxu0 0
    %2306 = vmatprep.subr.bf16.mxu0 0
    %2307 = vmatpush1.bf16.msra.mxu0 0
    %2308 = vmatprep.mubr.bf16.mxu0 0
    %2309 = vmatmul.mubr.bf16.gmra.mrb[0].mxu0 %v2100
    %v2310 = vpop.f32.mrb[0].mxu0
    %v2311 = vadd.f32 %v2051, %v2310
    %v2312 = vpop.f32.mrb[0].mxu0
    %v2313 = vadd.f32 %v2055, %v2312
    %v2314 = vpop.f32.mrb[0].mxu0
    %v2315 = vadd.f32 %v2051, %v2314
    %v2316 = vpop.f32.mrb[0].mxu0
    %v2317 = vadd.f32 %v2055, %v2316
    %2318 = vmatprep.mubr.bf16.mxu0 0
    %2319 = vmatmul.mubr.bf16.gmra.mrb[0].mxu0 %v2101
    %v2320 = vpop.f32.mrb[0].mxu0
    %v2321 = vadd.f32 %v2051, %v2320
    %v2322 = vpop.f32.mrb[0].mxu0
    %v2323 = vadd.f32 %v2055, %v2322
    %v2324 = vpop.f32.mrb[0].mxu0
    %v2325 = vadd.f32 %v2051, %v2324
    %v2326 = vpop.f32.mrb[0].mxu0
    %v2327 = vadd.f32 %v2055, %v2326
    %2328 = vmatprep.mubr.bf16.mxu0 0
    %2329 = vmatmul.mubr.bf16.gmra.mrb[0].mxu0 %v2102
    %v2330 = vpop.f32.mrb[0].mxu0
    %v2331 = vadd.f32 %v2051, %v2330
    %v2332 = vpop.f32.mrb[0].mxu0
    %v2333 = vadd.f32 %v2055, %v2332
    %v2334 = vpop.f32.mrb[0].mxu0
    %v2335 = vadd.f32 %v2051, %v2334
    %v2336 = vpop.f32.mrb[0].mxu0
    %v2337 = vadd.f32 %v2055, %v2336
    %2338 = vmatprep.mubr.bf16.mxu0 0
    %2339 = vmatmul.mubr.bf16.gmra.mrb[0].mxu0 %v2103
    %v2340 = vpop.f32.mrb[0].mxu0
    %v2341 = vadd.f32 %v2051, %v2340
    %v2342 = vpop.f32.mrb[0].mxu0
    %v2343 = vadd.f32 %v2055, %v2342
    %v2344 = vpop.f32.mrb[0].mxu0
    %v2345 = vadd.f32 %v2051, %v2344
    %v2346 = vpop.f32.mrb[0].mxu0
    %v2347 = vadd.f32 %v2055, %v2346
    %2348 = vmatprep.mubr.bf16.mxu0 0
    %2349 = vmatmul.mubr.bf16.gmra.mrb[0].mxu0 %v2104
    %v2350 = vpop.f32.mrb[0].mxu0
    %v2351 = vadd.f32 %v2051, %v2350
    %v2352 = vpop.f32.mrb[0].mxu0
    %v2353 = vadd.f32 %v2055, %v2352
    %v2354 = vpop.f32.mrb[0].mxu0
    %v2355 = vadd.f32 %v2051, %v2354
    %v2356 = vpop.f32.mrb[0].mxu0
    %v2357 = vadd.f32 %v2055, %v2356
    %2358 = vmatprep.mubr.bf16.mxu0 0
    %2359 = vmatmul.mubr.bf16.gmra.mrb[0].mxu0 %v2105
    %v2360 = vpop.f32.mrb[0].mxu0
    %v2361 = vadd.f32 %v2051, %v2360
    %v2362 = vpop.f32.mrb[0].mxu0
    %v2363 = vadd.f32 %v2055, %v2362
    %v2364 = vpop.f32.mrb[0].mxu0
    %v2365 = vadd.f32 %v2051, %v2364
    %v2366 = vpop.f32.mrb[0].mxu0
    %v2367 = vadd.f32 %v2055, %v2366
    %2368 = vmatprep.mubr.bf16.mxu0 0
    %2369 = vmatmul.mubr.bf16.gmra.mrb[0].mxu0 %v2106
    %v2370 = vpop.f32.mrb[0].mxu0
    %v2371 = vadd.f32 %v2051, %v2370
    %v2372 = vpop.f32.mrb[0].mxu0
    %v2373 = vadd.f32 %v2055, %v2372
    %v2374 = vpop.f32.mrb[0].mxu0
    %v2375 = vadd.f32 %v2051, %v2374
    %v2376 = vpop.f32.mrb[0].mxu0
    %v2377 = vadd.f32 %v2055, %v2376
    %2378 = vmatprep.mubr.bf16.mxu0 0
    %2379 = vmatmul.mubr.bf16.gmra.mrb[0].mxu0 %v2107
    %v2380 = vpop.f32.mrb[0].mxu0
    %v2381 = vadd.f32 %v2051, %v2380
    %v2382 = vpop.f32.mrb[0].mxu0
    %v2383 = vadd.f32 %v2055, %v2382
    %v2384 = vpop.f32.mrb[0].mxu0
    %v2385 = vadd.f32 %v2051, %v2384
    %v2386 = vpop.f32.mrb[0].mxu0
    %v2387 = vadd.f32 %v2055, %v2386
    %2388 = vdwg.mxu0
    %2389 = vmatprep.subr.bf16.mxu0 %v2215
    %2390 = vmatpush1.bf16.msra.mxu0 %v2214
    %2391 = vmatprep.subr.bf16.mxu0 %v2219
    %2392 = vmatpush1.bf16.msra.mxu0 %v2218
    %2393 = vmatprep.subr.bf16.mxu0 %v2223
    %2394 = vmatpush1.bf16.msra.mxu0 %v2222
    %2395 = vmatprep.subr.bf16.mxu0 %v2227
    %2396 = vmatpush1.bf16.msra.mxu0 %v2226
    %2397 = vmatprep.subr.bf16.mxu0 %v2231
    %2398 = vmatpush1.bf16.msra.mxu0 %v2230
    %2399 = vmatprep.subr.bf16.mxu0 %v2235
    %2400 = vmatpush1.bf16.msra.mxu0 %v2234
    %2401 = vmatprep.subr.bf16.mxu0 %v2239
    %2402 = vmatpush1.bf16.msra.mxu0 %v2238
    %2403 = vmatprep.subr.bf16.mxu0 %v2243
    %2404 = vmatpush1.bf16.msra.mxu0 %v2242
    %2405 = vmatprep.subr.bf16.mxu0 0
    %2406 = vmatpush1.bf16.msra.mxu0 0
    %2407 = vmatprep.subr.bf16.mxu0 0
    %2408 = vmatpush1.bf16.msra.mxu0 0
    %2409 = vmatprep.subr.bf16.mxu0 0
    %2410 = vmatpush1.bf16.msra.mxu0 0
    %2411 = vmatprep.subr.bf16.mxu0 0
    %2412 = vmatpush1.bf16.msra.mxu0 0
    %2413 = vmatprep.subr.bf16.mxu0 0
    %2414 = vmatpush1.bf16.msra.mxu0 0
    %2415 = vmatprep.subr.bf16.mxu0 0
    %2416 = vmatpush1.bf16.msra.mxu0 0
    %2417 = vmatprep.subr.bf16.mxu0 0
    %2418 = vmatpush1.bf16.msra.mxu0 0
    %2419 = vmatprep.subr.bf16.mxu0 0
    %2420 = vmatpush1.bf16.msra.mxu0 0
    %2421 = vmatprep.mubr.bf16.mxu0 0
    %2422 = vmatmul.mubr.bf16.gmra.mrb[0].mxu0 %v2100
    %v2423 = vpop.f32.mrb[0].mxu0
    %v2424 = vadd.f32 %v2059, %v2423
    %v2425 = vpop.f32.mrb[0].mxu0
    %v2426 = vadd.f32 %v2063, %v2425
    %v2427 = vpop.f32.mrb[0].mxu0
    %v2428 = vadd.f32 %v2059, %v2427
    %v2429 = vpop.f32.mrb[0].mxu0
    %v2430 = vadd.f32 %v2063, %v2429
    %2431 = vmatprep.mubr.bf16.mxu0 0
    %2432 = vmatmul.mubr.bf16.gmra.mrb[0].mxu0 %v2101
    %v2433 = vpop.f32.mrb[0].mxu0
    %v2434 = vadd.f32 %v2059, %v2433
    %v2435 = vpop.f32.mrb[0].mxu0
    %v2436 = vadd.f32 %v2063, %v2435
    %v2437 = vpop.f32.mrb[0].mxu0
    %v2438 = vadd.f32 %v2059, %v2437
    %v2439 = vpop.f32.mrb[0].mxu0
    %v2440 = vadd.f32 %v2063, %v2439
    %2441 = vmatprep.mubr.bf16.mxu0 0
    %2442 = vmatmul.mubr.bf16.gmra.mrb[0].mxu0 %v2102
    %v2443 = vpop.f32.mrb[0].mxu0
    %v2444 = vadd.f32 %v2059, %v2443
    %v2445 = vpop.f32.mrb[0].mxu0
    %v2446 = vadd.f32 %v2063, %v2445
    %v2447 = vpop.f32.mrb[0].mxu0
    %v2448 = vadd.f32 %v2059, %v2447
    %v2449 = vpop.f32.mrb[0].mxu0
    %v2450 = vadd.f32 %v2063, %v2449
    %2451 = vmatprep.mubr.bf16.mxu0 0
    %2452 = vmatmul.mubr.bf16.gmra.mrb[0].mxu0 %v2103
    %v2453 = vpop.f32.mrb[0].mxu0
    %v2454 = vadd.f32 %v2059, %v2453
    %v2455 = vpop.f32.mrb[0].mxu0
    %v2456 = vadd.f32 %v2063, %v2455
    %v2457 = vpop.f32.mrb[0].mxu0
    %v2458 = vadd.f32 %v2059, %v2457
    %v2459 = vpop.f32.mrb[0].mxu0
    %v2460 = vadd.f32 %v2063, %v2459
    %2461 = vmatprep.mubr.bf16.mxu0 0
    %2462 = vmatmul.mubr.bf16.gmra.mrb[0].mxu0 %v2104
    %v2463 = vpop.f32.mrb[0].mxu0
    %v2464 = vadd.f32 %v2059, %v2463
    %v2465 = vpop.f32.mrb[0].mxu0
    %v2466 = vadd.f32 %v2063, %v2465
    %v2467 = vpop.f32.mrb[0].mxu0
    %v2468 = vadd.f32 %v2059, %v2467
    %v2469 = vpop.f32.mrb[0].mxu0
    %v2470 = vadd.f32 %v2063, %v2469
    %2471 = vmatprep.mubr.bf16.mxu0 0
    %2472 = vmatmul.mubr.bf16.gmra.mrb[0].mxu0 %v2105
    %v2473 = vpop.f32.mrb[0].mxu0
    %v2474 = vadd.f32 %v2059, %v2473
    %v2475 = vpop.f32.mrb[0].mxu0
    %v2476 = vadd.f32 %v2063, %v2475
    %v2477 = vpop.f32.mrb[0].mxu0
    %v2478 = vadd.f32 %v2059, %v2477
    %v2479 = vpop.f32.mrb[0].mxu0
    %v2480 = vadd.f32 %v2063, %v2479
    %2481 = vmatprep.mubr.bf16.mxu0 0
    %2482 = vmatmul.mubr.bf16.gmra.mrb[0].mxu0 %v2106
    %v2483 = vpop.f32.mrb[0].mxu0
    %v2484 = vadd.f32 %v2059, %v2483
    %v2485 = vpop.f32.mrb[0].mxu0
    %v2486 = vadd.f32 %v2063, %v2485
    %v2487 = vpop.f32.mrb[0].mxu0
    %v2488 = vadd.f32 %v2059, %v2487
    %v2489 = vpop.f32.mrb[0].mxu0
    %v2490 = vadd.f32 %v2063, %v2489
    %2491 = vmatprep.mubr.bf16.mxu0 0
    %2492 = vmatmul.mubr.bf16.gmra.mrb[0].mxu0 %v2107
    %v2493 = vpop.f32.mrb[0].mxu0
    %v2494 = vadd.f32 %v2059, %v2493
    %v2495 = vpop.f32.mrb[0].mxu0
    %v2496 = vadd.f32 %v2063, %v2495
    %v2497 = vpop.f32.mrb[0].mxu0
    %v2498 = vadd.f32 %v2059, %v2497
    %v2499 = vpop.f32.mrb[0].mxu0
    %v2500 = vadd.f32 %v2063, %v2499
    %2501 = vdwg.mxu0
    %2502 = vst [vmem:[#allocation2] sm:$0xff] %v2311
    %2503 = vst [vmem:[#allocation2 + $0x8] sm:$0xff] %v2313
    %2504 = vst [vmem:[#allocation2 + $0x10] sm:$0xff] %v2424
    %2505 = vst [vmem:[#allocation2 + $0x18] sm:$0xff] %v2426
    %2506 = vst [vmem:[#allocation2 + $0x20] sm:$0xff] %v2315
    %2507 = vst [vmem:[#allocation2 + $0x28] sm:$0xff] %v2317
    %2508 = vst [vmem:[#allocation2 + $0x30] sm:$0xff] %v2428
    %2509 = vst [vmem:[#allocation2 + $0x38] sm:$0xff] %v2430
    %2510 = vst [vmem:[#allocation2 + $0x40] sm:$0xff] %v2321
    %2511 = vst [vmem:[#allocation2 + $0x48] sm:$0xff] %v2323
    %2512 = vst [vmem:[#allocation2 + $0x50] sm:$0xff] %v2434
    %2513 = vst [vmem:[#allocation2 + $0x58] sm:$0xff] %v2436
    %2514 = vst [vmem:[#allocation2 + $0x60] sm:$0xff] %v2325
    %2515 = vst [vmem:[#allocation2 + $0x68] sm:$0xff] %v2327
    %2516 = vst [vmem:[#allocation2 + $0x70] sm:$0xff] %v2438
    %2517 = vst [vmem:[#allocation2 + $0x78] sm:$0xff] %v2440
    %2518 = vst [vmem:[#allocation2 + $0x80] sm:$0xff] %v2331
    %2519 = vst [vmem:[#allocation2 + $0x88] sm:$0xff] %v2333
    %2520 = vst [vmem:[#allocation2 + $0x90] sm:$0xff] %v2444
    %2521 = vst [vmem:[#allocation2 + $0x98] sm:$0xff] %v2446
    %2522 = vst [vmem:[#allocation2 + $0xa0] sm:$0xff] %v2335
    %2523 = vst [vmem:[#allocation2 + $0xa8] sm:$0xff] %v2337
    %2524 = vst [vmem:[#allocation2 + $0xb0] sm:$0xff] %v2448
    %2525 = vst [vmem:[#allocation2 + $0xb8] sm:$0xff] %v2450
    %2526 = vst [vmem:[#allocation2 + $0xc0] sm:$0xff] %v2341
    %2527 = vst [vmem:[#allocation2 + $0xc8] sm:$0xff] %v2343
    %2528 = vst [vmem:[#allocation2 + $0xd0] sm:$0xff] %v2454
    %2529 = vst [vmem:[#allocation2 + $0xd8] sm:$0xff] %v2456
    %2530 = vst [vmem:[#allocation2 + $0xe0] sm:$0xff] %v2345
    %2531 = vst [vmem:[#allocation2 + $0xe8] sm:$0xff] %v2347
    %2532 = vst [vmem:[#allocation2 + $0xf0] sm:$0xff] %v2458
    %2533 = vst [vmem:[#allocation2 + $0xf8] sm:$0xff] %v2460
    %2534 = vst [vmem:[#allocation2 + $0x100] sm:$0xff] %v2351
    %2535 = vst [vmem:[#allocation2 + $0x108] sm:$0xff] %v2353
    %2536 = vst [vmem:[#allocation2 + $0x110] sm:$0xff] %v2464
    %2537 = vst [vmem:[#allocation2 + $0x118] sm:$0xff] %v2466
    %2538 = vst [vmem:[#allocation2 + $0x120] sm:$0xff] %v2355
    %2539 = vst [vmem:[#allocation2 + $0x128] sm:$0xff] %v2357
    %2540 = vst [vmem:[#allocation2 + $0x130] sm:$0xff] %v2468
    %2541 = vst [vmem:[#allocation2 + $0x138] sm:$0xff] %v2470
    %2542 = vst [vmem:[#allocation2 + $0x140] sm:$0xff] %v2361
    %2543 = vst [vmem:[#allocation2 + $0x148] sm:$0xff] %v2363
    %2544 = vst [vmem:[#allocation2 + $0x150] sm:$0xff] %v2474
    %2545 = vst [vmem:[#allocation2 + $0x158] sm:$0xff] %v2476
    %2546 = vst [vmem:[#allocation2 + $0x160] sm:$0xff] %v2365
    %2547 = vst [vmem:[#allocation2 + $0x168] sm:$0xff] %v2367
    %2548 = vst [vmem:[#allocation2 + $0x170] sm:$0xff] %v2478
    %2549 = vst [vmem:[#allocation2 + $0x178] sm:$0xff] %v2480
    %2550 = vst [vmem:[#allocation2 + $0x180] sm:$0xff] %v2371
    %2551 = vst [vmem:[#allocation2 + $0x188] sm:$0xff] %v2373
    %2552 = vst [vmem:[#allocation2 + $0x190] sm:$0xff] %v2484
    %2553 = vst [vmem:[#allocation2 + $0x198] sm:$0xff] %v2486
    %2554 = vst [vmem:[#allocation2 + $0x1a0] sm:$0xff] %v2375
    %2555 = vst [vmem:[#allocation2 + $0x1a8] sm:$0xff] %v2377
    %2556 = vst [vmem:[#allocation2 + $0x1b0] sm:$0xff] %v2488
    %2557 = vst [vmem:[#allocation2 + $0x1b8] sm:$0xff] %v2490
    %2558 = vst [vmem:[#allocation2 + $0x1c0] sm:$0xff] %v2381
    %2559 = vst [vmem:[#allocation2 + $0x1c8] sm:$0xff] %v2383
    %2560 = vst [vmem:[#allocation2 + $0x1d0] sm:$0xff] %v2494
    %2561 = vst [vmem:[#allocation2 + $0x1d8] sm:$0xff] %v2496
    %2562 = vst [vmem:[#allocation2 + $0x1e0] sm:$0xff] %v2385
    %2563 = vst [vmem:[#allocation2 + $0x1e8] sm:$0xff] %v2387
    %2564 = vst [vmem:[#allocation2 + $0x1f0] sm:$0xff] %v2498
    %2565 = vst [vmem:[#allocation2 + $0x1f8] sm:$0xff] %v2500
    %s2566 = scalar_lea.vmem [#allocation6], 16
    %v2567 = vld [vmem:[%s2566] sm:$0xff]
    %v2568 = vld [vmem:[%s2566 + $0x8] sm:$0xff]
    %s2569 = scalar_lea.vmem [#allocation8], 16
    %v2570 = vld [vmem:[%s2569] sm:$0xff]
    %v2571 = vld [vmem:[%s2569 + $0x8] sm:$0xff]
    %v2572 = vld [vmem:[%s588] sm:$0xff]
    %v2573 = vld [vmem:[%s588 + $0x8] sm:$0xff]
    %v2574 = vld [vmem:[%s588 + $0x10] sm:$0xff]
    %v2575 = vld [vmem:[%s588 + $0x18] sm:$0xff]
    %v2576 = vld [vmem:[%s588 + $0x20] sm:$0xff]
    %v2577 = vld [vmem:[%s588 + $0x28] sm:$0xff]
    %v2578 = vld [vmem:[%s588 + $0x30] sm:$0xff]
    %v2579 = vld [vmem:[%s588 + $0x38] sm:$0xff]
    %v2580 = vpack.c.bf16 %v2568, %v2567
    %v2613 = vunpack.c.l.b16 %v1998
    %v2614 = vunpack.c.h.b16 %v1998
    %v2615 = vunpack.c.l.b16 %v1999
    %v2616 = vunpack.c.h.b16 %v1999
    %v2617 = vunpack.c.l.b16 %v2000
    %v2618 = vunpack.c.h.b16 %v2000
    %v2619 = vunpack.c.l.b16 %v2001
    %v2620 = vunpack.c.h.b16 %v2001
    %v2621 = vunpack.c.l.b16 %v2002
    %v2622 = vunpack.c.h.b16 %v2002
    %v2623 = vunpack.c.l.b16 %v2003
    %v2624 = vunpack.c.h.b16 %v2003
    %v2625 = vunpack.c.l.b16 %v2004
    %v2626 = vunpack.c.h.b16 %v2004
    %v2627 = vunpack.c.l.b16 %v2005
    %v2628 = vunpack.c.h.b16 %v2005
    %v2629 = vunpack.c.l.b16 %v2006
    %v2630 = vunpack.c.h.b16 %v2006
    %v2631 = vunpack.c.l.b16 %v2007
    %v2632 = vunpack.c.h.b16 %v2007
    %v2633 = vunpack.c.l.b16 %v2008
    %v2634 = vunpack.c.h.b16 %v2008
    %v2635 = vunpack.c.l.b16 %v2009
    %v2636 = vunpack.c.h.b16 %v2009
    %v2637 = vunpack.c.l.b16 %v2010
    %v2638 = vunpack.c.h.b16 %v2010
    %v2639 = vunpack.c.l.b16 %v2011
    %v2640 = vunpack.c.h.b16 %v2011
    %v2641 = vunpack.c.l.b16 %v2012
    %v2642 = vunpack.c.h.b16 %v2012
    %v2643 = vunpack.c.l.b16 %v2013
    %v2644 = vunpack.c.h.b16 %v2013
    %v2645 = vunpack.c.l.b16 %v2014
    %v2646 = vunpack.c.h.b16 %v2014
    %v2647 = vunpack.c.l.b16 %v2015
    %v2648 = vunpack.c.h.b16 %v2015
    %v2649 = vunpack.c.l.b16 %v2016
    %v2650 = vunpack.c.h.b16 %v2016
    %v2651 = vunpack.c.l.b16 %v2017
    %v2652 = vunpack.c.h.b16 %v2017
    %v2653 = vunpack.c.l.b16 %v2018
    %v2654 = vunpack.c.h.b16 %v2018
    %v2655 = vunpack.c.l.b16 %v2019
    %v2656 = vunpack.c.h.b16 %v2019
    %v2657 = vunpack.c.l.b16 %v2020
    %v2658 = vunpack.c.h.b16 %v2020
    %v2659 = vunpack.c.l.b16 %v2021
    %v2660 = vunpack.c.h.b16 %v2021
    %v2661 = vunpack.c.l.b16 %v2022
    %v2662 = vunpack.c.h.b16 %v2022
    %v2663 = vunpack.c.l.b16 %v2023
    %v2664 = vunpack.c.h.b16 %v2023
    %v2665 = vunpack.c.l.b16 %v2024
    %v2666 = vunpack.c.h.b16 %v2024
    %v2667 = vunpack.c.l.b16 %v2025
    %v2668 = vunpack.c.h.b16 %v2025
    %v2669 = vunpack.c.l.b16 %v2026
    %v2670 = vunpack.c.h.b16 %v2026
    %v2671 = vunpack.c.l.b16 %v2027
    %v2672 = vunpack.c.h.b16 %v2027
    %v2673 = vunpack.c.l.b16 %v2028
    %v2674 = vunpack.c.h.b16 %v2028
    %v2675 = vunpack.c.l.b16 %v2029
    %v2676 = vunpack.c.h.b16 %v2029
    %v2677 = vpack.c.b16 %v2617, %v2613
    %v2678 = vpack.c.b16 %v2618, %v2614
    %v2679 = vpack.c.b16 %v2619, %v2615
    %v2680 = vpack.c.b16 %v2620, %v2616
    %v2681 = vpack.c.b16 %v2625, %v2621
    %v2682 = vpack.c.b16 %v2626, %v2622
    %v2683 = vpack.c.b16 %v2627, %v2623
    %v2684 = vpack.c.b16 %v2628, %v2624
    %v2685 = vpack.c.b16 %v2633, %v2629
    %v2686 = vpack.c.b16 %v2634, %v2630
    %v2687 = vpack.c.b16 %v2635, %v2631
    %v2688 = vpack.c.b16 %v2636, %v2632
    %v2689 = vpack.c.b16 %v2641, %v2637
    %v2690 = vpack.c.b16 %v2642, %v2638
    %v2691 = vpack.c.b16 %v2643, %v2639
    %v2692 = vpack.c.b16 %v2644, %v2640
    %v2693 = vpack.c.b16 %v2649, %v2645
    %v2694 = vpack.c.b16 %v2650, %v2646
    %v2695 = vpack.c.b16 %v2651, %v2647
    %v2696 = vpack.c.b16 %v2652, %v2648
    %v2697 = vpack.c.b16 %v2657, %v2653
    %v2698 = vpack.c.b16 %v2658, %v2654
    %v2699 = vpack.c.b16 %v2659, %v2655
    %v2700 = vpack.c.b16 %v2660, %v2656
    %v2701 = vpack.c.b16 %v2665, %v2661
    %v2702 = vpack.c.b16 %v2666, %v2662
    %v2703 = vpack.c.b16 %v2667, %v2663
    %v2704 = vpack.c.b16 %v2668, %v2664
    %v2705 = vpack.c.b16 %v2673, %v2669
    %v2706 = vpack.c.b16 %v2674, %v2670
    %v2707 = vpack.c.b16 %v2675, %v2671
    %v2708 = vpack.c.b16 %v2676, %v2672
    %2741 = vmatprep.subr.bf16.mxu0 %v2678
    %2742 = vmatpush1.bf16.msra.mxu0 %v2677
    %2743 = vmatprep.subr.bf16.mxu0 %v2682
    %2744 = vmatpush1.bf16.msra.mxu0 %v2681
    %2745 = vmatprep.subr.bf16.mxu0 %v2686
    %2746 = vmatpush1.bf16.msra.mxu0 %v2685
    %2747 = vmatprep.subr.bf16.mxu0 %v2690
    %2748 = vmatpush1.bf16.msra.mxu0 %v2689
    %2749 = vmatprep.subr.bf16.mxu0 %v2694
    %2750 = vmatpush1.bf16.msra.mxu0 %v2693
    %2751 = vmatprep.subr.bf16.mxu0 %v2698
    %2752 = vmatpush1.bf16.msra.mxu0 %v2697
    %2753 = vmatprep.subr.bf16.mxu0 %v2702
    %2754 = vmatpush1.bf16.msra.mxu0 %v2701
    %2755 = vmatprep.subr.bf16.mxu0 %v2706
    %2756 = vmatpush1.bf16.msra.mxu0 %v2705
    %2757 = vmatprep.subr.bf16.mxu0 0
    %2758 = vmatpush1.bf16.msra.mxu0 0
    %2759 = vmatprep.subr.bf16.mxu0 0
    %2760 = vmatpush1.bf16.msra.mxu0 0
    %2761 = vmatprep.subr.bf16.mxu0 0
    %2762 = vmatpush1.bf16.msra.mxu0 0
    %2763 = vmatprep.subr.bf16.mxu0 0
    %2764 = vmatpush1.bf16.msra.mxu0 0
    %2765 = vmatprep.subr.bf16.mxu0 0
    %2766 = vmatpush1.bf16.msra.mxu0 0
    %2767 = vmatprep.subr.bf16.mxu0 0
    %2768 = vmatpush1.bf16.msra.mxu0 0
    %2769 = vmatprep.subr.bf16.mxu0 0
    %2770 = vmatpush1.bf16.msra.mxu0 0
    %2771 = vmatprep.subr.bf16.mxu0 0
    %2772 = vmatpush1.bf16.msra.mxu0 0
    %2773 = vmatprep.mubr.bf16.mxu0 0
    %2774 = vmatmul.mubr.bf16.gmra.mrb[0].mxu0 %v2580
    %v2775 = vpop.f32.mrb[0].mxu0
    %v2776 = vadd.f32 0.0, %v2775
    %v2777 = vpop.f32.mrb[0].mxu0
    %v2778 = vadd.f32 0.0, %v2777
    %v2779 = vpop.f32.mrb[0].mxu0
    %v2780 = vadd.f32 0.0, %v2779
    %v2781 = vpop.f32.mrb[0].mxu0
    %v2782 = vadd.f32 0.0, %v2781
    %2783 = vdwg.mxu0
    %2784 = vmatprep.subr.bf16.mxu0 %v2680
    %2785 = vmatpush1.bf16.msra.mxu0 %v2679
    %2786 = vmatprep.subr.bf16.mxu0 %v2684
    %2787 = vmatpush1.bf16.msra.mxu0 %v2683
    %2788 = vmatprep.subr.bf16.mxu0 %v2688
    %2789 = vmatpush1.bf16.msra.mxu0 %v2687
    %2790 = vmatprep.subr.bf16.mxu0 %v2692
    %2791 = vmatpush1.bf16.msra.mxu0 %v2691
    %2792 = vmatprep.subr.bf16.mxu0 %v2696
    %2793 = vmatpush1.bf16.msra.mxu0 %v2695
    %2794 = vmatprep.subr.bf16.mxu0 %v2700
    %2795 = vmatpush1.bf16.msra.mxu0 %v2699
    %2796 = vmatprep.subr.bf16.mxu0 %v2704
    %2797 = vmatpush1.bf16.msra.mxu0 %v2703
    %2798 = vmatprep.subr.bf16.mxu0 %v2708
    %2799 = vmatpush1.bf16.msra.mxu0 %v2707
    %2800 = vmatprep.subr.bf16.mxu0 0
    %2801 = vmatpush1.bf16.msra.mxu0 0
    %2802 = vmatprep.subr.bf16.mxu0 0
    %2803 = vmatpush1.bf16.msra.mxu0 0
    %2804 = vmatprep.subr.bf16.mxu0 0
    %2805 = vmatpush1.bf16.msra.mxu0 0
    %2806 = vmatprep.subr.bf16.mxu0 0
    %2807 = vmatpush1.bf16.msra.mxu0 0
    %2808 = vmatprep.subr.bf16.mxu0 0
    %2809 = vmatpush1.bf16.msra.mxu0 0
    %2810 = vmatprep.subr.bf16.mxu0 0
    %2811 = vmatpush1.bf16.msra.mxu0 0
    %2812 = vmatprep.subr.bf16.mxu0 0
    %2813 = vmatpush1.bf16.msra.mxu0 0
    %2814 = vmatprep.subr.bf16.mxu0 0
    %2815 = vmatpush1.bf16.msra.mxu0 0
    %2816 = vmatprep.mubr.bf16.mxu0 0
    %2817 = vmatmul.mubr.bf16.gmra.mrb[0].mxu0 %v2580
    %v2818 = vpop.f32.mrb[0].mxu0
    %v2819 = vadd.f32 0.0, %v2818
    %v2820 = vpop.f32.mrb[0].mxu0
    %v2821 = vadd.f32 0.0, %v2820
    %v2822 = vpop.f32.mrb[0].mxu0
    %v2823 = vadd.f32 0.0, %v2822
    %v2824 = vpop.f32.mrb[0].mxu0
    %v2825 = vadd.f32 0.0, %v2824
    %2826 = vdwg.mxu0
    %v2827 = vadd.f32 %v2572, %v2776
    %v2828 = vadd.f32 %v2573, %v2778
    %v2829 = vadd.f32 %v2574, %v2819
    %v2830 = vadd.f32 %v2575, %v2821
    %v2831 = vadd.f32 %v2576, %v2780
    %v2832 = vadd.f32 %v2577, %v2782
    %v2833 = vadd.f32 %v2578, %v2823
    %v2834 = vadd.f32 %v2579, %v2825
    %v2835 = vmul.f32 %v2827, 0.5
    %v2836 = vmul.f32 %v2831, 0.5
    %v2837 = vtanh.pop %v2835
    %v2838 = vtanh.pop %v2836
    %v2839 = vadd.f32 %v2837, 1.0
    %v2840 = vadd.f32 %v2838, 1.0
    %v2841 = vmul.f32 %v2839, 0.5
    %v2842 = vmul.f32 %v2840, 0.5
    %v2843 = vmul.f32 %v2828, 0.5
    %v2844 = vmul.f32 %v2832, 0.5
    %v2845 = vtanh.pop %v2843
    %v2846 = vtanh.pop %v2844
    %v2847 = vadd.f32 %v2845, 1.0
    %v2848 = vadd.f32 %v2846, 1.0
    %v2849 = vmul.f32 %v2847, 0.5
    %v2850 = vmul.f32 %v2848, 0.5
    %v2851 = vtanh.pop %v2829
    %v2852 = vtanh.pop %v2833
    %v2853 = vmul.f32 %v2830, 0.5
    %v2854 = vmul.f32 %v2834, 0.5
    %v2855 = vtanh.pop %v2853
    %v2856 = vtanh.pop %v2854
    %v2857 = vadd.f32 %v2855, 1.0
    %v2858 = vadd.f32 %v2856, 1.0
    %v2859 = vmul.f32 %v2857, 0.5
    %v2860 = vmul.f32 %v2858, 0.5
    %v2861 = vmul.f32 %v2849, %v2570
    %v2862 = vmul.f32 %v2850, %v2571
    %v2863 = vmul.f32 %v2841, %v2851
    %v2864 = vmul.f32 %v2842, %v2852
    %v2865 = vadd.f32 %v2861, %v2863
    %v2866 = vadd.f32 %v2862, %v2864
    %v2867 = vtanh.pop %v2865
    %v2868 = vtanh.pop %v2866
    %v2869 = vmul.f32 %v2859, %v2867
    %v2870 = vmul.f32 %v2860, %v2868
    %v2871 = vpack.c.bf16 %v2870, %v2869
    %v2873 = vunpack.c.l.b16 %v2871
    %v2874 = vunpack.c.h.b16 %v2871
    %v2875 = vpack.c.b16 %v2873, %v2873
    %v2876 = vpack.c.b16 %v2874, %v2874
    %2879 = vst [vmem:[#allocation15] sm:$0xf] %v2875
    %2880 = vst [vmem:[#allocation15 + $0x4] sm:$0xf] %v2876
    %v2881 = vld [vmem:[%s900] sm:$0xff]
    %v2882 = vld [vmem:[%s900 + $0x8] sm:$0xff]
    %v2883 = vld [vmem:[%s900 + $0x10] sm:$0xff]
    %v2884 = vld [vmem:[%s900 + $0x18] sm:$0xff]
    %v2885 = vld [vmem:[%s900 + $0x20] sm:$0xff]
    %v2886 = vld [vmem:[%s900 + $0x28] sm:$0xff]
    %v2887 = vld [vmem:[%s900 + $0x30] sm:$0xff]
    %v2888 = vld [vmem:[%s900 + $0x38] sm:$0xff]
    %2889 = vmatprep.subr.bf16.mxu0 %v2678
    %2890 = vmatpush1.bf16.msra.mxu0 %v2677
    %2891 = vmatprep.subr.bf16.mxu0 %v2682
    %2892 = vmatpush1.bf16.msra.mxu0 %v2681
    %2893 = vmatprep.subr.bf16.mxu0 %v2686
    %2894 = vmatpush1.bf16.msra.mxu0 %v2685
    %2895 = vmatprep.subr.bf16.mxu0 %v2690
    %2896 = vmatpush1.bf16.msra.mxu0 %v2689
    %2897 = vmatprep.subr.bf16.mxu0 %v2694
    %2898 = vmatpush1.bf16.msra.mxu0 %v2693
    %2899 = vmatprep.subr.bf16.mxu0 %v2698
    %2900 = vmatpush1.bf16.msra.mxu0 %v2697
    %2901 = vmatprep.subr.bf16.mxu0 %v2702
    %2902 = vmatpush1.bf16.msra.mxu0 %v2701
    %2903 = vmatprep.subr.bf16.mxu0 %v2706
    %2904 = vmatpush1.bf16.msra.mxu0 %v2705
    %2905 = vmatprep.subr.bf16.mxu0 0
    %2906 = vmatpush1.bf16.msra.mxu0 0
    %2907 = vmatprep.subr.bf16.mxu0 0
    %2908 = vmatpush1.bf16.msra.mxu0 0
    %2909 = vmatprep.subr.bf16.mxu0 0
    %2910 = vmatpush1.bf16.msra.mxu0 0
    %2911 = vmatprep.subr.bf16.mxu0 0
    %2912 = vmatpush1.bf16.msra.mxu0 0
    %2913 = vmatprep.subr.bf16.mxu0 0
    %2914 = vmatpush1.bf16.msra.mxu0 0
    %2915 = vmatprep.subr.bf16.mxu0 0
    %2916 = vmatpush1.bf16.msra.mxu0 0
    %2917 = vmatprep.subr.bf16.mxu0 0
    %2918 = vmatpush1.bf16.msra.mxu0 0
    %2919 = vmatprep.subr.bf16.mxu0 0
    %2920 = vmatpush1.bf16.msra.mxu0 0
    %2921 = vmatprep.mubr.bf16.mxu0 0
    %2922 = vmatmul.mubr.bf16.gmra.mrb[0].mxu0 %v2871
    %v2923 = vpop.f32.mrb[0].mxu0
    %v2924 = vadd.f32 0.0, %v2923
    %v2925 = vpop.f32.mrb[0].mxu0
    %v2926 = vadd.f32 0.0, %v2925
    %v2927 = vpop.f32.mrb[0].mxu0
    %v2928 = vadd.f32 0.0, %v2927
    %v2929 = vpop.f32.mrb[0].mxu0
    %v2930 = vadd.f32 0.0, %v2929
    %2931 = vdwg.mxu0
    %2932 = vmatprep.subr.bf16.mxu0 %v2680
    %2933 = vmatpush1.bf16.msra.mxu0 %v2679
    %2934 = vmatprep.subr.bf16.mxu0 %v2684
    %2935 = vmatpush1.bf16.msra.mxu0 %v2683
    %2936 = vmatprep.subr.bf16.mxu0 %v2688
    %2937 = vmatpush1.bf16.msra.mxu0 %v2687
    %2938 = vmatprep.subr.bf16.mxu0 %v2692
    %2939 = vmatpush1.bf16.msra.mxu0 %v2691
    %2940 = vmatprep.subr.bf16.mxu0 %v2696
    %2941 = vmatpush1.bf16.msra.mxu0 %v2695
    %2942 = vmatprep.subr.bf16.mxu0 %v2700
    %2943 = vmatpush1.bf16.msra.mxu0 %v2699
    %2944 = vmatprep.subr.bf16.mxu0 %v2704
    %2945 = vmatpush1.bf16.msra.mxu0 %v2703
    %2946 = vmatprep.subr.bf16.mxu0 %v2708
    %2947 = vmatpush1.bf16.msra.mxu0 %v2707
    %2948 = vmatprep.subr.bf16.mxu0 0
    %2949 = vmatpush1.bf16.msra.mxu0 0
    %2950 = vmatprep.subr.bf16.mxu0 0
    %2951 = vmatpush1.bf16.msra.mxu0 0
    %2952 = vmatprep.subr.bf16.mxu0 0
    %2953 = vmatpush1.bf16.msra.mxu0 0
    %2954 = vmatprep.subr.bf16.mxu0 0
    %2955 = vmatpush1.bf16.msra.mxu0 0
    %2956 = vmatprep.subr.bf16.mxu0 0
    %2957 = vmatpush1.bf16.msra.mxu0 0
    %2958 = vmatprep.subr.bf16.mxu0 0
    %2959 = vmatpush1.bf16.msra.mxu0 0
    %2960 = vmatprep.subr.bf16.mxu0 0
    %2961 = vmatpush1.bf16.msra.mxu0 0
    %2962 = vmatprep.subr.bf16.mxu0 0
    %2963 = vmatpush1.bf16.msra.mxu0 0
    %2964 = vmatprep.mubr.bf16.mxu0 0
    %2965 = vmatmul.mubr.bf16.gmra.mrb[0].mxu0 %v2871
    %v2966 = vpop.f32.mrb[0].mxu0
    %v2967 = vadd.f32 0.0, %v2966
    %v2968 = vpop.f32.mrb[0].mxu0
    %v2969 = vadd.f32 0.0, %v2968
    %v2970 = vpop.f32.mrb[0].mxu0
    %v2971 = vadd.f32 0.0, %v2970
    %v2972 = vpop.f32.mrb[0].mxu0
    %v2973 = vadd.f32 0.0, %v2972
    %2974 = vdwg.mxu0
    %v2975 = vadd.f32 %v2881, %v2924
    %v2976 = vadd.f32 %v2882, %v2926
    %v2977 = vadd.f32 %v2883, %v2967
    %v2978 = vadd.f32 %v2884, %v2969
    %v2979 = vadd.f32 %v2885, %v2928
    %v2980 = vadd.f32 %v2886, %v2930
    %v2981 = vadd.f32 %v2887, %v2971
    %v2982 = vadd.f32 %v2888, %v2973
    %v2983 = vmul.f32 %v2975, 0.5
    %v2984 = vmul.f32 %v2979, 0.5
    %v2985 = vtanh.pop %v2983
    %v2986 = vtanh.pop %v2984
    %v2987 = vadd.f32 %v2985, 1.0
    %v2988 = vadd.f32 %v2986, 1.0
    %v2989 = vmul.f32 %v2987, 0.5
    %v2990 = vmul.f32 %v2988, 0.5
    %v2991 = vmul.f32 %v2976, 0.5
    %v2992 = vmul.f32 %v2980, 0.5
    %v2993 = vtanh.pop %v2991
    %v2994 = vtanh.pop %v2992
    %v2995 = vadd.f32 %v2993, 1.0
    %v2996 = vadd.f32 %v2994, 1.0
    %v2997 = vmul.f32 %v2995, 0.5
    %v2998 = vmul.f32 %v2996, 0.5
    %v2999 = vtanh.pop %v2977
    %v3000 = vtanh.pop %v2981
    %v3001 = vmul.f32 %v2978, 0.5
    %v3002 = vmul.f32 %v2982, 0.5
    %v3003 = vtanh.pop %v3001
    %v3004 = vtanh.pop %v3002
    %v3005 = vadd.f32 %v3003, 1.0
    %v3006 = vadd.f32 %v3004, 1.0
    %v3007 = vmul.f32 %v3005, 0.5
    %v3008 = vmul.f32 %v3006, 0.5
    %v3009 = vmul.f32 %v2997, %v2865
    %v3010 = vmul.f32 %v2998, %v2866
    %v3011 = vmul.f32 %v2989, %v2999
    %v3012 = vmul.f32 %v2990, %v3000
    %v3013 = vadd.f32 %v3009, %v3011
    %v3014 = vadd.f32 %v3010, %v3012
    %v3015 = vtanh.pop %v3013
    %v3016 = vtanh.pop %v3014
    %v3017 = vmul.f32 %v3007, %v3015
    %v3018 = vmul.f32 %v3008, %v3016
    %v3019 = vpack.c.bf16 %v3018, %v3017
    %v3021 = vunpack.c.l.b16 %v3019
    %v3022 = vunpack.c.h.b16 %v3019
    %v3023 = vpack.c.b16 %v3021, %v3021
    %v3024 = vpack.c.b16 %v3022, %v3022
    %3027 = vst [vmem:[%s1047] sm:$0xf] %v3023
    %3028 = vst [vmem:[%s1047 + $0x4] sm:$0xf] %v3024
    %v3029 = vld [vmem:[%s1052] sm:$0xff]
    %v3030 = vld [vmem:[%s1052 + $0x8] sm:$0xff]
    %v3031 = vld [vmem:[%s1052 + $0x10] sm:$0xff]
    %v3032 = vld [vmem:[%s1052 + $0x18] sm:$0xff]
    %v3033 = vld [vmem:[%s1052 + $0x20] sm:$0xff]
    %v3034 = vld [vmem:[%s1052 + $0x28] sm:$0xff]
    %v3035 = vld [vmem:[%s1052 + $0x30] sm:$0xff]
    %v3036 = vld [vmem:[%s1052 + $0x38] sm:$0xff]
    %3037 = vmatprep.subr.bf16.mxu0 %v2678
    %3038 = vmatpush1.bf16.msra.mxu0 %v2677
    %3039 = vmatprep.subr.bf16.mxu0 %v2682
    %3040 = vmatpush1.bf16.msra.mxu0 %v2681
    %3041 = vmatprep.subr.bf16.mxu0 %v2686
    %3042 = vmatpush1.bf16.msra.mxu0 %v2685
    %3043 = vmatprep.subr.bf16.mxu0 %v2690
    %3044 = vmatpush1.bf16.msra.mxu0 %v2689
    %3045 = vmatprep.subr.bf16.mxu0 %v2694
    %3046 = vmatpush1.bf16.msra.mxu0 %v2693
    %3047 = vmatprep.subr.bf16.mxu0 %v2698
    %3048 = vmatpush1.bf16.msra.mxu0 %v2697
    %3049 = vmatprep.subr.bf16.mxu0 %v2702
    %3050 = vmatpush1.bf16.msra.mxu0 %v2701
    %3051 = vmatprep.subr.bf16.mxu0 %v2706
    %3052 = vmatpush1.bf16.msra.mxu0 %v2705
    %3053 = vmatprep.subr.bf16.mxu0 0
    %3054 = vmatpush1.bf16.msra.mxu0 0
    %3055 = vmatprep.subr.bf16.mxu0 0
    %3056 = vmatpush1.bf16.msra.mxu0 0
    %3057 = vmatprep.subr.bf16.mxu0 0
    %3058 = vmatpush1.bf16.msra.mxu0 0
    %3059 = vmatprep.subr.bf16.mxu0 0
    %3060 = vmatpush1.bf16.msra.mxu0 0
    %3061 = vmatprep.subr.bf16.mxu0 0
    %3062 = vmatpush1.bf16.msra.mxu0 0
    %3063 = vmatprep.subr.bf16.mxu0 0
    %3064 = vmatpush1.bf16.msra.mxu0 0
    %3065 = vmatprep.subr.bf16.mxu0 0
    %3066 = vmatpush1.bf16.msra.mxu0 0
    %3067 = vmatprep.subr.bf16.mxu0 0
    %3068 = vmatpush1.bf16.msra.mxu0 0
    %3069 = vmatprep.mubr.bf16.mxu0 0
    %3070 = vmatmul.mubr.bf16.gmra.mrb[0].mxu0 %v3019
    %v3071 = vpop.f32.mrb[0].mxu0
    %v3072 = vadd.f32 0.0, %v3071
    %v3073 = vpop.f32.mrb[0].mxu0
    %v3074 = vadd.f32 0.0, %v3073
    %v3075 = vpop.f32.mrb[0].mxu0
    %v3076 = vadd.f32 0.0, %v3075
    %v3077 = vpop.f32.mrb[0].mxu0
    %v3078 = vadd.f32 0.0, %v3077
    %3079 = vdwg.mxu0
    %3080 = vmatprep.subr.bf16.mxu0 %v2680
    %3081 = vmatpush1.bf16.msra.mxu0 %v2679
    %3082 = vmatprep.subr.bf16.mxu0 %v2684
    %3083 = vmatpush1.bf16.msra.mxu0 %v2683
    %3084 = vmatprep.subr.bf16.mxu0 %v2688
    %3085 = vmatpush1.bf16.msra.mxu0 %v2687
    %3086 = vmatprep.subr.bf16.mxu0 %v2692
    %3087 = vmatpush1.bf16.msra.mxu0 %v2691
    %3088 = vmatprep.subr.bf16.mxu0 %v2696
    %3089 = vmatpush1.bf16.msra.mxu0 %v2695
    %3090 = vmatprep.subr.bf16.mxu0 %v2700
    %3091 = vmatpush1.bf16.msra.mxu0 %v2699
    %3092 = vmatprep.subr.bf16.mxu0 %v2704
    %3093 = vmatpush1.bf16.msra.mxu0 %v2703
    %3094 = vmatprep.subr.bf16.mxu0 %v2708
    %3095 = vmatpush1.bf16.msra.mxu0 %v2707
    %3096 = vmatprep.subr.bf16.mxu0 0
    %3097 = vmatpush1.bf16.msra.mxu0 0
    %3098 = vmatprep.subr.bf16.mxu0 0
    %3099 = vmatpush1.bf16.msra.mxu0 0
    %3100 = vmatprep.subr.bf16.mxu0 0
    %3101 = vmatpush1.bf16.msra.mxu0 0
    %3102 = vmatprep.subr.bf16.mxu0 0
    %3103 = vmatpush1.bf16.msra.mxu0 0
    %3104 = vmatprep.subr.bf16.mxu0 0
    %3105 = vmatpush1.bf16.msra.mxu0 0
    %3106 = vmatprep.subr.bf16.mxu0 0
    %3107 = vmatpush1.bf16.msra.mxu0 0
    %3108 = vmatprep.subr.bf16.mxu0 0
    %3109 = vmatpush1.bf16.msra.mxu0 0
    %3110 = vmatprep.subr.bf16.mxu0 0
    %3111 = vmatpush1.bf16.msra.mxu0 0
    %3112 = vmatprep.mubr.bf16.mxu0 0
    %3113 = vmatmul.mubr.bf16.gmra.mrb[0].mxu0 %v3019
    %v3114 = vpop.f32.mrb[0].mxu0
    %v3115 = vadd.f32 0.0, %v3114
    %v3116 = vpop.f32.mrb[0].mxu0
    %v3117 = vadd.f32 0.0, %v3116
    %v3118 = vpop.f32.mrb[0].mxu0
    %v3119 = vadd.f32 0.0, %v3118
    %v3120 = vpop.f32.mrb[0].mxu0
    %v3121 = vadd.f32 0.0, %v3120
    %3122 = vdwg.mxu0
    %v3123 = vadd.f32 %v3029, %v3072
    %v3124 = vadd.f32 %v3030, %v3074
    %v3125 = vadd.f32 %v3031, %v3115
    %v3126 = vadd.f32 %v3032, %v3117
    %v3127 = vadd.f32 %v3033, %v3076
    %v3128 = vadd.f32 %v3034, %v3078
    %v3129 = vadd.f32 %v3035, %v3119
    %v3130 = vadd.f32 %v3036, %v3121
    %v3131 = vmul.f32 %v3123, 0.5
    %v3132 = vmul.f32 %v3127, 0.5
    %v3133 = vtanh.pop %v3131
    %v3134 = vtanh.pop %v3132
    %v3135 = vadd.f32 %v3133, 1.0
    %v3136 = vadd.f32 %v3134, 1.0
    %v3137 = vmul.f32 %v3135, 0.5
    %v3138 = vmul.f32 %v3136, 0.5
    %v3139 = vmul.f32 %v3124, 0.5
    %v3140 = vmul.f32 %v3128, 0.5
    %v3141 = vtanh.pop %v3139
    %v3142 = vtanh.pop %v3140
    %v3143 = vadd.f32 %v3141, 1.0
    %v3144 = vadd.f32 %v3142, 1.0
    %v3145 = vmul.f32 %v3143, 0.5
    %v3146 = vmul.f32 %v3144, 0.5
    %v3147 = vtanh.pop %v3125
    %v3148 = vtanh.pop %v3129
    %v3149 = vmul.f32 %v3126, 0.5
    %v3150 = vmul.f32 %v3130, 0.5
    %v3151 = vtanh.pop %v3149
    %v3152 = vtanh.pop %v3150
    %v3153 = vadd.f32 %v3151, 1.0
    %v3154 = vadd.f32 %v3152, 1.0
    %v3155 = vmul.f32 %v3153, 0.5
    %v3156 = vmul.f32 %v3154, 0.5
    %v3157 = vmul.f32 %v3145, %v3013
    %v3158 = vmul.f32 %v3146, %v3014
    %v3159 = vmul.f32 %v3137, %v3147
    %v3160 = vmul.f32 %v3138, %v3148
    %v3161 = vadd.f32 %v3157, %v3159
    %v3162 = vadd.f32 %v3158, %v3160
    %v3163 = vtanh.pop %v3161
    %v3164 = vtanh.pop %v3162
    %v3165 = vmul.f32 %v3155, %v3163
    %v3166 = vmul.f32 %v3156, %v3164
    %v3167 = vpack.c.bf16 %v3166, %v3165
    %v3169 = vunpack.c.l.b16 %v3167
    %v3170 = vunpack.c.h.b16 %v3167
    %v3171 = vpack.c.b16 %v3169, %v3169
    %v3172 = vpack.c.b16 %v3170, %v3170
    %3175 = vst [vmem:[%s1199] sm:$0xf] %v3171
    %3176 = vst [vmem:[%s1199 + $0x4] sm:$0xf] %v3172
    %v3177 = vld [vmem:[%s1204] sm:$0xff]
    %v3178 = vld [vmem:[%s1204 + $0x8] sm:$0xff]
    %v3179 = vld [vmem:[%s1204 + $0x10] sm:$0xff]
    %v3180 = vld [vmem:[%s1204 + $0x18] sm:$0xff]
    %v3181 = vld [vmem:[%s1204 + $0x20] sm:$0xff]
    %v3182 = vld [vmem:[%s1204 + $0x28] sm:$0xff]
    %v3183 = vld [vmem:[%s1204 + $0x30] sm:$0xff]
    %v3184 = vld [vmem:[%s1204 + $0x38] sm:$0xff]
    %3185 = vmatprep.subr.bf16.mxu0 %v2678
    %3186 = vmatpush1.bf16.msra.mxu0 %v2677
    %3187 = vmatprep.subr.bf16.mxu0 %v2682
    %3188 = vmatpush1.bf16.msra.mxu0 %v2681
    %3189 = vmatprep.subr.bf16.mxu0 %v2686
    %3190 = vmatpush1.bf16.msra.mxu0 %v2685
    %3191 = vmatprep.subr.bf16.mxu0 %v2690
    %3192 = vmatpush1.bf16.msra.mxu0 %v2689
    %3193 = vmatprep.subr.bf16.mxu0 %v2694
    %3194 = vmatpush1.bf16.msra.mxu0 %v2693
    %3195 = vmatprep.subr.bf16.mxu0 %v2698
    %3196 = vmatpush1.bf16.msra.mxu0 %v2697
    %3197 = vmatprep.subr.bf16.mxu0 %v2702
    %3198 = vmatpush1.bf16.msra.mxu0 %v2701
    %3199 = vmatprep.subr.bf16.mxu0 %v2706
    %3200 = vmatpush1.bf16.msra.mxu0 %v2705
    %3201 = vmatprep.subr.bf16.mxu0 0
    %3202 = vmatpush1.bf16.msra.mxu0 0
    %3203 = vmatprep.subr.bf16.mxu0 0
    %3204 = vmatpush1.bf16.msra.mxu0 0
    %3205 = vmatprep.subr.bf16.mxu0 0
    %3206 = vmatpush1.bf16.msra.mxu0 0
    %3207 = vmatprep.subr.bf16.mxu0 0
    %3208 = vmatpush1.bf16.msra.mxu0 0
    %3209 = vmatprep.subr.bf16.mxu0 0
    %3210 = vmatpush1.bf16.msra.mxu0 0
    %3211 = vmatprep.subr.bf16.mxu0 0
    %3212 = vmatpush1.bf16.msra.mxu0 0
    %3213 = vmatprep.subr.bf16.mxu0 0
    %3214 = vmatpush1.bf16.msra.mxu0 0
    %3215 = vmatprep.subr.bf16.mxu0 0
    %3216 = vmatpush1.bf16.msra.mxu0 0
    %3217 = vmatprep.mubr.bf16.mxu0 0
    %3218 = vmatmul.mubr.bf16.gmra.mrb[0].mxu0 %v3167
    %v3219 = vpop.f32.mrb[0].mxu0
    %v3220 = vadd.f32 0.0, %v3219
    %v3221 = vpop.f32.mrb[0].mxu0
    %v3222 = vadd.f32 0.0, %v3221
    %v3223 = vpop.f32.mrb[0].mxu0
    %v3224 = vadd.f32 0.0, %v3223
    %v3225 = vpop.f32.mrb[0].mxu0
    %v3226 = vadd.f32 0.0, %v3225
    %3227 = vdwg.mxu0
    %3228 = vmatprep.subr.bf16.mxu0 %v2680
    %3229 = vmatpush1.bf16.msra.mxu0 %v2679
    %3230 = vmatprep.subr.bf16.mxu0 %v2684
    %3231 = vmatpush1.bf16.msra.mxu0 %v2683
    %3232 = vmatprep.subr.bf16.mxu0 %v2688
    %3233 = vmatpush1.bf16.msra.mxu0 %v2687
    %3234 = vmatprep.subr.bf16.mxu0 %v2692
    %3235 = vmatpush1.bf16.msra.mxu0 %v2691
    %3236 = vmatprep.subr.bf16.mxu0 %v2696
    %3237 = vmatpush1.bf16.msra.mxu0 %v2695
    %3238 = vmatprep.subr.bf16.mxu0 %v2700
    %3239 = vmatpush1.bf16.msra.mxu0 %v2699
    %3240 = vmatprep.subr.bf16.mxu0 %v2704
    %3241 = vmatpush1.bf16.msra.mxu0 %v2703
    %3242 = vmatprep.subr.bf16.mxu0 %v2708
    %3243 = vmatpush1.bf16.msra.mxu0 %v2707
    %3244 = vmatprep.subr.bf16.mxu0 0
    %3245 = vmatpush1.bf16.msra.mxu0 0
    %3246 = vmatprep.subr.bf16.mxu0 0
    %3247 = vmatpush1.bf16.msra.mxu0 0
    %3248 = vmatprep.subr.bf16.mxu0 0
    %3249 = vmatpush1.bf16.msra.mxu0 0
    %3250 = vmatprep.subr.bf16.mxu0 0
    %3251 = vmatpush1.bf16.msra.mxu0 0
    %3252 = vmatprep.subr.bf16.mxu0 0
    %3253 = vmatpush1.bf16.msra.mxu0 0
    %3254 = vmatprep.subr.bf16.mxu0 0
    %3255 = vmatpush1.bf16.msra.mxu0 0
    %3256 = vmatprep.subr.bf16.mxu0 0
    %3257 = vmatpush1.bf16.msra.mxu0 0
    %3258 = vmatprep.subr.bf16.mxu0 0
    %3259 = vmatpush1.bf16.msra.mxu0 0
    %3260 = vmatprep.mubr.bf16.mxu0 0
    %3261 = vmatmul.mubr.bf16.gmra.mrb[0].mxu0 %v3167
    %v3262 = vpop.f32.mrb[0].mxu0
    %v3263 = vadd.f32 0.0, %v3262
    %v3264 = vpop.f32.mrb[0].mxu0
    %v3265 = vadd.f32 0.0, %v3264
    %v3266 = vpop.f32.mrb[0].mxu0
    %v3267 = vadd.f32 0.0, %v3266
    %v3268 = vpop.f32.mrb[0].mxu0
    %v3269 = vadd.f32 0.0, %v3268
    %3270 = vdwg.mxu0
    %v3271 = vadd.f32 %v3177, %v3220
    %v3272 = vadd.f32 %v3178, %v3222
    %v3273 = vadd.f32 %v3179, %v3263
    %v3274 = vadd.f32 %v3180, %v3265
    %v3275 = vadd.f32 %v3181, %v3224
    %v3276 = vadd.f32 %v3182, %v3226
    %v3277 = vadd.f32 %v3183, %v3267
    %v3278 = vadd.f32 %v3184, %v3269
    %v3279 = vmul.f32 %v3271, 0.5
    %v3280 = vmul.f32 %v3275, 0.5
    %v3281 = vtanh.pop %v3279
    %v3282 = vtanh.pop %v3280
    %v3283 = vadd.f32 %v3281, 1.0
    %v3284 = vadd.f32 %v3282, 1.0
    %v3285 = vmul.f32 %v3283, 0.5
    %v3286 = vmul.f32 %v3284, 0.5
    %v3287 = vmul.f32 %v3272, 0.5
    %v3288 = vmul.f32 %v3276, 0.5
    %v3289 = vtanh.pop %v3287
    %v3290 = vtanh.pop %v3288
    %v3291 = vadd.f32 %v3289, 1.0
    %v3292 = vadd.f32 %v3290, 1.0
    %v3293 = vmul.f32 %v3291, 0.5
    %v3294 = vmul.f32 %v3292, 0.5
    %v3295 = vtanh.pop %v3273
    %v3296 = vtanh.pop %v3277
    %v3297 = vmul.f32 %v3274, 0.5
    %v3298 = vmul.f32 %v3278, 0.5
    %v3299 = vtanh.pop %v3297
    %v3300 = vtanh.pop %v3298
    %v3301 = vadd.f32 %v3299, 1.0
    %v3302 = vadd.f32 %v3300, 1.0
    %v3303 = vmul.f32 %v3301, 0.5
    %v3304 = vmul.f32 %v3302, 0.5
    %v3305 = vmul.f32 %v3293, %v3161
    %v3306 = vmul.f32 %v3294, %v3162
    %v3307 = vmul.f32 %v3285, %v3295
    %v3308 = vmul.f32 %v3286, %v3296
    %v3309 = vadd.f32 %v3305, %v3307
    %v3310 = vadd.f32 %v3306, %v3308
    %v3311 = vtanh.pop %v3309
    %v3312 = vtanh.pop %v3310
    %v3313 = vmul.f32 %v3303, %v3311
    %v3314 = vmul.f32 %v3304, %v3312
    %v3315 = vpack.c.bf16 %v3314, %v3313
    %v3317 = vunpack.c.l.b16 %v3315
    %v3318 = vunpack.c.h.b16 %v3315
    %v3319 = vpack.c.b16 %v3317, %v3317
    %v3320 = vpack.c.b16 %v3318, %v3318
    %3323 = vst [vmem:[%s1351] sm:$0xf] %v3319
    %3324 = vst [vmem:[%s1351 + $0x4] sm:$0xf] %v3320
    %v3325 = vld [vmem:[%s1356] sm:$0xff]
    %v3326 = vld [vmem:[%s1356 + $0x8] sm:$0xff]
    %v3327 = vld [vmem:[%s1356 + $0x10] sm:$0xff]
    %v3328 = vld [vmem:[%s1356 + $0x18] sm:$0xff]
    %v3329 = vld [vmem:[%s1356 + $0x20] sm:$0xff]
    %v3330 = vld [vmem:[%s1356 + $0x28] sm:$0xff]
    %v3331 = vld [vmem:[%s1356 + $0x30] sm:$0xff]
    %v3332 = vld [vmem:[%s1356 + $0x38] sm:$0xff]
    %3333 = vmatprep.subr.bf16.mxu0 %v2678
    %3334 = vmatpush1.bf16.msra.mxu0 %v2677
    %3335 = vmatprep.subr.bf16.mxu0 %v2682
    %3336 = vmatpush1.bf16.msra.mxu0 %v2681
    %3337 = vmatprep.subr.bf16.mxu0 %v2686
    %3338 = vmatpush1.bf16.msra.mxu0 %v2685
    %3339 = vmatprep.subr.bf16.mxu0 %v2690
    %3340 = vmatpush1.bf16.msra.mxu0 %v2689
    %3341 = vmatprep.subr.bf16.mxu0 %v2694
    %3342 = vmatpush1.bf16.msra.mxu0 %v2693
    %3343 = vmatprep.subr.bf16.mxu0 %v2698
    %3344 = vmatpush1.bf16.msra.mxu0 %v2697
    %3345 = vmatprep.subr.bf16.mxu0 %v2702
    %3346 = vmatpush1.bf16.msra.mxu0 %v2701
    %3347 = vmatprep.subr.bf16.mxu0 %v2706
    %3348 = vmatpush1.bf16.msra.mxu0 %v2705
    %3349 = vmatprep.subr.bf16.mxu0 0
    %3350 = vmatpush1.bf16.msra.mxu0 0
    %3351 = vmatprep.subr.bf16.mxu0 0
    %3352 = vmatpush1.bf16.msra.mxu0 0
    %3353 = vmatprep.subr.bf16.mxu0 0
    %3354 = vmatpush1.bf16.msra.mxu0 0
    %3355 = vmatprep.subr.bf16.mxu0 0
    %3356 = vmatpush1.bf16.msra.mxu0 0
    %3357 = vmatprep.subr.bf16.mxu0 0
    %3358 = vmatpush1.bf16.msra.mxu0 0
    %3359 = vmatprep.subr.bf16.mxu0 0
    %3360 = vmatpush1.bf16.msra.mxu0 0
    %3361 = vmatprep.subr.bf16.mxu0 0
    %3362 = vmatpush1.bf16.msra.mxu0 0
    %3363 = vmatprep.subr.bf16.mxu0 0
    %3364 = vmatpush1.bf16.msra.mxu0 0
    %3365 = vmatprep.mubr.bf16.mxu0 0
    %3366 = vmatmul.mubr.bf16.gmra.mrb[0].mxu0 %v3315
    %v3367 = vpop.f32.mrb[0].mxu0
    %v3368 = vadd.f32 0.0, %v3367
    %v3369 = vpop.f32.mrb[0].mxu0
    %v3370 = vadd.f32 0.0, %v3369
    %v3371 = vpop.f32.mrb[0].mxu0
    %v3372 = vadd.f32 0.0, %v3371
    %v3373 = vpop.f32.mrb[0].mxu0
    %v3374 = vadd.f32 0.0, %v3373
    %3375 = vdwg.mxu0
    %3376 = vmatprep.subr.bf16.mxu0 %v2680
    %3377 = vmatpush1.bf16.msra.mxu0 %v2679
    %3378 = vmatprep.subr.bf16.mxu0 %v2684
    %3379 = vmatpush1.bf16.msra.mxu0 %v2683
    %3380 = vmatprep.subr.bf16.mxu0 %v2688
    %3381 = vmatpush1.bf16.msra.mxu0 %v2687
    %3382 = vmatprep.subr.bf16.mxu0 %v2692
    %3383 = vmatpush1.bf16.msra.mxu0 %v2691
    %3384 = vmatprep.subr.bf16.mxu0 %v2696
    %3385 = vmatpush1.bf16.msra.mxu0 %v2695
    %3386 = vmatprep.subr.bf16.mxu0 %v2700
    %3387 = vmatpush1.bf16.msra.mxu0 %v2699
    %3388 = vmatprep.subr.bf16.mxu0 %v2704
    %3389 = vmatpush1.bf16.msra.mxu0 %v2703
    %3390 = vmatprep.subr.bf16.mxu0 %v2708
    %3391 = vmatpush1.bf16.msra.mxu0 %v2707
    %3392 = vmatprep.subr.bf16.mxu0 0
    %3393 = vmatpush1.bf16.msra.mxu0 0
    %3394 = vmatprep.subr.bf16.mxu0 0
    %3395 = vmatpush1.bf16.msra.mxu0 0
    %3396 = vmatprep.subr.bf16.mxu0 0
    %3397 = vmatpush1.bf16.msra.mxu0 0
    %3398 = vmatprep.subr.bf16.mxu0 0
    %3399 = vmatpush1.bf16.msra.mxu0 0
    %3400 = vmatprep.subr.bf16.mxu0 0
    %3401 = vmatpush1.bf16.msra.mxu0 0
    %3402 = vmatprep.subr.bf16.mxu0 0
    %3403 = vmatpush1.bf16.msra.mxu0 0
    %3404 = vmatprep.subr.bf16.mxu0 0
    %3405 = vmatpush1.bf16.msra.mxu0 0
    %3406 = vmatprep.subr.bf16.mxu0 0
    %3407 = vmatpush1.bf16.msra.mxu0 0
    %3408 = vmatprep.mubr.bf16.mxu0 0
    %3409 = vmatmul.mubr.bf16.gmra.mrb[0].mxu0 %v3315
    %v3410 = vpop.f32.mrb[0].mxu0
    %v3411 = vadd.f32 0.0, %v3410
    %v3412 = vpop.f32.mrb[0].mxu0
    %v3413 = vadd.f32 0.0, %v3412
    %v3414 = vpop.f32.mrb[0].mxu0
    %v3415 = vadd.f32 0.0, %v3414
    %v3416 = vpop.f32.mrb[0].mxu0
    %v3417 = vadd.f32 0.0, %v3416
    %3418 = vdwg.mxu0
    %v3419 = vadd.f32 %v3325, %v3368
    %v3420 = vadd.f32 %v3326, %v3370
    %v3421 = vadd.f32 %v3327, %v3411
    %v3422 = vadd.f32 %v3328, %v3413
    %v3423 = vadd.f32 %v3329, %v3372
    %v3424 = vadd.f32 %v3330, %v3374
    %v3425 = vadd.f32 %v3331, %v3415
    %v3426 = vadd.f32 %v3332, %v3417
    %v3427 = vmul.f32 %v3419, 0.5
    %v3428 = vmul.f32 %v3423, 0.5
    %v3429 = vtanh.pop %v3427
    %v3430 = vtanh.pop %v3428
    %v3431 = vadd.f32 %v3429, 1.0
    %v3432 = vadd.f32 %v3430, 1.0
    %v3433 = vmul.f32 %v3431, 0.5
    %v3434 = vmul.f32 %v3432, 0.5
    %v3435 = vmul.f32 %v3420, 0.5
    %v3436 = vmul.f32 %v3424, 0.5
    %v3437 = vtanh.pop %v3435
    %v3438 = vtanh.pop %v3436
    %v3439 = vadd.f32 %v3437, 1.0
    %v3440 = vadd.f32 %v3438, 1.0
    %v3441 = vmul.f32 %v3439, 0.5
    %v3442 = vmul.f32 %v3440, 0.5
    %v3443 = vtanh.pop %v3421
    %v3444 = vtanh.pop %v3425
    %v3445 = vmul.f32 %v3422, 0.5
    %v3446 = vmul.f32 %v3426, 0.5
    %v3447 = vtanh.pop %v3445
    %v3448 = vtanh.pop %v3446
    %v3449 = vadd.f32 %v3447, 1.0
    %v3450 = vadd.f32 %v3448, 1.0
    %v3451 = vmul.f32 %v3449, 0.5
    %v3452 = vmul.f32 %v3450, 0.5
    %v3453 = vmul.f32 %v3441, %v3309
    %v3454 = vmul.f32 %v3442, %v3310
    %v3455 = vmul.f32 %v3433, %v3443
    %v3456 = vmul.f32 %v3434, %v3444
    %v3457 = vadd.f32 %v3453, %v3455
    %v3458 = vadd.f32 %v3454, %v3456
    %v3459 = vtanh.pop %v3457
    %v3460 = vtanh.pop %v3458
    %v3461 = vmul.f32 %v3451, %v3459
    %v3462 = vmul.f32 %v3452, %v3460
    %v3463 = vpack.c.bf16 %v3462, %v3461
    %v3465 = vunpack.c.l.b16 %v3463
    %v3466 = vunpack.c.h.b16 %v3463
    %v3467 = vpack.c.b16 %v3465, %v3465
    %v3468 = vpack.c.b16 %v3466, %v3466
    %3471 = vst [vmem:[%s1503] sm:$0xf] %v3467
    %3472 = vst [vmem:[%s1503 + $0x4] sm:$0xf] %v3468
    %v3473 = vld [vmem:[%s1508] sm:$0xff]
    %v3474 = vld [vmem:[%s1508 + $0x8] sm:$0xff]
    %v3475 = vld [vmem:[%s1508 + $0x10] sm:$0xff]
    %v3476 = vld [vmem:[%s1508 + $0x18] sm:$0xff]
    %v3477 = vld [vmem:[%s1508 + $0x20] sm:$0xff]
    %v3478 = vld [vmem:[%s1508 + $0x28] sm:$0xff]
    %v3479 = vld [vmem:[%s1508 + $0x30] sm:$0xff]
    %v3480 = vld [vmem:[%s1508 + $0x38] sm:$0xff]
    %3481 = vmatprep.subr.bf16.mxu0 %v2678
    %3482 = vmatpush1.bf16.msra.mxu0 %v2677
    %3483 = vmatprep.subr.bf16.mxu0 %v2682
    %3484 = vmatpush1.bf16.msra.mxu0 %v2681
    %3485 = vmatprep.subr.bf16.mxu0 %v2686
    %3486 = vmatpush1.bf16.msra.mxu0 %v2685
    %3487 = vmatprep.subr.bf16.mxu0 %v2690
    %3488 = vmatpush1.bf16.msra.mxu0 %v2689
    %3489 = vmatprep.subr.bf16.mxu0 %v2694
    %3490 = vmatpush1.bf16.msra.mxu0 %v2693
    %3491 = vmatprep.subr.bf16.mxu0 %v2698
    %3492 = vmatpush1.bf16.msra.mxu0 %v2697
    %3493 = vmatprep.subr.bf16.mxu0 %v2702
    %3494 = vmatpush1.bf16.msra.mxu0 %v2701
    %3495 = vmatprep.subr.bf16.mxu0 %v2706
    %3496 = vmatpush1.bf16.msra.mxu0 %v2705
    %3497 = vmatprep.subr.bf16.mxu0 0
    %3498 = vmatpush1.bf16.msra.mxu0 0
    %3499 = vmatprep.subr.bf16.mxu0 0
    %3500 = vmatpush1.bf16.msra.mxu0 0
    %3501 = vmatprep.subr.bf16.mxu0 0
    %3502 = vmatpush1.bf16.msra.mxu0 0
    %3503 = vmatprep.subr.bf16.mxu0 0
    %3504 = vmatpush1.bf16.msra.mxu0 0
    %3505 = vmatprep.subr.bf16.mxu0 0
    %3506 = vmatpush1.bf16.msra.mxu0 0
    %3507 = vmatprep.subr.bf16.mxu0 0
    %3508 = vmatpush1.bf16.msra.mxu0 0
    %3509 = vmatprep.subr.bf16.mxu0 0
    %3510 = vmatpush1.bf16.msra.mxu0 0
    %3511 = vmatprep.subr.bf16.mxu0 0
    %3512 = vmatpush1.bf16.msra.mxu0 0
    %3513 = vmatprep.mubr.bf16.mxu0 0
    %3514 = vmatmul.mubr.bf16.gmra.mrb[0].mxu0 %v3463
    %v3515 = vpop.f32.mrb[0].mxu0
    %v3516 = vadd.f32 0.0, %v3515
    %v3517 = vpop.f32.mrb[0].mxu0
    %v3518 = vadd.f32 0.0, %v3517
    %v3519 = vpop.f32.mrb[0].mxu0
    %v3520 = vadd.f32 0.0, %v3519
    %v3521 = vpop.f32.mrb[0].mxu0
    %v3522 = vadd.f32 0.0, %v3521
    %3523 = vdwg.mxu0
    %3524 = vmatprep.subr.bf16.mxu0 %v2680
    %3525 = vmatpush1.bf16.msra.mxu0 %v2679
    %3526 = vmatprep.subr.bf16.mxu0 %v2684
    %3527 = vmatpush1.bf16.msra.mxu0 %v2683
    %3528 = vmatprep.subr.bf16.mxu0 %v2688
    %3529 = vmatpush1.bf16.msra.mxu0 %v2687
    %3530 = vmatprep.subr.bf16.mxu0 %v2692
    %3531 = vmatpush1.bf16.msra.mxu0 %v2691
    %3532 = vmatprep.subr.bf16.mxu0 %v2696
    %3533 = vmatpush1.bf16.msra.mxu0 %v2695
    %3534 = vmatprep.subr.bf16.mxu0 %v2700
    %3535 = vmatpush1.bf16.msra.mxu0 %v2699
    %3536 = vmatprep.subr.bf16.mxu0 %v2704
    %3537 = vmatpush1.bf16.msra.mxu0 %v2703
    %3538 = vmatprep.subr.bf16.mxu0 %v2708
    %3539 = vmatpush1.bf16.msra.mxu0 %v2707
    %3540 = vmatprep.subr.bf16.mxu0 0
    %3541 = vmatpush1.bf16.msra.mxu0 0
    %3542 = vmatprep.subr.bf16.mxu0 0
    %3543 = vmatpush1.bf16.msra.mxu0 0
    %3544 = vmatprep.subr.bf16.mxu0 0
    %3545 = vmatpush1.bf16.msra.mxu0 0
    %3546 = vmatprep.subr.bf16.mxu0 0
    %3547 = vmatpush1.bf16.msra.mxu0 0
    %3548 = vmatprep.subr.bf16.mxu0 0
    %3549 = vmatpush1.bf16.msra.mxu0 0
    %3550 = vmatprep.subr.bf16.mxu0 0
    %3551 = vmatpush1.bf16.msra.mxu0 0
    %3552 = vmatprep.subr.bf16.mxu0 0
    %3553 = vmatpush1.bf16.msra.mxu0 0
    %3554 = vmatprep.subr.bf16.mxu0 0
    %3555 = vmatpush1.bf16.msra.mxu0 0
    %3556 = vmatprep.mubr.bf16.mxu0 0
    %3557 = vmatmul.mubr.bf16.gmra.mrb[0].mxu0 %v3463
    %v3558 = vpop.f32.mrb[0].mxu0
    %v3559 = vadd.f32 0.0, %v3558
    %v3560 = vpop.f32.mrb[0].mxu0
    %v3561 = vadd.f32 0.0, %v3560
    %v3562 = vpop.f32.mrb[0].mxu0
    %v3563 = vadd.f32 0.0, %v3562
    %v3564 = vpop.f32.mrb[0].mxu0
    %v3565 = vadd.f32 0.0, %v3564
    %3566 = vdwg.mxu0
    %v3567 = vadd.f32 %v3473, %v3516
    %v3568 = vadd.f32 %v3474, %v3518
    %v3569 = vadd.f32 %v3475, %v3559
    %v3570 = vadd.f32 %v3476, %v3561
    %v3571 = vadd.f32 %v3477, %v3520
    %v3572 = vadd.f32 %v3478, %v3522
    %v3573 = vadd.f32 %v3479, %v3563
    %v3574 = vadd.f32 %v3480, %v3565
    %v3575 = vmul.f32 %v3567, 0.5
    %v3576 = vmul.f32 %v3571, 0.5
    %v3577 = vtanh.pop %v3575
    %v3578 = vtanh.pop %v3576
    %v3579 = vadd.f32 %v3577, 1.0
    %v3580 = vadd.f32 %v3578, 1.0
    %v3581 = vmul.f32 %v3579, 0.5
    %v3582 = vmul.f32 %v3580, 0.5
    %v3583 = vmul.f32 %v3568, 0.5
    %v3584 = vmul.f32 %v3572, 0.5
    %v3585 = vtanh.pop %v3583
    %v3586 = vtanh.pop %v3584
    %v3587 = vadd.f32 %v3585, 1.0
    %v3588 = vadd.f32 %v3586, 1.0
    %v3589 = vmul.f32 %v3587, 0.5
    %v3590 = vmul.f32 %v3588, 0.5
    %v3591 = vtanh.pop %v3569
    %v3592 = vtanh.pop %v3573
    %v3593 = vmul.f32 %v3570, 0.5
    %v3594 = vmul.f32 %v3574, 0.5
    %v3595 = vtanh.pop %v3593
    %v3596 = vtanh.pop %v3594
    %v3597 = vadd.f32 %v3595, 1.0
    %v3598 = vadd.f32 %v3596, 1.0
    %v3599 = vmul.f32 %v3597, 0.5
    %v3600 = vmul.f32 %v3598, 0.5
    %v3601 = vmul.f32 %v3589, %v3457
    %v3602 = vmul.f32 %v3590, %v3458
    %v3603 = vmul.f32 %v3581, %v3591
    %v3604 = vmul.f32 %v3582, %v3592
    %v3605 = vadd.f32 %v3601, %v3603
    %v3606 = vadd.f32 %v3602, %v3604
    %v3607 = vtanh.pop %v3605
    %v3608 = vtanh.pop %v3606
    %v3609 = vmul.f32 %v3599, %v3607
    %v3610 = vmul.f32 %v3600, %v3608
    %v3611 = vpack.c.bf16 %v3610, %v3609
    %v3613 = vunpack.c.l.b16 %v3611
    %v3614 = vunpack.c.h.b16 %v3611
    %v3615 = vpack.c.b16 %v3613, %v3613
    %v3616 = vpack.c.b16 %v3614, %v3614
    %3619 = vst [vmem:[%s1655] sm:$0xf] %v3615
    %3620 = vst [vmem:[%s1655 + $0x4] sm:$0xf] %v3616
    %v3621 = vld [vmem:[%s1660] sm:$0xff]
    %v3622 = vld [vmem:[%s1660 + $0x8] sm:$0xff]
    %v3623 = vld [vmem:[%s1660 + $0x10] sm:$0xff]
    %v3624 = vld [vmem:[%s1660 + $0x18] sm:$0xff]
    %v3625 = vld [vmem:[%s1660 + $0x20] sm:$0xff]
    %v3626 = vld [vmem:[%s1660 + $0x28] sm:$0xff]
    %v3627 = vld [vmem:[%s1660 + $0x30] sm:$0xff]
    %v3628 = vld [vmem:[%s1660 + $0x38] sm:$0xff]
    %3629 = vmatprep.subr.bf16.mxu0 %v2678
    %3630 = vmatpush1.bf16.msra.mxu0 %v2677
    %3631 = vmatprep.subr.bf16.mxu0 %v2682
    %3632 = vmatpush1.bf16.msra.mxu0 %v2681
    %3633 = vmatprep.subr.bf16.mxu0 %v2686
    %3634 = vmatpush1.bf16.msra.mxu0 %v2685
    %3635 = vmatprep.subr.bf16.mxu0 %v2690
    %3636 = vmatpush1.bf16.msra.mxu0 %v2689
    %3637 = vmatprep.subr.bf16.mxu0 %v2694
    %3638 = vmatpush1.bf16.msra.mxu0 %v2693
    %3639 = vmatprep.subr.bf16.mxu0 %v2698
    %3640 = vmatpush1.bf16.msra.mxu0 %v2697
    %3641 = vmatprep.subr.bf16.mxu0 %v2702
    %3642 = vmatpush1.bf16.msra.mxu0 %v2701
    %3643 = vmatprep.subr.bf16.mxu0 %v2706
    %3644 = vmatpush1.bf16.msra.mxu0 %v2705
    %3645 = vmatprep.subr.bf16.mxu0 0
    %3646 = vmatpush1.bf16.msra.mxu0 0
    %3647 = vmatprep.subr.bf16.mxu0 0
    %3648 = vmatpush1.bf16.msra.mxu0 0
    %3649 = vmatprep.subr.bf16.mxu0 0
    %3650 = vmatpush1.bf16.msra.mxu0 0
    %3651 = vmatprep.subr.bf16.mxu0 0
    %3652 = vmatpush1.bf16.msra.mxu0 0
    %3653 = vmatprep.subr.bf16.mxu0 0
    %3654 = vmatpush1.bf16.msra.mxu0 0
    %3655 = vmatprep.subr.bf16.mxu0 0
    %3656 = vmatpush1.bf16.msra.mxu0 0
    %3657 = vmatprep.subr.bf16.mxu0 0
    %3658 = vmatpush1.bf16.msra.mxu0 0
    %3659 = vmatprep.subr.bf16.mxu0 0
    %3660 = vmatpush1.bf16.msra.mxu0 0
    %3661 = vmatprep.mubr.bf16.mxu0 0
    %3662 = vmatmul.mubr.bf16.gmra.mrb[0].mxu0 %v3611
    %v3663 = vpop.f32.mrb[0].mxu0
    %v3664 = vadd.f32 0.0, %v3663
    %v3665 = vpop.f32.mrb[0].mxu0
    %v3666 = vadd.f32 0.0, %v3665
    %v3667 = vpop.f32.mrb[0].mxu0
    %v3668 = vadd.f32 0.0, %v3667
    %v3669 = vpop.f32.mrb[0].mxu0
    %v3670 = vadd.f32 0.0, %v3669
    %3671 = vdwg.mxu0
    %3672 = vmatprep.subr.bf16.mxu0 %v2680
    %3673 = vmatpush1.bf16.msra.mxu0 %v2679
    %3674 = vmatprep.subr.bf16.mxu0 %v2684
    %3675 = vmatpush1.bf16.msra.mxu0 %v2683
    %3676 = vmatprep.subr.bf16.mxu0 %v2688
    %3677 = vmatpush1.bf16.msra.mxu0 %v2687
    %3678 = vmatprep.subr.bf16.mxu0 %v2692
    %3679 = vmatpush1.bf16.msra.mxu0 %v2691
    %3680 = vmatprep.subr.bf16.mxu0 %v2696
    %3681 = vmatpush1.bf16.msra.mxu0 %v2695
    %3682 = vmatprep.subr.bf16.mxu0 %v2700
    %3683 = vmatpush1.bf16.msra.mxu0 %v2699
    %3684 = vmatprep.subr.bf16.mxu0 %v2704
    %3685 = vmatpush1.bf16.msra.mxu0 %v2703
    %3686 = vmatprep.subr.bf16.mxu0 %v2708
    %3687 = vmatpush1.bf16.msra.mxu0 %v2707
    %3688 = vmatprep.subr.bf16.mxu0 0
    %3689 = vmatpush1.bf16.msra.mxu0 0
    %3690 = vmatprep.subr.bf16.mxu0 0
    %3691 = vmatpush1.bf16.msra.mxu0 0
    %3692 = vmatprep.subr.bf16.mxu0 0
    %3693 = vmatpush1.bf16.msra.mxu0 0
    %3694 = vmatprep.subr.bf16.mxu0 0
    %3695 = vmatpush1.bf16.msra.mxu0 0
    %3696 = vmatprep.subr.bf16.mxu0 0
    %3697 = vmatpush1.bf16.msra.mxu0 0
    %3698 = vmatprep.subr.bf16.mxu0 0
    %3699 = vmatpush1.bf16.msra.mxu0 0
    %3700 = vmatprep.subr.bf16.mxu0 0
    %3701 = vmatpush1.bf16.msra.mxu0 0
    %3702 = vmatprep.subr.bf16.mxu0 0
    %3703 = vmatpush1.bf16.msra.mxu0 0
    %3704 = vmatprep.mubr.bf16.mxu0 0
    %3705 = vmatmul.mubr.bf16.gmra.mrb[0].mxu0 %v3611
    %v3706 = vpop.f32.mrb[0].mxu0
    %v3707 = vadd.f32 0.0, %v3706
    %v3708 = vpop.f32.mrb[0].mxu0
    %v3709 = vadd.f32 0.0, %v3708
    %v3710 = vpop.f32.mrb[0].mxu0
    %v3711 = vadd.f32 0.0, %v3710
    %v3712 = vpop.f32.mrb[0].mxu0
    %v3713 = vadd.f32 0.0, %v3712
    %3714 = vdwg.mxu0
    %v3715 = vadd.f32 %v3621, %v3664
    %v3716 = vadd.f32 %v3622, %v3666
    %v3717 = vadd.f32 %v3623, %v3707
    %v3718 = vadd.f32 %v3624, %v3709
    %v3719 = vadd.f32 %v3625, %v3668
    %v3720 = vadd.f32 %v3626, %v3670
    %v3721 = vadd.f32 %v3627, %v3711
    %v3722 = vadd.f32 %v3628, %v3713
    %v3723 = vmul.f32 %v3715, 0.5
    %v3724 = vmul.f32 %v3719, 0.5
    %v3725 = vtanh.pop %v3723
    %v3726 = vtanh.pop %v3724
    %v3727 = vadd.f32 %v3725, 1.0
    %v3728 = vadd.f32 %v3726, 1.0
    %v3729 = vmul.f32 %v3727, 0.5
    %v3730 = vmul.f32 %v3728, 0.5
    %v3731 = vmul.f32 %v3716, 0.5
    %v3732 = vmul.f32 %v3720, 0.5
    %v3733 = vtanh.pop %v3731
    %v3734 = vtanh.pop %v3732
    %v3735 = vadd.f32 %v3733, 1.0
    %v3736 = vadd.f32 %v3734, 1.0
    %v3737 = vmul.f32 %v3735, 0.5
    %v3738 = vmul.f32 %v3736, 0.5
    %v3739 = vtanh.pop %v3717
    %v3740 = vtanh.pop %v3721
    %v3741 = vmul.f32 %v3718, 0.5
    %v3742 = vmul.f32 %v3722, 0.5
    %v3743 = vtanh.pop %v3741
    %v3744 = vtanh.pop %v3742
    %v3745 = vadd.f32 %v3743, 1.0
    %v3746 = vadd.f32 %v3744, 1.0
    %v3747 = vmul.f32 %v3745, 0.5
    %v3748 = vmul.f32 %v3746, 0.5
    %v3749 = vmul.f32 %v3737, %v3605
    %v3750 = vmul.f32 %v3738, %v3606
    %v3751 = vmul.f32 %v3729, %v3739
    %v3752 = vmul.f32 %v3730, %v3740
    %v3753 = vadd.f32 %v3749, %v3751
    %v3754 = vadd.f32 %v3750, %v3752
    %v3755 = vtanh.pop %v3753
    %v3756 = vtanh.pop %v3754
    %v3757 = vmul.f32 %v3747, %v3755
    %v3758 = vmul.f32 %v3748, %v3756
    %v3759 = vpack.c.bf16 %v3758, %v3757
    %v3761 = vunpack.c.l.b16 %v3759
    %v3762 = vunpack.c.h.b16 %v3759
    %v3763 = vpack.c.b16 %v3761, %v3761
    %v3764 = vpack.c.b16 %v3762, %v3762
    %3767 = vst [vmem:[%s1807] sm:$0xf] %v3763
    %3768 = vst [vmem:[%s1807 + $0x4] sm:$0xf] %v3764
    %v3769 = vld [vmem:[%s1812] sm:$0xff]
    %v3770 = vld [vmem:[%s1812 + $0x8] sm:$0xff]
    %v3771 = vld [vmem:[%s1812 + $0x10] sm:$0xff]
    %v3772 = vld [vmem:[%s1812 + $0x18] sm:$0xff]
    %v3773 = vld [vmem:[%s1812 + $0x20] sm:$0xff]
    %v3774 = vld [vmem:[%s1812 + $0x28] sm:$0xff]
    %v3775 = vld [vmem:[%s1812 + $0x30] sm:$0xff]
    %v3776 = vld [vmem:[%s1812 + $0x38] sm:$0xff]
    %3777 = vmatprep.subr.bf16.mxu0 %v2678
    %3778 = vmatpush1.bf16.msra.mxu0 %v2677
    %3779 = vmatprep.subr.bf16.mxu0 %v2682
    %3780 = vmatpush1.bf16.msra.mxu0 %v2681
    %3781 = vmatprep.subr.bf16.mxu0 %v2686
    %3782 = vmatpush1.bf16.msra.mxu0 %v2685
    %3783 = vmatprep.subr.bf16.mxu0 %v2690
    %3784 = vmatpush1.bf16.msra.mxu0 %v2689
    %3785 = vmatprep.subr.bf16.mxu0 %v2694
    %3786 = vmatpush1.bf16.msra.mxu0 %v2693
    %3787 = vmatprep.subr.bf16.mxu0 %v2698
    %3788 = vmatpush1.bf16.msra.mxu0 %v2697
    %3789 = vmatprep.subr.bf16.mxu0 %v2702
    %3790 = vmatpush1.bf16.msra.mxu0 %v2701
    %3791 = vmatprep.subr.bf16.mxu0 %v2706
    %3792 = vmatpush1.bf16.msra.mxu0 %v2705
    %3793 = vmatprep.subr.bf16.mxu0 0
    %3794 = vmatpush1.bf16.msra.mxu0 0
    %3795 = vmatprep.subr.bf16.mxu0 0
    %3796 = vmatpush1.bf16.msra.mxu0 0
    %3797 = vmatprep.subr.bf16.mxu0 0
    %3798 = vmatpush1.bf16.msra.mxu0 0
    %3799 = vmatprep.subr.bf16.mxu0 0
    %3800 = vmatpush1.bf16.msra.mxu0 0
    %3801 = vmatprep.subr.bf16.mxu0 0
    %3802 = vmatpush1.bf16.msra.mxu0 0
    %3803 = vmatprep.subr.bf16.mxu0 0
    %3804 = vmatpush1.bf16.msra.mxu0 0
    %3805 = vmatprep.subr.bf16.mxu0 0
    %3806 = vmatpush1.bf16.msra.mxu0 0
    %3807 = vmatprep.subr.bf16.mxu0 0
    %3808 = vmatpush1.bf16.msra.mxu0 0
    %3809 = vmatprep.mubr.bf16.mxu0 0
    %3810 = vmatmul.mubr.bf16.gmra.mrb[0].mxu0 %v3759
    %v3811 = vpop.f32.mrb[0].mxu0
    %v3812 = vadd.f32 0.0, %v3811
    %v3813 = vpop.f32.mrb[0].mxu0
    %v3814 = vadd.f32 0.0, %v3813
    %v3815 = vpop.f32.mrb[0].mxu0
    %v3816 = vadd.f32 0.0, %v3815
    %v3817 = vpop.f32.mrb[0].mxu0
    %v3818 = vadd.f32 0.0, %v3817
    %3819 = vdwg.mxu0
    %3820 = vmatprep.subr.bf16.mxu0 %v2680
    %3821 = vmatpush1.bf16.msra.mxu0 %v2679
    %3822 = vmatprep.subr.bf16.mxu0 %v2684
    %3823 = vmatpush1.bf16.msra.mxu0 %v2683
    %3824 = vmatprep.subr.bf16.mxu0 %v2688
    %3825 = vmatpush1.bf16.msra.mxu0 %v2687
    %3826 = vmatprep.subr.bf16.mxu0 %v2692
    %3827 = vmatpush1.bf16.msra.mxu0 %v2691
    %3828 = vmatprep.subr.bf16.mxu0 %v2696
    %3829 = vmatpush1.bf16.msra.mxu0 %v2695
    %3830 = vmatprep.subr.bf16.mxu0 %v2700
    %3831 = vmatpush1.bf16.msra.mxu0 %v2699
    %3832 = vmatprep.subr.bf16.mxu0 %v2704
    %3833 = vmatpush1.bf16.msra.mxu0 %v2703
    %3834 = vmatprep.subr.bf16.mxu0 %v2708
    %3835 = vmatpush1.bf16.msra.mxu0 %v2707
    %3836 = vmatprep.subr.bf16.mxu0 0
    %3837 = vmatpush1.bf16.msra.mxu0 0
    %3838 = vmatprep.subr.bf16.mxu0 0
    %3839 = vmatpush1.bf16.msra.mxu0 0
    %3840 = vmatprep.subr.bf16.mxu0 0
    %3841 = vmatpush1.bf16.msra.mxu0 0
    %3842 = vmatprep.subr.bf16.mxu0 0
    %3843 = vmatpush1.bf16.msra.mxu0 0
    %3844 = vmatprep.subr.bf16.mxu0 0
    %3845 = vmatpush1.bf16.msra.mxu0 0
    %3846 = vmatprep.subr.bf16.mxu0 0
    %3847 = vmatpush1.bf16.msra.mxu0 0
    %3848 = vmatprep.subr.bf16.mxu0 0
    %3849 = vmatpush1.bf16.msra.mxu0 0
    %3850 = vmatprep.subr.bf16.mxu0 0
    %3851 = vmatpush1.bf16.msra.mxu0 0
    %3852 = vmatprep.mubr.bf16.mxu0 0
    %3853 = vmatmul.mubr.bf16.gmra.mrb[0].mxu0 %v3759
    %v3854 = vpop.f32.mrb[0].mxu0
    %v3855 = vadd.f32 0.0, %v3854
    %v3856 = vpop.f32.mrb[0].mxu0
    %v3857 = vadd.f32 0.0, %v3856
    %v3858 = vpop.f32.mrb[0].mxu0
    %v3859 = vadd.f32 0.0, %v3858
    %v3860 = vpop.f32.mrb[0].mxu0
    %v3861 = vadd.f32 0.0, %v3860
    %3862 = vdwg.mxu0
    %v3863 = vadd.f32 %v3769, %v3812
    %v3864 = vadd.f32 %v3770, %v3814
    %v3865 = vadd.f32 %v3771, %v3855
    %v3866 = vadd.f32 %v3772, %v3857
    %v3867 = vadd.f32 %v3773, %v3816
    %v3868 = vadd.f32 %v3774, %v3818
    %v3869 = vadd.f32 %v3775, %v3859
    %v3870 = vadd.f32 %v3776, %v3861
    %v3871 = vmul.f32 %v3863, 0.5
    %v3872 = vmul.f32 %v3867, 0.5
    %v3873 = vtanh.pop %v3871
    %v3874 = vtanh.pop %v3872
    %v3875 = vadd.f32 %v3873, 1.0
    %v3876 = vadd.f32 %v3874, 1.0
    %v3877 = vmul.f32 %v3875, 0.5
    %v3878 = vmul.f32 %v3876, 0.5
    %v3879 = vmul.f32 %v3864, 0.5
    %v3880 = vmul.f32 %v3868, 0.5
    %v3881 = vtanh.pop %v3879
    %v3882 = vtanh.pop %v3880
    %v3883 = vadd.f32 %v3881, 1.0
    %v3884 = vadd.f32 %v3882, 1.0
    %v3885 = vmul.f32 %v3883, 0.5
    %v3886 = vmul.f32 %v3884, 0.5
    %v3887 = vtanh.pop %v3865
    %v3888 = vtanh.pop %v3869
    %v3889 = vmul.f32 %v3866, 0.5
    %v3890 = vmul.f32 %v3870, 0.5
    %v3891 = vtanh.pop %v3889
    %v3892 = vtanh.pop %v3890
    %v3893 = vadd.f32 %v3891, 1.0
    %v3894 = vadd.f32 %v3892, 1.0
    %v3895 = vmul.f32 %v3893, 0.5
    %v3896 = vmul.f32 %v3894, 0.5
    %v3897 = vmul.f32 %v3885, %v3753
    %v3898 = vmul.f32 %v3886, %v3754
    %v3899 = vmul.f32 %v3877, %v3887
    %v3900 = vmul.f32 %v3878, %v3888
    %v3901 = vadd.f32 %v3897, %v3899
    %v3902 = vadd.f32 %v3898, %v3900
    %v3903 = vtanh.pop %v3901
    %v3904 = vtanh.pop %v3902
    %v3905 = vmul.f32 %v3895, %v3903
    %v3906 = vmul.f32 %v3896, %v3904
    %v3907 = vpack.c.bf16 %v3906, %v3905
    %v3909 = vunpack.c.l.b16 %v3907
    %v3910 = vunpack.c.h.b16 %v3907
    %v3911 = vpack.c.b16 %v3909, %v3909
    %v3912 = vpack.c.b16 %v3910, %v3910
    %3915 = vst [vmem:[%s1959] sm:$0xf] %v3911
    %3916 = vst [vmem:[%s1959 + $0x4] sm:$0xf] %v3912
    %s3917 = scalar_lea.vmem [#allocation16], 16
    %3918 = vst [vmem:[%s3917] sm:$0xff] %v3905
    %3919 = vst [vmem:[%s3917 + $0x8] sm:$0xff] %v3906
    %s3920 = scalar_lea.vmem [#allocation18], 16
    %3921 = vst [vmem:[%s3920] sm:$0xff] %v3901
    %3922 = vst [vmem:[%s3920 + $0x8] sm:$0xff] %v3902
    // Predicated region
    $region66: #{tpu_custom_call.1} parent=1 // pred_check
      _
    $region67: #{tpu_custom_call.1} parent=1 // pred_check_branch
      %3924 = sbr.rel (0) target = $region69
    $region68: #{tpu_custom_call.1} parent=1 // pred_region
      %s3926 = ssub.s32 1024, 1024
      %3927 = vsyncadd [#allocation5], %s3926
      %s3928 = sshll.u32 [#allocation15], 4
      %s3929 = int_to_ptr.vmem [resolvable:$true] %s3928
      %3934 = dma.vmem_to_hbm [thread:$0]  %s3929, 1024, %s9, [#allocation5], 64, 64, 4
    $region69: #{tpu_custom_call.1} parent=1 // pred_fallthru
      _
    // Predicated region
    $region70: #{tpu_custom_call.1} parent=1 // pred_check
      _
    $region71: #{tpu_custom_call.1} parent=1 // pred_check_branch
      %3936 = sbr.rel (0) target = $region73
    $region72: #{tpu_custom_call.1} parent=1 // pred_region
      %s3938 = ssub.s32 512, 512
      %3939 = vsyncadd [#allocation17], %s3938
      %s3940 = sshll.u32 [#allocation16], 4
      %s3941 = int_to_ptr.vmem [resolvable:$true] %s3940
      %3946 = dma.vmem_to_hbm [thread:$0]  %s3941, 512, %s10, [#allocation17], 128, 128, 8
    $region73: #{tpu_custom_call.1} parent=1 // pred_fallthru
      _
    // Predicated region
    $region74: #{tpu_custom_call.1} parent=1 // pred_check
      _
    $region75: #{tpu_custom_call.1} parent=1 // pred_check_branch
      %3948 = sbr.rel (0) target = $region77
    $region76: #{tpu_custom_call.1} parent=1 // pred_region
      %s3950 = ssub.s32 512, 512
      %3951 = vsyncadd [#allocation17], %s3950
      %s3952 = sshll.u32 [#allocation18], 4
      %s3953 = int_to_ptr.vmem [resolvable:$true] %s3952
      %3958 = dma.vmem_to_hbm [thread:$0]  %s3953, 512, %s11, [#allocation17], 128, 128, 8
    $region77: #{tpu_custom_call.1} parent=1 // pred_fallthru
      _
    // Predicated region
    $region78: #{tpu_custom_call.1} parent=1 // pred_check
      _
    $region79: #{tpu_custom_call.1} parent=1 // pred_check_branch
      %3960 = sbr.rel (0) target = $region81
    $region80: #{tpu_custom_call.1} parent=1 // pred_region
      %3961 = dma.done [#allocation5], 1024
    $region81: #{tpu_custom_call.1} parent=1 // pred_fallthru
      _
    // Predicated region
    $region82: #{tpu_custom_call.1} parent=1 // pred_check
      _
    $region83: #{tpu_custom_call.1} parent=1 // pred_check_branch
      %3963 = sbr.rel (0) target = $region85
    $region84: #{tpu_custom_call.1} parent=1 // pred_region
      %3964 = dma.done [#allocation17], 512
    $region85: #{tpu_custom_call.1} parent=1 // pred_fallthru
      _
    // Predicated region
    $region86: #{tpu_custom_call.1} parent=1 // pred_check
      _
    $region87: #{tpu_custom_call.1} parent=1 // pred_check_branch
      %3966 = sbr.rel (0) target = $region89
    $region88: #{tpu_custom_call.1} parent=1 // pred_region
      %3967 = dma.done [#allocation17], 512
    $region89: #{tpu_custom_call.1} parent=1 // pred_fallthru
      _
    %3968 = vsyncpa [#allocation4], 1
    %3969 = vsyncpa [#allocation7], 1
    %3970 = vsyncpa [#allocation10], 1
    %3971 = vsyncpa [#allocation13], 1
    %3972 = vsyncpa [#allocation5], 1
    %3973 = vsyncpa [#allocation17], 1

</llo_original>
